<compile_context>
chip_gen: v7x
topology: tpu7x:2x2x1
jax: 0.10.0
libtpu: 0.0.40
codegen_flags: <defaults>
</compile_context>

<pallas_src>
import math

import jax
import jax.numpy as jnp
from jax.experimental import pallas as pl
from jax.experimental.pallas import tpu as pltpu

# ------------------------- small DistilBERT-like config -------------------------
VOCAB_SIZE = 100
MAX_POS = 16
HIDDEN = 32            # "bert.config.hidden_size"
NUM_HEADS = 4
HEAD_DIM = HIDDEN // NUM_HEADS
FFN_DIM = 64
NUM_LAYERS = 2
NUM_LABELS = 7
LANE = 128             # lane-dense padded classifier width; sliced back to 7 in the wrapper
LN_EPS = 1e-12
ATT_SCALE = 1.0 / math.sqrt(HEAD_DIM)

# ------------------- packed parameter-slab row layout (host <-> kernel) -------------------
# weight slab: all matmul weights stacked on the sublane axis, lanes zero-padded to 128.
_W_PER_LAYER = HIDDEN + HIDDEN + HIDDEN + FFN_DIM      # wqkv | wo | w1 | w2 rows per layer
_W_QKV, _W_O, _W_1, _W_2 = 0, HIDDEN, 2 * HIDDEN, 3 * HIDDEN
_W_CLS = NUM_LAYERS * _W_PER_LAYER                     # classifier weight rows

# vector slab: one lane-padded row per bias / LayerNorm parameter.
_V_EMB_G, _V_EMB_B = 0, 1
_V_PER_LAYER = 8
_V_BQKV, _V_BO, _V_LN1G, _V_LN1B, _V_B1, _V_B2, _V_LN2G, _V_LN2B = range(8)
_V_CLS = 2 + NUM_LAYERS * _V_PER_LAYER                 # classifier bias row


# --------------------------- fused encoder + classifier kernel --------------------------
def _make_kernel(batch, seq):
    D, H, Dh, F, L = HIDDEN, NUM_HEADS, HEAD_DIM, FFN_DIM, NUM_LAYERS
    BS = batch * seq
    TRANS_B = (((1,), (1,)), ((), ()))                 # q @ k^T without an explicit transpose

    def layer_norm(x, g, b):
        # single-pass LN: two independent reductions (sum x, sum x*x), var = E[x^2] - mu^2.
        mu = jnp.mean(x, axis=-1, keepdims=True)
        ms = jnp.mean(x * x, axis=-1, keepdims=True)
        return (x - mu) * jax.lax.rsqrt(ms - mu * mu + LN_EPS) * g + b

    def kernel(ids_ref, mask_ref, emb_ref, w_ref, vec_ref, o_ref, xbuf_ref):
        def vec(row, n):
            return vec_ref[row:row + 1, :n]            # (1, n) static slice of the packed slab

        # ---- in-kernel embedding gather + positional add (tables resident in VMEM) ----
        for i in range(BS):
            bb, ss = divmod(i, seq)
            tok = ids_ref[bb, ss]                      # SMEM scalar read
            xbuf_ref[i:i + 1, :] = emb_ref[tok] + emb_ref[VOCAB_SIZE + ss]
        x = xbuf_ref[...]                              # (BS, D) f32
        x = layer_norm(x, vec(_V_EMB_G, D), vec(_V_EMB_B, D))

        # ---- additive key-mask bias, computed once (hoisted out of layer/head loops) ----
        bias_all = jnp.where(mask_ref[...] > 0.5,
                             jnp.float32(0.0), jnp.float32(-1e9))      # (B, S)

        for l in range(L):                             # static unroll, L = 2
            wbase = l * _W_PER_LAYER
            vbase = 2 + l * _V_PER_LAYER

            # fused Q|K|V projection for ALL heads and ALL B*S rows: one lane-dense matmul.
            # (1/sqrt(Dh) is folded into the Q third of the weight/bias slab on the host.)
            qkv = jnp.dot(x, w_ref[wbase + _W_QKV: wbase + _W_QKV + D, :3 * D],
                          preferred_element_type=jnp.float32) + vec(vbase + _V_BQKV, 3 * D)

            # attention core: tiny SxS per (batch, head) with static lane slices of qkv
            ctx_rows = []
            for b in range(batch):                     # static unroll, B = 2
                bias_b = bias_all[b:b + 1, :]          # (1, S), broadcast over query rows
                r0 = b * seq
                ctx_h = []
                for h in range(H):                     # static unroll, H = 4
                    c0 = h * Dh
                    q_bh = qkv[r0:r0 + seq, c0:c0 + Dh]
                    k_bh = qkv[r0:r0 + seq, D + c0:D + c0 + Dh]
                    v_bh = qkv[r0:r0 + seq, 2 * D + c0:2 * D + c0 + Dh]
                    s_bh = jax.lax.dot_general(q_bh, k_bh, TRANS_B,
                                               preferred_element_type=jnp.float32)  # (S, S)
                    s_bh = s_bh + bias_b
                    s_bh = s_bh - jnp.max(s_bh, axis=-1, keepdims=True)
                    e = jnp.exp(s_bh)
                    p = e * pl.reciprocal(jnp.sum(e, axis=-1, keepdims=True), approx=True)
                    ctx_h.append(jnp.dot(p, v_bh, preferred_element_type=jnp.float32))
                ctx_rows.append(jnp.concatenate(ctx_h, axis=1))        # (S, D)
            ctx = jnp.concatenate(ctx_rows, axis=0)                    # (BS, D)

            # fused output projection over the concatenated heads: one (BS,D)@(D,D) matmul
            attn = jnp.dot(ctx, w_ref[wbase + _W_O: wbase + _W_O + D, :D],
                           preferred_element_type=jnp.float32) + vec(vbase + _V_BO, D)
            x = layer_norm(x + attn, vec(vbase + _V_LN1G, D), vec(vbase + _V_LN1B, D))

            # feed-forward over the whole (BS, *) slab
            hh = jnp.dot(x, w_ref[wbase + _W_1: wbase + _W_1 + D, :F],
                         preferred_element_type=jnp.float32) + vec(vbase + _V_B1, F)
            # TODO(synk): PyTorch DistilBERT uses exact erf-GELU; tanh approximation here.
            hh = jax.nn.gelu(hh)
            hh = jnp.dot(hh, w_ref[wbase + _W_2: wbase + _W_2 + F, :D],
                         preferred_element_type=jnp.float32) + vec(vbase + _V_B2, D)
            x = layer_norm(x + hh, vec(vbase + _V_LN2G, D), vec(vbase + _V_LN2B, D))

        # token classifier, lane-dense 128-wide output; single unmasked full-block store
        logits = jnp.dot(x, w_ref[_W_CLS:_W_CLS + D, :],
                         preferred_element_type=jnp.float32) + vec(_V_CLS, LANE)
        o_ref[...] = logits.astype(o_ref.dtype)

    return kernel


def _encoder_classifier(ids, mask_f, params, batch, seq):
    BS = batch * seq
    return pl.pallas_call(
        _make_kernel(batch, seq),
        out_shape=jax.ShapeDtypeStruct((BS, LANE), jnp.float32),
        in_specs=[
            pl.BlockSpec(memory_space=pltpu.MemorySpace.SMEM),   # token ids (scalars)
            pl.BlockSpec(memory_space=pltpu.MemorySpace.VMEM),   # attention mask
            pl.BlockSpec(memory_space=pltpu.MemorySpace.VMEM),   # word+pos embedding table
            pl.BlockSpec(memory_space=pltpu.MemorySpace.VMEM),   # packed weight slab
            pl.BlockSpec(memory_space=pltpu.MemorySpace.VMEM),   # packed bias / LN slab
        ],
        out_specs=pl.BlockSpec(memory_space=pltpu.MemorySpace.VMEM),
        scratch_shapes=[pltpu.VMEM((BS, HIDDEN), jnp.float32)],  # gathered embeddings
        cost_estimate=pl.CostEstimate(flops=700_000, transcendentals=4_000,
                                      bytes_accessed=260_000),
    )(ids, mask_f, params["emb"], params["w"], params["vec"])


# ------------------------------ parameters (packed slabs) --------------------------------
def init_params(key):
    D, H, Dh, F, L = HIDDEN, NUM_HEADS, HEAD_DIM, FFN_DIM, NUM_LAYERS

    def dense(k, fi, fo):
        return jax.random.normal(k, (fi, fo), jnp.float32) * 0.02

    def pad_lanes(a):                                   # (r, c) -> (r, 128)
        return jnp.pad(a, ((0, 0), (0, LANE - a.shape[1])))

    def vec_row(v):                                     # (n,) -> (1, 128)
        return jnp.pad(v, (0, LANE - v.shape[0]))[None, :]

    keys = jax.random.split(key, 3 + L)
    word_emb = jax.random.normal(keys[0], (VOCAB_SIZE, D), jnp.float32) * 0.02
    pos_emb = jax.random.normal(keys[1], (MAX_POS, D), jnp.float32) * 0.02
    # word + positional tables packed into one VMEM table; middle axis of 1 so the kernel
    # gathers rows via dynamic leading-axis indexing (emb_ref[tok]).
    emb = jnp.concatenate([word_emb, pos_emb], axis=0)[:, None, :]    # (VOCAB+POS, 1, D)

    w_rows = []
    v_rows = [vec_row(jnp.ones((D,), jnp.float32)),     # embedding LN gamma
              vec_row(jnp.zeros((D,), jnp.float32))]    # embedding LN beta
    zD = jnp.zeros((D,), jnp.float32)
    for l in range(L):
        lk = jax.random.split(keys[3 + l], 6)
        wq = dense(lk[0], D, D) * ATT_SCALE             # fold 1/sqrt(Dh) into Q projection
        wk = dense(lk[1], D, D)
        wv = dense(lk[2], D, D)
        wo = dense(lk[3], D, D)
        w1 = dense(lk[4], D, F)
        w2 = dense(lk[5], F, D)
        bq, bk, bv = zD * ATT_SCALE, zD, zD             # Q bias scaled like Q weights
        w_rows += [pad_lanes(jnp.concatenate([wq, wk, wv], axis=1)),   # fused QKV (D, 3D)
                   pad_lanes(wo), pad_lanes(w1), pad_lanes(w2)]
        v_rows += [vec_row(jnp.concatenate([bq, bk, bv])),             # fused QKV bias
                   vec_row(zD),                                        # out-proj bias
                   vec_row(jnp.ones((D,), jnp.float32)), vec_row(zD),  # sa LayerNorm
                   vec_row(jnp.zeros((F,), jnp.float32)),              # ffn lin1 bias
                   vec_row(zD),                                        # ffn lin2 bias
                   vec_row(jnp.ones((D,), jnp.float32)), vec_row(zD)]  # output LayerNorm
    wc = dense(keys[2], D, NUM_LABELS)
    w_rows.append(pad_lanes(wc))                                       # classifier (D, 128)
    v_rows.append(vec_row(jnp.zeros((NUM_LABELS,), jnp.float32)))      # classifier bias

    return {"emb": emb,
            "w": jnp.concatenate(w_rows, axis=0),       # (352, 128): one DMA
            "vec": jnp.concatenate(v_rows, axis=0)}     # (19, 128): one DMA


# ------------------------------ forward pass ------------------------------------
def ner_forward(params, input_ids, attention_mask):
    """Mirror of NERMultiTaskModel.forward: DistilBERT encoder -> token classifier."""
    B, S = input_ids.shape
    logits_pad = _encoder_classifier(input_ids.astype(jnp.int32),
                                     attention_mask.astype(jnp.float32),
                                     params, B, S)                     # (B*S, 128)
    # NOTE: padded (masked) positions still produce logits, matching PyTorch; callers
    # must mask the loss themselves.
    return logits_pad[:, :NUM_LABELS].reshape(B, S, NUM_LABELS)


# ---------------------------------- main -----------------------------------------
if __name__ == "__main__":
    key = jax.random.PRNGKey(0)
    pkey, ikey = jax.random.split(key)

    params = init_params(pkey)

    B, S = 2, 8
    input_ids = jax.random.randint(ikey, (B, S), 0, VOCAB_SIZE, dtype=jnp.int32)
    attention_mask = jnp.ones((B, S), dtype=jnp.int32).at[:, 6:].set(0)  # last 2 tokens padded

    logits = jax.jit(ner_forward)(params, input_ids, attention_mask)
    logits = jax.block_until_ready(logits)

    assert logits.shape == (B, S, NUM_LABELS)
    assert bool(jnp.all(jnp.isfinite(logits)))
    print("KERNEL_OK")
</pallas_src>

<mosaic_0001>
module attributes {stable_mosaic.version = 11 : i64} {
  func.func @kernel(%arg0: memref<2x8xi32, #tpu.memory_space<smem>>, %arg1: memref<2x8xf32, #tpu.memory_space<vmem>>, %arg2: memref<116x1x32xf32, #tpu.memory_space<vmem>>, %arg3: memref<352x128xf32, #tpu.memory_space<vmem>>, %arg4: memref<19x128xf32, #tpu.memory_space<vmem>>, %arg5: memref<16x128xf32, #tpu.memory_space<vmem>>, %arg6: memref<16x32xf32, #tpu.memory_space<vmem>>) attributes {dimension_semantics = [], scalar_prefetch = 0 : i64, scratch_operands = 1 : i64, tpu.core_type = #tpu.core_type<tc>} {
    %c0 = arith.constant 0 : index
    %c0_0 = arith.constant 0 : index
    %0 = memref.load %arg0[%c0, %c0_0] : memref<2x8xi32, #tpu.memory_space<smem>>
    %1 = arith.index_cast %0 : i32 to index
    %c0_1 = arith.constant 0 : index
    %c0_2 = arith.constant 0 : index
    %2 = vector.load %arg2[%1, %c0_1, %c0_2] : memref<116x1x32xf32, #tpu.memory_space<vmem>>, vector<1x1x32xf32>
    %3 = vector.shape_cast %2 : vector<1x1x32xf32> to vector<1x32xf32>
    %c100 = arith.constant 100 : index
    %c0_3 = arith.constant 0 : index
    %c0_4 = arith.constant 0 : index
    %4 = vector.load %arg2[%c100, %c0_3, %c0_4] : memref<116x1x32xf32, #tpu.memory_space<vmem>>, vector<1x1x32xf32>
    %5 = vector.shape_cast %4 : vector<1x1x32xf32> to vector<1x32xf32>
    %6 = arith.addf %3, %5 : vector<1x32xf32>
    %c0_5 = arith.constant 0 : index
    %c0_6 = arith.constant 0 : index
    %7 = vector.load %arg6[%c0_5, %c0_6] : memref<16x32xf32, #tpu.memory_space<vmem>>, vector<1x32xf32>
    tpu.vector_store %arg6[%c0_5, %c0_6], %6 {strides = array<i32>} : memref<16x32xf32, #tpu.memory_space<vmem>>, vector<1x32xf32>,
    %c0_7 = arith.constant 0 : index
    %c1 = arith.constant 1 : index
    %8 = memref.load %arg0[%c0_7, %c1] : memref<2x8xi32, #tpu.memory_space<smem>>
    %9 = arith.index_cast %8 : i32 to index
    %c0_8 = arith.constant 0 : index
    %c0_9 = arith.constant 0 : index
    %10 = vector.load %arg2[%9, %c0_8, %c0_9] : memref<116x1x32xf32, #tpu.memory_space<vmem>>, vector<1x1x32xf32>
    %11 = vector.shape_cast %10 : vector<1x1x32xf32> to vector<1x32xf32>
    %c101 = arith.constant 101 : index
    %c0_10 = arith.constant 0 : index
    %c0_11 = arith.constant 0 : index
    %12 = vector.load %arg2[%c101, %c0_10, %c0_11] : memref<116x1x32xf32, #tpu.memory_space<vmem>>, vector<1x1x32xf32>
    %13 = vector.shape_cast %12 : vector<1x1x32xf32> to vector<1x32xf32>
    %14 = arith.addf %11, %13 : vector<1x32xf32>
    %c1_12 = arith.constant 1 : index
    %c0_13 = arith.constant 0 : index
    %15 = vector.load %arg6[%c1_12, %c0_13] : memref<16x32xf32, #tpu.memory_space<vmem>>, vector<1x32xf32>
    tpu.vector_store %arg6[%c1_12, %c0_13], %14 {strides = array<i32>} : memref<16x32xf32, #tpu.memory_space<vmem>>, vector<1x32xf32>,
    %c0_14 = arith.constant 0 : index
    %c2 = arith.constant 2 : index
    %16 = memref.load %arg0[%c0_14, %c2] : memref<2x8xi32, #tpu.memory_space<smem>>
    %17 = arith.index_cast %16 : i32 to index
    %c0_15 = arith.constant 0 : index
    %c0_16 = arith.constant 0 : index
    %18 = vector.load %arg2[%17, %c0_15, %c0_16] : memref<116x1x32xf32, #tpu.memory_space<vmem>>, vector<1x1x32xf32>
    %19 = vector.shape_cast %18 : vector<1x1x32xf32> to vector<1x32xf32>
    %c102 = arith.constant 102 : index
    %c0_17 = arith.constant 0 : index
    %c0_18 = arith.constant 0 : index
    %20 = vector.load %arg2[%c102, %c0_17, %c0_18] : memref<116x1x32xf32, #tpu.memory_space<vmem>>, vector<1x1x32xf32>
    %21 = vector.shape_cast %20 : vector<1x1x32xf32> to vector<1x32xf32>
    %22 = arith.addf %19, %21 : vector<1x32xf32>
    %c2_19 = arith.constant 2 : index
    %c0_20 = arith.constant 0 : index
    %23 = vector.load %arg6[%c2_19, %c0_20] : memref<16x32xf32, #tpu.memory_space<vmem>>, vector<1x32xf32>
    tpu.vector_store %arg6[%c2_19, %c0_20], %22 {strides = array<i32>} : memref<16x32xf32, #tpu.memory_space<vmem>>, vector<1x32xf32>,
    %c0_21 = arith.constant 0 : index
    %c3 = arith.constant 3 : index
    %24 = memref.load %arg0[%c0_21, %c3] : memref<2x8xi32, #tpu.memory_space<smem>>
    %25 = arith.index_cast %24 : i32 to index
    %c0_22 = arith.constant 0 : index
    %c0_23 = arith.constant 0 : index
    %26 = vector.load %arg2[%25, %c0_22, %c0_23] : memref<116x1x32xf32, #tpu.memory_space<vmem>>, vector<1x1x32xf32>
    %27 = vector.shape_cast %26 : vector<1x1x32xf32> to vector<1x32xf32>
    %c103 = arith.constant 103 : index
    %c0_24 = arith.constant 0 : index
    %c0_25 = arith.constant 0 : index
    %28 = vector.load %arg2[%c103, %c0_24, %c0_25] : memref<116x1x32xf32, #tpu.memory_space<vmem>>, vector<1x1x32xf32>
    %29 = vector.shape_cast %28 : vector<1x1x32xf32> to vector<1x32xf32>
    %30 = arith.addf %27, %29 : vector<1x32xf32>
    %c3_26 = arith.constant 3 : index
    %c0_27 = arith.constant 0 : index
    %31 = vector.load %arg6[%c3_26, %c0_27] : memref<16x32xf32, #tpu.memory_space<vmem>>, vector<1x32xf32>
    tpu.vector_store %arg6[%c3_26, %c0_27], %30 {strides = array<i32>} : memref<16x32xf32, #tpu.memory_space<vmem>>, vector<1x32xf32>,
    %c0_28 = arith.constant 0 : index
    %c4 = arith.constant 4 : index
    %32 = memref.load %arg0[%c0_28, %c4] : memref<2x8xi32, #tpu.memory_space<smem>>
    %33 = arith.index_cast %32 : i32 to index
    %c0_29 = arith.constant 0 : index
    %c0_30 = arith.constant 0 : index
    %34 = vector.load %arg2[%33, %c0_29, %c0_30] : memref<116x1x32xf32, #tpu.memory_space<vmem>>, vector<1x1x32xf32>
    %35 = vector.shape_cast %34 : vector<1x1x32xf32> to vector<1x32xf32>
    %c104 = arith.constant 104 : index
    %c0_31 = arith.constant 0 : index
    %c0_32 = arith.constant 0 : index
    %36 = vector.load %arg2[%c104, %c0_31, %c0_32] : memref<116x1x32xf32, #tpu.memory_space<vmem>>, vector<1x1x32xf32>
    %37 = vector.shape_cast %36 : vector<1x1x32xf32> to vector<1x32xf32>
    %38 = arith.addf %35, %37 : vector<1x32xf32>
    %c4_33 = arith.constant 4 : index
    %c0_34 = arith.constant 0 : index
    %39 = vector.load %arg6[%c4_33, %c0_34] : memref<16x32xf32, #tpu.memory_space<vmem>>, vector<1x32xf32>
    tpu.vector_store %arg6[%c4_33, %c0_34], %38 {strides = array<i32>} : memref<16x32xf32, #tpu.memory_space<vmem>>, vector<1x32xf32>,
    %c0_35 = arith.constant 0 : index
    %c5 = arith.constant 5 : index
    %40 = memref.load %arg0[%c0_35, %c5] : memref<2x8xi32, #tpu.memory_space<smem>>
    %41 = arith.index_cast %40 : i32 to index
    %c0_36 = arith.constant 0 : index
    %c0_37 = arith.constant 0 : index
    %42 = vector.load %arg2[%41, %c0_36, %c0_37] : memref<116x1x32xf32, #tpu.memory_space<vmem>>, vector<1x1x32xf32>
    %43 = vector.shape_cast %42 : vector<1x1x32xf32> to vector<1x32xf32>
    %c105 = arith.constant 105 : index
    %c0_38 = arith.constant 0 : index
    %c0_39 = arith.constant 0 : index
    %44 = vector.load %arg2[%c105, %c0_38, %c0_39] : memref<116x1x32xf32, #tpu.memory_space<vmem>>, vector<1x1x32xf32>
    %45 = vector.shape_cast %44 : vector<1x1x32xf32> to vector<1x32xf32>
    %46 = arith.addf %43, %45 : vector<1x32xf32>
    %c5_40 = arith.constant 5 : index
    %c0_41 = arith.constant 0 : index
    %47 = vector.load %arg6[%c5_40, %c0_41] : memref<16x32xf32, #tpu.memory_space<vmem>>, vector<1x32xf32>
    tpu.vector_store %arg6[%c5_40, %c0_41], %46 {strides = array<i32>} : memref<16x32xf32, #tpu.memory_space<vmem>>, vector<1x32xf32>,
    %c0_42 = arith.constant 0 : index
    %c6 = arith.constant 6 : index
    %48 = memref.load %arg0[%c0_42, %c6] : memref<2x8xi32, #tpu.memory_space<smem>>
    %49 = arith.index_cast %48 : i32 to index
    %c0_43 = arith.constant 0 : index
    %c0_44 = arith.constant 0 : index
    %50 = vector.load %arg2[%49, %c0_43, %c0_44] : memref<116x1x32xf32, #tpu.memory_space<vmem>>, vector<1x1x32xf32>
    %51 = vector.shape_cast %50 : vector<1x1x32xf32> to vector<1x32xf32>
    %c106 = arith.constant 106 : index
    %c0_45 = arith.constant 0 : index
    %c0_46 = arith.constant 0 : index
    %52 = vector.load %arg2[%c106, %c0_45, %c0_46] : memref<116x1x32xf32, #tpu.memory_space<vmem>>, vector<1x1x32xf32>
    %53 = vector.shape_cast %52 : vector<1x1x32xf32> to vector<1x32xf32>
    %54 = arith.addf %51, %53 : vector<1x32xf32>
    %c6_47 = arith.constant 6 : index
    %c0_48 = arith.constant 0 : index
    %55 = vector.load %arg6[%c6_47, %c0_48] : memref<16x32xf32, #tpu.memory_space<vmem>>, vector<1x32xf32>
    tpu.vector_store %arg6[%c6_47, %c0_48], %54 {strides = array<i32>} : memref<16x32xf32, #tpu.memory_space<vmem>>, vector<1x32xf32>,
    %c0_49 = arith.constant 0 : index
    %c7 = arith.constant 7 : index
    %56 = memref.load %arg0[%c0_49, %c7] : memref<2x8xi32, #tpu.memory_space<smem>>
    %57 = arith.index_cast %56 : i32 to index
    %c0_50 = arith.constant 0 : index
    %c0_51 = arith.constant 0 : index
    %58 = vector.load %arg2[%57, %c0_50, %c0_51] : memref<116x1x32xf32, #tpu.memory_space<vmem>>, vector<1x1x32xf32>
    %59 = vector.shape_cast %58 : vector<1x1x32xf32> to vector<1x32xf32>
    %c107 = arith.constant 107 : index
    %c0_52 = arith.constant 0 : index
    %c0_53 = arith.constant 0 : index
    %60 = vector.load %arg2[%c107, %c0_52, %c0_53] : memref<116x1x32xf32, #tpu.memory_space<vmem>>, vector<1x1x32xf32>
    %61 = vector.shape_cast %60 : vector<1x1x32xf32> to vector<1x32xf32>
    %62 = arith.addf %59, %61 : vector<1x32xf32>
    %c7_54 = arith.constant 7 : index
    %c0_55 = arith.constant 0 : index
    %63 = vector.load %arg6[%c7_54, %c0_55] : memref<16x32xf32, #tpu.memory_space<vmem>>, vector<1x32xf32>
    tpu.vector_store %arg6[%c7_54, %c0_55], %62 {strides = array<i32>} : memref<16x32xf32, #tpu.memory_space<vmem>>, vector<1x32xf32>,
    %c1_56 = arith.constant 1 : index
    %c0_57 = arith.constant 0 : index
    %64 = memref.load %arg0[%c1_56, %c0_57] : memref<2x8xi32, #tpu.memory_space<smem>>
    %65 = arith.index_cast %64 : i32 to index
    %c0_58 = arith.constant 0 : index
    %c0_59 = arith.constant 0 : index
    %66 = vector.load %arg2[%65, %c0_58, %c0_59] : memref<116x1x32xf32, #tpu.memory_space<vmem>>, vector<1x1x32xf32>
    %67 = vector.shape_cast %66 : vector<1x1x32xf32> to vector<1x32xf32>
    %c100_60 = arith.constant 100 : index
    %c0_61 = arith.constant 0 : index
    %c0_62 = arith.constant 0 : index
    %68 = vector.load %arg2[%c100_60, %c0_61, %c0_62] : memref<116x1x32xf32, #tpu.memory_space<vmem>>, vector<1x1x32xf32>
    %69 = vector.shape_cast %68 : vector<1x1x32xf32> to vector<1x32xf32>
    %70 = arith.addf %67, %69 : vector<1x32xf32>
    %c8 = arith.constant 8 : index
    %c0_63 = arith.constant 0 : index
    %71 = vector.load %arg6[%c8, %c0_63] : memref<16x32xf32, #tpu.memory_space<vmem>>, vector<1x32xf32>
    tpu.vector_store %arg6[%c8, %c0_63], %70 {strides = array<i32>} : memref<16x32xf32, #tpu.memory_space<vmem>>, vector<1x32xf32>,
    %c1_64 = arith.constant 1 : index
    %c1_65 = arith.constant 1 : index
    %72 = memref.load %arg0[%c1_64, %c1_65] : memref<2x8xi32, #tpu.memory_space<smem>>
    %73 = arith.index_cast %72 : i32 to index
    %c0_66 = arith.constant 0 : index
    %c0_67 = arith.constant 0 : index
    %74 = vector.load %arg2[%73, %c0_66, %c0_67] : memref<116x1x32xf32, #tpu.memory_space<vmem>>, vector<1x1x32xf32>
    %75 = vector.shape_cast %74 : vector<1x1x32xf32> to vector<1x32xf32>
    %c101_68 = arith.constant 101 : index
    %c0_69 = arith.constant 0 : index
    %c0_70 = arith.constant 0 : index
    %76 = vector.load %arg2[%c101_68, %c0_69, %c0_70] : memref<116x1x32xf32, #tpu.memory_space<vmem>>, vector<1x1x32xf32>
    %77 = vector.shape_cast %76 : vector<1x1x32xf32> to vector<1x32xf32>
    %78 = arith.addf %75, %77 : vector<1x32xf32>
    %c9 = arith.constant 9 : index
    %c0_71 = arith.constant 0 : index
    %79 = vector.load %arg6[%c9, %c0_71] : memref<16x32xf32, #tpu.memory_space<vmem>>, vector<1x32xf32>
    tpu.vector_store %arg6[%c9, %c0_71], %78 {strides = array<i32>} : memref<16x32xf32, #tpu.memory_space<vmem>>, vector<1x32xf32>,
    %c1_72 = arith.constant 1 : index
    %c2_73 = arith.constant 2 : index
    %80 = memref.load %arg0[%c1_72, %c2_73] : memref<2x8xi32, #tpu.memory_space<smem>>
    %81 = arith.index_cast %80 : i32 to index
    %c0_74 = arith.constant 0 : index
    %c0_75 = arith.constant 0 : index
    %82 = vector.load %arg2[%81, %c0_74, %c0_75] : memref<116x1x32xf32, #tpu.memory_space<vmem>>, vector<1x1x32xf32>
    %83 = vector.shape_cast %82 : vector<1x1x32xf32> to vector<1x32xf32>
    %c102_76 = arith.constant 102 : index
    %c0_77 = arith.constant 0 : index
    %c0_78 = arith.constant 0 : index
    %84 = vector.load %arg2[%c102_76, %c0_77, %c0_78] : memref<116x1x32xf32, #tpu.memory_space<vmem>>, vector<1x1x32xf32>
    %85 = vector.shape_cast %84 : vector<1x1x32xf32> to vector<1x32xf32>
    %86 = arith.addf %83, %85 : vector<1x32xf32>
    %c10 = arith.constant 10 : index
    %c0_79 = arith.constant 0 : index
    %87 = vector.load %arg6[%c10, %c0_79] : memref<16x32xf32, #tpu.memory_space<vmem>>, vector<1x32xf32>
    tpu.vector_store %arg6[%c10, %c0_79], %86 {strides = array<i32>} : memref<16x32xf32, #tpu.memory_space<vmem>>, vector<1x32xf32>,
    %c1_80 = arith.constant 1 : index
    %c3_81 = arith.constant 3 : index
    %88 = memref.load %arg0[%c1_80, %c3_81] : memref<2x8xi32, #tpu.memory_space<smem>>
    %89 = arith.index_cast %88 : i32 to index
    %c0_82 = arith.constant 0 : index
    %c0_83 = arith.constant 0 : index
    %90 = vector.load %arg2[%89, %c0_82, %c0_83] : memref<116x1x32xf32, #tpu.memory_space<vmem>>, vector<1x1x32xf32>
    %91 = vector.shape_cast %90 : vector<1x1x32xf32> to vector<1x32xf32>
    %c103_84 = arith.constant 103 : index
    %c0_85 = arith.constant 0 : index
    %c0_86 = arith.constant 0 : index
    %92 = vector.load %arg2[%c103_84, %c0_85, %c0_86] : memref<116x1x32xf32, #tpu.memory_space<vmem>>, vector<1x1x32xf32>
    %93 = vector.shape_cast %92 : vector<1x1x32xf32> to vector<1x32xf32>
    %94 = arith.addf %91, %93 : vector<1x32xf32>
    %c11 = arith.constant 11 : index
    %c0_87 = arith.constant 0 : index
    %95 = vector.load %arg6[%c11, %c0_87] : memref<16x32xf32, #tpu.memory_space<vmem>>, vector<1x32xf32>
    tpu.vector_store %arg6[%c11, %c0_87], %94 {strides = array<i32>} : memref<16x32xf32, #tpu.memory_space<vmem>>, vector<1x32xf32>,
    %c1_88 = arith.constant 1 : index
    %c4_89 = arith.constant 4 : index
    %96 = memref.load %arg0[%c1_88, %c4_89] : memref<2x8xi32, #tpu.memory_space<smem>>
    %97 = arith.index_cast %96 : i32 to index
    %c0_90 = arith.constant 0 : index
    %c0_91 = arith.constant 0 : index
    %98 = vector.load %arg2[%97, %c0_90, %c0_91] : memref<116x1x32xf32, #tpu.memory_space<vmem>>, vector<1x1x32xf32>
    %99 = vector.shape_cast %98 : vector<1x1x32xf32> to vector<1x32xf32>
    %c104_92 = arith.constant 104 : index
    %c0_93 = arith.constant 0 : index
    %c0_94 = arith.constant 0 : index
    %100 = vector.load %arg2[%c104_92, %c0_93, %c0_94] : memref<116x1x32xf32, #tpu.memory_space<vmem>>, vector<1x1x32xf32>
    %101 = vector.shape_cast %100 : vector<1x1x32xf32> to vector<1x32xf32>
    %102 = arith.addf %99, %101 : vector<1x32xf32>
    %c12 = arith.constant 12 : index
    %c0_95 = arith.constant 0 : index
    %103 = vector.load %arg6[%c12, %c0_95] : memref<16x32xf32, #tpu.memory_space<vmem>>, vector<1x32xf32>
    tpu.vector_store %arg6[%c12, %c0_95], %102 {strides = array<i32>} : memref<16x32xf32, #tpu.memory_space<vmem>>, vector<1x32xf32>,
    %c1_96 = arith.constant 1 : index
    %c5_97 = arith.constant 5 : index
    %104 = memref.load %arg0[%c1_96, %c5_97] : memref<2x8xi32, #tpu.memory_space<smem>>
    %105 = arith.index_cast %104 : i32 to index
    %c0_98 = arith.constant 0 : index
    %c0_99 = arith.constant 0 : index
    %106 = vector.load %arg2[%105, %c0_98, %c0_99] : memref<116x1x32xf32, #tpu.memory_space<vmem>>, vector<1x1x32xf32>
    %107 = vector.shape_cast %106 : vector<1x1x32xf32> to vector<1x32xf32>
    %c105_100 = arith.constant 105 : index
    %c0_101 = arith.constant 0 : index
    %c0_102 = arith.constant 0 : index
    %108 = vector.load %arg2[%c105_100, %c0_101, %c0_102] : memref<116x1x32xf32, #tpu.memory_space<vmem>>, vector<1x1x32xf32>
    %109 = vector.shape_cast %108 : vector<1x1x32xf32> to vector<1x32xf32>
    %110 = arith.addf %107, %109 : vector<1x32xf32>
    %c13 = arith.constant 13 : index
    %c0_103 = arith.constant 0 : index
    %111 = vector.load %arg6[%c13, %c0_103] : memref<16x32xf32, #tpu.memory_space<vmem>>, vector<1x32xf32>
    tpu.vector_store %arg6[%c13, %c0_103], %110 {strides = array<i32>} : memref<16x32xf32, #tpu.memory_space<vmem>>, vector<1x32xf32>,
    %c1_104 = arith.constant 1 : index
    %c6_105 = arith.constant 6 : index
    %112 = memref.load %arg0[%c1_104, %c6_105] : memref<2x8xi32, #tpu.memory_space<smem>>
    %113 = arith.index_cast %112 : i32 to index
    %c0_106 = arith.constant 0 : index
    %c0_107 = arith.constant 0 : index
    %114 = vector.load %arg2[%113, %c0_106, %c0_107] : memref<116x1x32xf32, #tpu.memory_space<vmem>>, vector<1x1x32xf32>
    %115 = vector.shape_cast %114 : vector<1x1x32xf32> to vector<1x32xf32>
    %c106_108 = arith.constant 106 : index
    %c0_109 = arith.constant 0 : index
    %c0_110 = arith.constant 0 : index
    %116 = vector.load %arg2[%c106_108, %c0_109, %c0_110] : memref<116x1x32xf32, #tpu.memory_space<vmem>>, vector<1x1x32xf32>
    %117 = vector.shape_cast %116 : vector<1x1x32xf32> to vector<1x32xf32>
    %118 = arith.addf %115, %117 : vector<1x32xf32>
    %c14 = arith.constant 14 : index
    %c0_111 = arith.constant 0 : index
    %119 = vector.load %arg6[%c14, %c0_111] : memref<16x32xf32, #tpu.memory_space<vmem>>, vector<1x32xf32>
    tpu.vector_store %arg6[%c14, %c0_111], %118 {strides = array<i32>} : memref<16x32xf32, #tpu.memory_space<vmem>>, vector<1x32xf32>,
    %c1_112 = arith.constant 1 : index
    %c7_113 = arith.constant 7 : index
    %120 = memref.load %arg0[%c1_112, %c7_113] : memref<2x8xi32, #tpu.memory_space<smem>>
    %121 = arith.index_cast %120 : i32 to index
    %c0_114 = arith.constant 0 : index
    %c0_115 = arith.constant 0 : index
    %122 = vector.load %arg2[%121, %c0_114, %c0_115] : memref<116x1x32xf32, #tpu.memory_space<vmem>>, vector<1x1x32xf32>
    %123 = vector.shape_cast %122 : vector<1x1x32xf32> to vector<1x32xf32>
    %c107_116 = arith.constant 107 : index
    %c0_117 = arith.constant 0 : index
    %c0_118 = arith.constant 0 : index
    %124 = vector.load %arg2[%c107_116, %c0_117, %c0_118] : memref<116x1x32xf32, #tpu.memory_space<vmem>>, vector<1x1x32xf32>
    %125 = vector.shape_cast %124 : vector<1x1x32xf32> to vector<1x32xf32>
    %126 = arith.addf %123, %125 : vector<1x32xf32>
    %c15 = arith.constant 15 : index
    %c0_119 = arith.constant 0 : index
    %127 = vector.load %arg6[%c15, %c0_119] : memref<16x32xf32, #tpu.memory_space<vmem>>, vector<1x32xf32>
    tpu.vector_store %arg6[%c15, %c0_119], %126 {strides = array<i32>} : memref<16x32xf32, #tpu.memory_space<vmem>>, vector<1x32xf32>,
    %c0_120 = arith.constant 0 : index
    %c0_121 = arith.constant 0 : index
    %128 = vector.load %arg6[%c0_120, %c0_121] : memref<16x32xf32, #tpu.memory_space<vmem>>, vector<16x32xf32>
    %c0_122 = arith.constant 0 : index
    %c0_123 = arith.constant 0 : index
    %129 = vector.load %arg4[%c0_122, %c0_123] : memref<19x128xf32, #tpu.memory_space<vmem>>, vector<1x32xf32>
    %c1_124 = arith.constant 1 : index
    %c0_125 = arith.constant 0 : index
    %130 = vector.load %arg4[%c1_124, %c0_125] : memref<19x128xf32, #tpu.memory_space<vmem>>, vector<1x32xf32>
    %cst = arith.constant dense<0.000000e+00> : vector<16xf32>
    %131 = vector.multi_reduction <add>, %128, %cst [1] : vector<16x32xf32> to vector<16xf32>
    %132 = vector.shape_cast %131 : vector<16xf32> to vector<16x1xf32>
    %cst_126 = arith.constant 3.200000e+01 : f32
    %133 = vector.broadcast %cst_126 : f32 to vector<16x1xf32>
    %134 = arith.divf %132, %133 : vector<16x1xf32>
    %135 = arith.mulf %128, %128 : vector<16x32xf32>
    %cst_127 = arith.constant dense<0.000000e+00> : vector<16xf32>
    %136 = vector.multi_reduction <add>, %135, %cst_127 [1] : vector<16x32xf32> to vector<16xf32>
    %137 = vector.shape_cast %136 : vector<16xf32> to vector<16x1xf32>
    %cst_128 = arith.constant 3.200000e+01 : f32
    %138 = vector.broadcast %cst_128 : f32 to vector<16x1xf32>
    %139 = arith.divf %137, %138 : vector<16x1xf32>
    %140 = vector.broadcast %134 : vector<16x1xf32> to vector<16x32xf32>
    %141 = arith.subf %128, %140 : vector<16x32xf32>
    %142 = arith.mulf %134, %134 : vector<16x1xf32>
    %143 = arith.subf %139, %142 : vector<16x1xf32>
    %cst_129 = arith.constant 9.99999996E-13 : f32
    %144 = vector.broadcast %cst_129 : f32 to vector<16x1xf32>
    %145 = arith.addf %143, %144 : vector<16x1xf32>
    %146 = math.rsqrt %145 : vector<16x1xf32>
    %147 = vector.broadcast %146 : vector<16x1xf32> to vector<16x32xf32>
    %148 = arith.mulf %141, %147 : vector<16x32xf32>
    %149 = vector.broadcast %129 : vector<1x32xf32> to vector<16x32xf32>
    %150 = arith.mulf %148, %149 : vector<16x32xf32>
    %151 = vector.broadcast %130 : vector<1x32xf32> to vector<16x32xf32>
    %152 = arith.addf %150, %151 : vector<16x32xf32>
    %c0_130 = arith.constant 0 : index
    %c0_131 = arith.constant 0 : index
    %153 = vector.load %arg1[%c0_130, %c0_131] : memref<2x8xf32, #tpu.memory_space<vmem>>, vector<2x8xf32>
    %cst_132 = arith.constant 5.000000e-01 : f32
    %154 = vector.broadcast %cst_132 : f32 to vector<2x8xf32>
    %155 = arith.cmpf ogt, %153, %154 : vector<2x8xf32>
    %cst_133 = arith.constant 0.000000e+00 : f32
    %cst_134 = arith.constant -1.000000e+09 : f32
    %156 = vector.broadcast %cst_133 : f32 to vector<2x8xf32>
    %157 = vector.broadcast %cst_134 : f32 to vector<2x8xf32>
    %158 = arith.select %155, %156, %157 : vector<2x8xi1>, vector<2x8xf32>
    %c0_135 = arith.constant 0 : index
    %c0_136 = arith.constant 0 : index
    %159 = vector.load %arg3[%c0_135, %c0_136] : memref<352x128xf32, #tpu.memory_space<vmem>>, vector<32x96xf32>
    %cst_137 = arith.constant dense<0.000000e+00> : vector<16x96xf32>
    %160 = tpu.matmul %152, %159, %cst_137 {dimension_numbers = #tpu.dot_dimension_numbers<[1], [0], [0], [1], [0, 0, 1, 1], [], []>} : vector<16x32xf32>, vector<32x96xf32>, vector<16x96xf32> -> vector<16x96xf32>
    %c2_138 = arith.constant 2 : index
    %c0_139 = arith.constant 0 : index
    %161 = vector.load %arg4[%c2_138, %c0_139] : memref<19x128xf32, #tpu.memory_space<vmem>>, vector<1x96xf32>
    %162 = vector.broadcast %161 : vector<1x96xf32> to vector<16x96xf32>
    %163 = arith.addf %160, %162 : vector<16x96xf32>
    %164 = vector.extract_strided_slice %158 {offsets = [0, 0], sizes = [1, 8], strides = [1, 1]} : vector<2x8xf32> to vector<1x8xf32>
    %165 = vector.extract_strided_slice %163 {offsets = [0, 0], sizes = [8, 8], strides = [1, 1]} : vector<16x96xf32> to vector<8x8xf32>
    %166 = vector.extract_strided_slice %163 {offsets = [0, 32], sizes = [8, 8], strides = [1, 1]} : vector<16x96xf32> to vector<8x8xf32>
    %167 = vector.extract_strided_slice %163 {offsets = [0, 64], sizes = [8, 8], strides = [1, 1]} : vector<16x96xf32> to vector<8x8xf32>
    %cst_140 = arith.constant dense<0.000000e+00> : vector<8x8xf32>
    %168 = tpu.matmul %165, %166, %cst_140 {dimension_numbers = #tpu.dot_dimension_numbers<[1], [1], [0], [0], [0, 0, 1, 0], [], []>} : vector<8x8xf32>, vector<8x8xf32>, vector<8x8xf32> -> vector<8x8xf32>
    %169 = vector.broadcast %164 : vector<1x8xf32> to vector<8x8xf32>
    %170 = arith.addf %168, %169 : vector<8x8xf32>
    %cst_141 = arith.constant dense<0xFF800000> : vector<8xf32>
    %171 = vector.multi_reduction <maximumf>, %170, %cst_141 [1] : vector<8x8xf32> to vector<8xf32>
    %172 = vector.shape_cast %171 : vector<8xf32> to vector<8x1xf32>
    %173 = vector.broadcast %172 : vector<8x1xf32> to vector<8x8xf32>
    %174 = arith.subf %170, %173 : vector<8x8xf32>
    %175 = math.exp %174 : vector<8x8xf32>
    %cst_142 = arith.constant dense<0.000000e+00> : vector<8xf32>
    %176 = vector.multi_reduction <add>, %175, %cst_142 [1] : vector<8x8xf32> to vector<8xf32>
    %177 = vector.shape_cast %176 : vector<8xf32> to vector<8x1xf32>
    %178 = tpu.reciprocal %177 {approx = true} : vector<8x1xf32> -> vector<8x1xf32>
    %179 = vector.broadcast %178 : vector<8x1xf32> to vector<8x8xf32>
    %180 = arith.mulf %175, %179 : vector<8x8xf32>
    %cst_143 = arith.constant dense<0.000000e+00> : vector<8x8xf32>
    %181 = tpu.matmul %180, %167, %cst_143 {dimension_numbers = #tpu.dot_dimension_numbers<[1], [0], [0], [1], [0, 0, 1, 1], [], []>} : vector<8x8xf32>, vector<8x8xf32>, vector<8x8xf32> -> vector<8x8xf32>
    %182 = vector.extract_strided_slice %163 {offsets = [0, 8], sizes = [8, 8], strides = [1, 1]} : vector<16x96xf32> to vector<8x8xf32>
    %183 = vector.extract_strided_slice %163 {offsets = [0, 40], sizes = [8, 8], strides = [1, 1]} : vector<16x96xf32> to vector<8x8xf32>
    %184 = vector.extract_strided_slice %163 {offsets = [0, 72], sizes = [8, 8], strides = [1, 1]} : vector<16x96xf32> to vector<8x8xf32>
    %cst_144 = arith.constant dense<0.000000e+00> : vector<8x8xf32>
    %185 = tpu.matmul %182, %183, %cst_144 {dimension_numbers = #tpu.dot_dimension_numbers<[1], [1], [0], [0], [0, 0, 1, 0], [], []>} : vector<8x8xf32>, vector<8x8xf32>, vector<8x8xf32> -> vector<8x8xf32>
    %186 = vector.broadcast %164 : vector<1x8xf32> to vector<8x8xf32>
    %187 = arith.addf %185, %186 : vector<8x8xf32>
    %cst_145 = arith.constant dense<0xFF800000> : vector<8xf32>
    %188 = vector.multi_reduction <maximumf>, %187, %cst_145 [1] : vector<8x8xf32> to vector<8xf32>
    %189 = vector.shape_cast %188 : vector<8xf32> to vector<8x1xf32>
    %190 = vector.broadcast %189 : vector<8x1xf32> to vector<8x8xf32>
    %191 = arith.subf %187, %190 : vector<8x8xf32>
    %192 = math.exp %191 : vector<8x8xf32>
    %cst_146 = arith.constant dense<0.000000e+00> : vector<8xf32>
    %193 = vector.multi_reduction <add>, %192, %cst_146 [1] : vector<8x8xf32> to vector<8xf32>
    %194 = vector.shape_cast %193 : vector<8xf32> to vector<8x1xf32>
    %195 = tpu.reciprocal %194 {approx = true} : vector<8x1xf32> -> vector<8x1xf32>
    %196 = vector.broadcast %195 : vector<8x1xf32> to vector<8x8xf32>
    %197 = arith.mulf %192, %196 : vector<8x8xf32>
    %cst_147 = arith.constant dense<0.000000e+00> : vector<8x8xf32>
    %198 = tpu.matmul %197, %184, %cst_147 {dimension_numbers = #tpu.dot_dimension_numbers<[1], [0], [0], [1], [0, 0, 1, 1], [], []>} : vector<8x8xf32>, vector<8x8xf32>, vector<8x8xf32> -> vector<8x8xf32>
    %199 = vector.extract_strided_slice %163 {offsets = [0, 16], sizes = [8, 8], strides = [1, 1]} : vector<16x96xf32> to vector<8x8xf32>
    %200 = vector.extract_strided_slice %163 {offsets = [0, 48], sizes = [8, 8], strides = [1, 1]} : vector<16x96xf32> to vector<8x8xf32>
    %201 = vector.extract_strided_slice %163 {offsets = [0, 80], sizes = [8, 8], strides = [1, 1]} : vector<16x96xf32> to vector<8x8xf32>
    %cst_148 = arith.constant dense<0.000000e+00> : vector<8x8xf32>
    %202 = tpu.matmul %199, %200, %cst_148 {dimension_numbers = #tpu.dot_dimension_numbers<[1], [1], [0], [0], [0, 0, 1, 0], [], []>} : vector<8x8xf32>, vector<8x8xf32>, vector<8x8xf32> -> vector<8x8xf32>
    %203 = vector.broadcast %164 : vector<1x8xf32> to vector<8x8xf32>
    %204 = arith.addf %202, %203 : vector<8x8xf32>
    %cst_149 = arith.constant dense<0xFF800000> : vector<8xf32>
    %205 = vector.multi_reduction <maximumf>, %204, %cst_149 [1] : vector<8x8xf32> to vector<8xf32>
    %206 = vector.shape_cast %205 : vector<8xf32> to vector<8x1xf32>
    %207 = vector.broadcast %206 : vector<8x1xf32> to vector<8x8xf32>
    %208 = arith.subf %204, %207 : vector<8x8xf32>
    %209 = math.exp %208 : vector<8x8xf32>
    %cst_150 = arith.constant dense<0.000000e+00> : vector<8xf32>
    %210 = vector.multi_reduction <add>, %209, %cst_150 [1] : vector<8x8xf32> to vector<8xf32>
    %211 = vector.shape_cast %210 : vector<8xf32> to vector<8x1xf32>
    %212 = tpu.reciprocal %211 {approx = true} : vector<8x1xf32> -> vector<8x1xf32>
    %213 = vector.broadcast %212 : vector<8x1xf32> to vector<8x8xf32>
    %214 = arith.mulf %209, %213 : vector<8x8xf32>
    %cst_151 = arith.constant dense<0.000000e+00> : vector<8x8xf32>
    %215 = tpu.matmul %214, %201, %cst_151 {dimension_numbers = #tpu.dot_dimension_numbers<[1], [0], [0], [1], [0, 0, 1, 1], [], []>} : vector<8x8xf32>, vector<8x8xf32>, vector<8x8xf32> -> vector<8x8xf32>
    %216 = vector.extract_strided_slice %163 {offsets = [0, 24], sizes = [8, 8], strides = [1, 1]} : vector<16x96xf32> to vector<8x8xf32>
    %217 = vector.extract_strided_slice %163 {offsets = [0, 56], sizes = [8, 8], strides = [1, 1]} : vector<16x96xf32> to vector<8x8xf32>
    %218 = vector.extract_strided_slice %163 {offsets = [0, 88], sizes = [8, 8], strides = [1, 1]} : vector<16x96xf32> to vector<8x8xf32>
    %cst_152 = arith.constant dense<0.000000e+00> : vector<8x8xf32>
    %219 = tpu.matmul %216, %217, %cst_152 {dimension_numbers = #tpu.dot_dimension_numbers<[1], [1], [0], [0], [0, 0, 1, 0], [], []>} : vector<8x8xf32>, vector<8x8xf32>, vector<8x8xf32> -> vector<8x8xf32>
    %220 = vector.broadcast %164 : vector<1x8xf32> to vector<8x8xf32>
    %221 = arith.addf %219, %220 : vector<8x8xf32>
    %cst_153 = arith.constant dense<0xFF800000> : vector<8xf32>
    %222 = vector.multi_reduction <maximumf>, %221, %cst_153 [1] : vector<8x8xf32> to vector<8xf32>
    %223 = vector.shape_cast %222 : vector<8xf32> to vector<8x1xf32>
    %224 = vector.broadcast %223 : vector<8x1xf32> to vector<8x8xf32>
    %225 = arith.subf %221, %224 : vector<8x8xf32>
    %226 = math.exp %225 : vector<8x8xf32>
    %cst_154 = arith.constant dense<0.000000e+00> : vector<8xf32>
    %227 = vector.multi_reduction <add>, %226, %cst_154 [1] : vector<8x8xf32> to vector<8xf32>
    %228 = vector.shape_cast %227 : vector<8xf32> to vector<8x1xf32>
    %229 = tpu.reciprocal %228 {approx = true} : vector<8x1xf32> -> vector<8x1xf32>
    %230 = vector.broadcast %229 : vector<8x1xf32> to vector<8x8xf32>
    %231 = arith.mulf %226, %230 : vector<8x8xf32>
    %cst_155 = arith.constant dense<0.000000e+00> : vector<8x8xf32>
    %232 = tpu.matmul %231, %218, %cst_155 {dimension_numbers = #tpu.dot_dimension_numbers<[1], [0], [0], [1], [0, 0, 1, 1], [], []>} : vector<8x8xf32>, vector<8x8xf32>, vector<8x8xf32> -> vector<8x8xf32>
    %233 = tpu.concatenate %181, %198, %215, %232 in 1 : vector<8x8xf32>, vector<8x8xf32>, vector<8x8xf32>, vector<8x8xf32> -> vector<8x32xf32>
    %234 = vector.extract_strided_slice %158 {offsets = [1, 0], sizes = [1, 8], strides = [1, 1]} : vector<2x8xf32> to vector<1x8xf32>
    %235 = vector.extract_strided_slice %163 {offsets = [8, 0], sizes = [8, 8], strides = [1, 1]} : vector<16x96xf32> to vector<8x8xf32>
    %236 = vector.extract_strided_slice %163 {offsets = [8, 32], sizes = [8, 8], strides = [1, 1]} : vector<16x96xf32> to vector<8x8xf32>
    %237 = vector.extract_strided_slice %163 {offsets = [8, 64], sizes = [8, 8], strides = [1, 1]} : vector<16x96xf32> to vector<8x8xf32>
    %cst_156 = arith.constant dense<0.000000e+00> : vector<8x8xf32>
    %238 = tpu.matmul %235, %236, %cst_156 {dimension_numbers = #tpu.dot_dimension_numbers<[1], [1], [0], [0], [0, 0, 1, 0], [], []>} : vector<8x8xf32>, vector<8x8xf32>, vector<8x8xf32> -> vector<8x8xf32>
    %239 = vector.broadcast %234 : vector<1x8xf32> to vector<8x8xf32>
    %240 = arith.addf %238, %239 : vector<8x8xf32>
    %cst_157 = arith.constant dense<0xFF800000> : vector<8xf32>
    %241 = vector.multi_reduction <maximumf>, %240, %cst_157 [1] : vector<8x8xf32> to vector<8xf32>
    %242 = vector.shape_cast %241 : vector<8xf32> to vector<8x1xf32>
    %243 = vector.broadcast %242 : vector<8x1xf32> to vector<8x8xf32>
    %244 = arith.subf %240, %243 : vector<8x8xf32>
    %245 = math.exp %244 : vector<8x8xf32>
    %cst_158 = arith.constant dense<0.000000e+00> : vector<8xf32>
    %246 = vector.multi_reduction <add>, %245, %cst_158 [1] : vector<8x8xf32> to vector<8xf32>
    %247 = vector.shape_cast %246 : vector<8xf32> to vector<8x1xf32>
    %248 = tpu.reciprocal %247 {approx = true} : vector<8x1xf32> -> vector<8x1xf32>
    %249 = vector.broadcast %248 : vector<8x1xf32> to vector<8x8xf32>
    %250 = arith.mulf %245, %249 : vector<8x8xf32>
    %cst_159 = arith.constant dense<0.000000e+00> : vector<8x8xf32>
    %251 = tpu.matmul %250, %237, %cst_159 {dimension_numbers = #tpu.dot_dimension_numbers<[1], [0], [0], [1], [0, 0, 1, 1], [], []>} : vector<8x8xf32>, vector<8x8xf32>, vector<8x8xf32> -> vector<8x8xf32>
    %252 = vector.extract_strided_slice %163 {offsets = [8, 8], sizes = [8, 8], strides = [1, 1]} : vector<16x96xf32> to vector<8x8xf32>
    %253 = vector.extract_strided_slice %163 {offsets = [8, 40], sizes = [8, 8], strides = [1, 1]} : vector<16x96xf32> to vector<8x8xf32>
    %254 = vector.extract_strided_slice %163 {offsets = [8, 72], sizes = [8, 8], strides = [1, 1]} : vector<16x96xf32> to vector<8x8xf32>
    %cst_160 = arith.constant dense<0.000000e+00> : vector<8x8xf32>
    %255 = tpu.matmul %252, %253, %cst_160 {dimension_numbers = #tpu.dot_dimension_numbers<[1], [1], [0], [0], [0, 0, 1, 0], [], []>} : vector<8x8xf32>, vector<8x8xf32>, vector<8x8xf32> -> vector<8x8xf32>
    %256 = vector.broadcast %234 : vector<1x8xf32> to vector<8x8xf32>
    %257 = arith.addf %255, %256 : vector<8x8xf32>
    %cst_161 = arith.constant dense<0xFF800000> : vector<8xf32>
    %258 = vector.multi_reduction <maximumf>, %257, %cst_161 [1] : vector<8x8xf32> to vector<8xf32>
    %259 = vector.shape_cast %258 : vector<8xf32> to vector<8x1xf32>
    %260 = vector.broadcast %259 : vector<8x1xf32> to vector<8x8xf32>
    %261 = arith.subf %257, %260 : vector<8x8xf32>
    %262 = math.exp %261 : vector<8x8xf32>
    %cst_162 = arith.constant dense<0.000000e+00> : vector<8xf32>
    %263 = vector.multi_reduction <add>, %262, %cst_162 [1] : vector<8x8xf32> to vector<8xf32>
    %264 = vector.shape_cast %263 : vector<8xf32> to vector<8x1xf32>
    %265 = tpu.reciprocal %264 {approx = true} : vector<8x1xf32> -> vector<8x1xf32>
    %266 = vector.broadcast %265 : vector<8x1xf32> to vector<8x8xf32>
    %267 = arith.mulf %262, %266 : vector<8x8xf32>
    %cst_163 = arith.constant dense<0.000000e+00> : vector<8x8xf32>
    %268 = tpu.matmul %267, %254, %cst_163 {dimension_numbers = #tpu.dot_dimension_numbers<[1], [0], [0], [1], [0, 0, 1, 1], [], []>} : vector<8x8xf32>, vector<8x8xf32>, vector<8x8xf32> -> vector<8x8xf32>
    %269 = vector.extract_strided_slice %163 {offsets = [8, 16], sizes = [8, 8], strides = [1, 1]} : vector<16x96xf32> to vector<8x8xf32>
    %270 = vector.extract_strided_slice %163 {offsets = [8, 48], sizes = [8, 8], strides = [1, 1]} : vector<16x96xf32> to vector<8x8xf32>
    %271 = vector.extract_strided_slice %163 {offsets = [8, 80], sizes = [8, 8], strides = [1, 1]} : vector<16x96xf32> to vector<8x8xf32>
    %cst_164 = arith.constant dense<0.000000e+00> : vector<8x8xf32>
    %272 = tpu.matmul %269, %270, %cst_164 {dimension_numbers = #tpu.dot_dimension_numbers<[1], [1], [0], [0], [0, 0, 1, 0], [], []>} : vector<8x8xf32>, vector<8x8xf32>, vector<8x8xf32> -> vector<8x8xf32>
    %273 = vector.broadcast %234 : vector<1x8xf32> to vector<8x8xf32>
    %274 = arith.addf %272, %273 : vector<8x8xf32>
    %cst_165 = arith.constant dense<0xFF800000> : vector<8xf32>
    %275 = vector.multi_reduction <maximumf>, %274, %cst_165 [1] : vector<8x8xf32> to vector<8xf32>
    %276 = vector.shape_cast %275 : vector<8xf32> to vector<8x1xf32>
    %277 = vector.broadcast %276 : vector<8x1xf32> to vector<8x8xf32>
    %278 = arith.subf %274, %277 : vector<8x8xf32>
    %279 = math.exp %278 : vector<8x8xf32>
    %cst_166 = arith.constant dense<0.000000e+00> : vector<8xf32>
    %280 = vector.multi_reduction <add>, %279, %cst_166 [1] : vector<8x8xf32> to vector<8xf32>
    %281 = vector.shape_cast %280 : vector<8xf32> to vector<8x1xf32>
    %282 = tpu.reciprocal %281 {approx = true} : vector<8x1xf32> -> vector<8x1xf32>
    %283 = vector.broadcast %282 : vector<8x1xf32> to vector<8x8xf32>
    %284 = arith.mulf %279, %283 : vector<8x8xf32>
    %cst_167 = arith.constant dense<0.000000e+00> : vector<8x8xf32>
    %285 = tpu.matmul %284, %271, %cst_167 {dimension_numbers = #tpu.dot_dimension_numbers<[1], [0], [0], [1], [0, 0, 1, 1], [], []>} : vector<8x8xf32>, vector<8x8xf32>, vector<8x8xf32> -> vector<8x8xf32>
    %286 = vector.extract_strided_slice %163 {offsets = [8, 24], sizes = [8, 8], strides = [1, 1]} : vector<16x96xf32> to vector<8x8xf32>
    %287 = vector.extract_strided_slice %163 {offsets = [8, 56], sizes = [8, 8], strides = [1, 1]} : vector<16x96xf32> to vector<8x8xf32>
    %288 = vector.extract_strided_slice %163 {offsets = [8, 88], sizes = [8, 8], strides = [1, 1]} : vector<16x96xf32> to vector<8x8xf32>
    %cst_168 = arith.constant dense<0.000000e+00> : vector<8x8xf32>
    %289 = tpu.matmul %286, %287, %cst_168 {dimension_numbers = #tpu.dot_dimension_numbers<[1], [1], [0], [0], [0, 0, 1, 0], [], []>} : vector<8x8xf32>, vector<8x8xf32>, vector<8x8xf32> -> vector<8x8xf32>
    %290 = vector.broadcast %234 : vector<1x8xf32> to vector<8x8xf32>
    %291 = arith.addf %289, %290 : vector<8x8xf32>
    %cst_169 = arith.constant dense<0xFF800000> : vector<8xf32>
    %292 = vector.multi_reduction <maximumf>, %291, %cst_169 [1] : vector<8x8xf32> to vector<8xf32>
    %293 = vector.shape_cast %292 : vector<8xf32> to vector<8x1xf32>
    %294 = vector.broadcast %293 : vector<8x1xf32> to vector<8x8xf32>
    %295 = arith.subf %291, %294 : vector<8x8xf32>
    %296 = math.exp %295 : vector<8x8xf32>
    %cst_170 = arith.constant dense<0.000000e+00> : vector<8xf32>
    %297 = vector.multi_reduction <add>, %296, %cst_170 [1] : vector<8x8xf32> to vector<8xf32>
    %298 = vector.shape_cast %297 : vector<8xf32> to vector<8x1xf32>
    %299 = tpu.reciprocal %298 {approx = true} : vector<8x1xf32> -> vector<8x1xf32>
    %300 = vector.broadcast %299 : vector<8x1xf32> to vector<8x8xf32>
    %301 = arith.mulf %296, %300 : vector<8x8xf32>
    %cst_171 = arith.constant dense<0.000000e+00> : vector<8x8xf32>
    %302 = tpu.matmul %301, %288, %cst_171 {dimension_numbers = #tpu.dot_dimension_numbers<[1], [0], [0], [1], [0, 0, 1, 1], [], []>} : vector<8x8xf32>, vector<8x8xf32>, vector<8x8xf32> -> vector<8x8xf32>
    %303 = tpu.concatenate %251, %268, %285, %302 in 1 : vector<8x8xf32>, vector<8x8xf32>, vector<8x8xf32>, vector<8x8xf32> -> vector<8x32xf32>
    %304 = tpu.concatenate %233, %303 in 0 : vector<8x32xf32>, vector<8x32xf32> -> vector<16x32xf32>
    %c32 = arith.constant 32 : index
    %c0_172 = arith.constant 0 : index
    %305 = vector.load %arg3[%c32, %c0_172] : memref<352x128xf32, #tpu.memory_space<vmem>>, vector<32x32xf32>
    %cst_173 = arith.constant dense<0.000000e+00> : vector<16x32xf32>
    %306 = tpu.matmul %304, %305, %cst_173 {dimension_numbers = #tpu.dot_dimension_numbers<[1], [0], [0], [1], [0, 0, 1, 1], [], []>} : vector<16x32xf32>, vector<32x32xf32>, vector<16x32xf32> -> vector<16x32xf32>
    %c3_174 = arith.constant 3 : index
    %c0_175 = arith.constant 0 : index
    %307 = vector.load %arg4[%c3_174, %c0_175] : memref<19x128xf32, #tpu.memory_space<vmem>>, vector<1x32xf32>
    %308 = vector.broadcast %307 : vector<1x32xf32> to vector<16x32xf32>
    %309 = arith.addf %306, %308 : vector<16x32xf32>
    %310 = arith.addf %152, %309 : vector<16x32xf32>
    %c4_176 = arith.constant 4 : index
    %c0_177 = arith.constant 0 : index
    %311 = vector.load %arg4[%c4_176, %c0_177] : memref<19x128xf32, #tpu.memory_space<vmem>>, vector<1x32xf32>
    %c5_178 = arith.constant 5 : index
    %c0_179 = arith.constant 0 : index
    %312 = vector.load %arg4[%c5_178, %c0_179] : memref<19x128xf32, #tpu.memory_space<vmem>>, vector<1x32xf32>
    %cst_180 = arith.constant dense<0.000000e+00> : vector<16xf32>
    %313 = vector.multi_reduction <add>, %310, %cst_180 [1] : vector<16x32xf32> to vector<16xf32>
    %314 = vector.shape_cast %313 : vector<16xf32> to vector<16x1xf32>
    %cst_181 = arith.constant 3.200000e+01 : f32
    %315 = vector.broadcast %cst_181 : f32 to vector<16x1xf32>
    %316 = arith.divf %314, %315 : vector<16x1xf32>
    %317 = arith.mulf %310, %310 : vector<16x32xf32>
    %cst_182 = arith.constant dense<0.000000e+00> : vector<16xf32>
    %318 = vector.multi_reduction <add>, %317, %cst_182 [1] : vector<16x32xf32> to vector<16xf32>
    %319 = vector.shape_cast %318 : vector<16xf32> to vector<16x1xf32>
    %cst_183 = arith.constant 3.200000e+01 : f32
    %320 = vector.broadcast %cst_183 : f32 to vector<16x1xf32>
    %321 = arith.divf %319, %320 : vector<16x1xf32>
    %322 = vector.broadcast %316 : vector<16x1xf32> to vector<16x32xf32>
    %323 = arith.subf %310, %322 : vector<16x32xf32>
    %324 = arith.mulf %316, %316 : vector<16x1xf32>
    %325 = arith.subf %321, %324 : vector<16x1xf32>
    %cst_184 = arith.constant 9.99999996E-13 : f32
    %326 = vector.broadcast %cst_184 : f32 to vector<16x1xf32>
    %327 = arith.addf %325, %326 : vector<16x1xf32>
    %328 = math.rsqrt %327 : vector<16x1xf32>
    %329 = vector.broadcast %328 : vector<16x1xf32> to vector<16x32xf32>
    %330 = arith.mulf %323, %329 : vector<16x32xf32>
    %331 = vector.broadcast %311 : vector<1x32xf32> to vector<16x32xf32>
    %332 = arith.mulf %330, %331 : vector<16x32xf32>
    %333 = vector.broadcast %312 : vector<1x32xf32> to vector<16x32xf32>
    %334 = arith.addf %332, %333 : vector<16x32xf32>
    %c64 = arith.constant 64 : index
    %c0_185 = arith.constant 0 : index
    %335 = vector.load %arg3[%c64, %c0_185] : memref<352x128xf32, #tpu.memory_space<vmem>>, vector<32x64xf32>
    %cst_186 = arith.constant dense<0.000000e+00> : vector<16x64xf32>
    %336 = tpu.matmul %334, %335, %cst_186 {dimension_numbers = #tpu.dot_dimension_numbers<[1], [0], [0], [1], [0, 0, 1, 1], [], []>} : vector<16x32xf32>, vector<32x64xf32>, vector<16x64xf32> -> vector<16x64xf32>
    %c6_187 = arith.constant 6 : index
    %c0_188 = arith.constant 0 : index
    %337 = vector.load %arg4[%c6_187, %c0_188] : memref<19x128xf32, #tpu.memory_space<vmem>>, vector<1x64xf32>
    %338 = vector.broadcast %337 : vector<1x64xf32> to vector<16x64xf32>
    %339 = arith.addf %336, %338 : vector<16x64xf32>
    %340 = arith.mulf %339, %339 : vector<16x64xf32>
    %341 = arith.mulf %339, %340 : vector<16x64xf32>
    %cst_189 = arith.constant 4.471500e-02 : f32
    %342 = vector.broadcast %cst_189 : f32 to vector<16x64xf32>
    %343 = arith.mulf %342, %341 : vector<16x64xf32>
    %344 = arith.addf %339, %343 : vector<16x64xf32>
    %cst_190 = arith.constant 0.797884583 : f32
    %345 = vector.broadcast %cst_190 : f32 to vector<16x64xf32>
    %346 = arith.mulf %345, %344 : vector<16x64xf32>
    %347 = math.tanh %346 : vector<16x64xf32>
    %cst_191 = arith.constant 1.000000e+00 : f32
    %348 = vector.broadcast %cst_191 : f32 to vector<16x64xf32>
    %349 = arith.addf %348, %347 : vector<16x64xf32>
    %cst_192 = arith.constant 5.000000e-01 : f32
    %350 = vector.broadcast %cst_192 : f32 to vector<16x64xf32>
    %351 = arith.mulf %350, %349 : vector<16x64xf32>
    %352 = arith.mulf %339, %351 : vector<16x64xf32>
    %c96 = arith.constant 96 : index
    %c0_193 = arith.constant 0 : index
    %353 = vector.load %arg3[%c96, %c0_193] : memref<352x128xf32, #tpu.memory_space<vmem>>, vector<64x32xf32>
    %cst_194 = arith.constant dense<0.000000e+00> : vector<16x32xf32>
    %354 = tpu.matmul %352, %353, %cst_194 {dimension_numbers = #tpu.dot_dimension_numbers<[1], [0], [0], [1], [0, 0, 1, 1], [], []>} : vector<16x64xf32>, vector<64x32xf32>, vector<16x32xf32> -> vector<16x32xf32>
    %c7_195 = arith.constant 7 : index
    %c0_196 = arith.constant 0 : index
    %355 = vector.load %arg4[%c7_195, %c0_196] : memref<19x128xf32, #tpu.memory_space<vmem>>, vector<1x32xf32>
    %356 = vector.broadcast %355 : vector<1x32xf32> to vector<16x32xf32>
    %357 = arith.addf %354, %356 : vector<16x32xf32>
    %358 = arith.addf %334, %357 : vector<16x32xf32>
    %c8_197 = arith.constant 8 : index
    %c0_198 = arith.constant 0 : index
    %359 = vector.load %arg4[%c8_197, %c0_198] : memref<19x128xf32, #tpu.memory_space<vmem>>, vector<1x32xf32>
    %c9_199 = arith.constant 9 : index
    %c0_200 = arith.constant 0 : index
    %360 = vector.load %arg4[%c9_199, %c0_200] : memref<19x128xf32, #tpu.memory_space<vmem>>, vector<1x32xf32>
    %cst_201 = arith.constant dense<0.000000e+00> : vector<16xf32>
    %361 = vector.multi_reduction <add>, %358, %cst_201 [1] : vector<16x32xf32> to vector<16xf32>
    %362 = vector.shape_cast %361 : vector<16xf32> to vector<16x1xf32>
    %cst_202 = arith.constant 3.200000e+01 : f32
    %363 = vector.broadcast %cst_202 : f32 to vector<16x1xf32>
    %364 = arith.divf %362, %363 : vector<16x1xf32>
    %365 = arith.mulf %358, %358 : vector<16x32xf32>
    %cst_203 = arith.constant dense<0.000000e+00> : vector<16xf32>
    %366 = vector.multi_reduction <add>, %365, %cst_203 [1] : vector<16x32xf32> to vector<16xf32>
    %367 = vector.shape_cast %366 : vector<16xf32> to vector<16x1xf32>
    %cst_204 = arith.constant 3.200000e+01 : f32
    %368 = vector.broadcast %cst_204 : f32 to vector<16x1xf32>
    %369 = arith.divf %367, %368 : vector<16x1xf32>
    %370 = vector.broadcast %364 : vector<16x1xf32> to vector<16x32xf32>
    %371 = arith.subf %358, %370 : vector<16x32xf32>
    %372 = arith.mulf %364, %364 : vector<16x1xf32>
    %373 = arith.subf %369, %372 : vector<16x1xf32>
    %cst_205 = arith.constant 9.99999996E-13 : f32
    %374 = vector.broadcast %cst_205 : f32 to vector<16x1xf32>
    %375 = arith.addf %373, %374 : vector<16x1xf32>
    %376 = math.rsqrt %375 : vector<16x1xf32>
    %377 = vector.broadcast %376 : vector<16x1xf32> to vector<16x32xf32>
    %378 = arith.mulf %371, %377 : vector<16x32xf32>
    %379 = vector.broadcast %359 : vector<1x32xf32> to vector<16x32xf32>
    %380 = arith.mulf %378, %379 : vector<16x32xf32>
    %381 = vector.broadcast %360 : vector<1x32xf32> to vector<16x32xf32>
    %382 = arith.addf %380, %381 : vector<16x32xf32>
    %c160 = arith.constant 160 : index
    %c0_206 = arith.constant 0 : index
    %383 = vector.load %arg3[%c160, %c0_206] : memref<352x128xf32, #tpu.memory_space<vmem>>, vector<32x96xf32>
    %cst_207 = arith.constant dense<0.000000e+00> : vector<16x96xf32>
    %384 = tpu.matmul %382, %383, %cst_207 {dimension_numbers = #tpu.dot_dimension_numbers<[1], [0], [0], [1], [0, 0, 1, 1], [], []>} : vector<16x32xf32>, vector<32x96xf32>, vector<16x96xf32> -> vector<16x96xf32>
    %c10_208 = arith.constant 10 : index
    %c0_209 = arith.constant 0 : index
    %385 = vector.load %arg4[%c10_208, %c0_209] : memref<19x128xf32, #tpu.memory_space<vmem>>, vector<1x96xf32>
    %386 = vector.broadcast %385 : vector<1x96xf32> to vector<16x96xf32>
    %387 = arith.addf %384, %386 : vector<16x96xf32>
    %388 = vector.extract_strided_slice %158 {offsets = [0, 0], sizes = [1, 8], strides = [1, 1]} : vector<2x8xf32> to vector<1x8xf32>
    %389 = vector.extract_strided_slice %387 {offsets = [0, 0], sizes = [8, 8], strides = [1, 1]} : vector<16x96xf32> to vector<8x8xf32>
    %390 = vector.extract_strided_slice %387 {offsets = [0, 32], sizes = [8, 8], strides = [1, 1]} : vector<16x96xf32> to vector<8x8xf32>
    %391 = vector.extract_strided_slice %387 {offsets = [0, 64], sizes = [8, 8], strides = [1, 1]} : vector<16x96xf32> to vector<8x8xf32>
    %cst_210 = arith.constant dense<0.000000e+00> : vector<8x8xf32>
    %392 = tpu.matmul %389, %390, %cst_210 {dimension_numbers = #tpu.dot_dimension_numbers<[1], [1], [0], [0], [0, 0, 1, 0], [], []>} : vector<8x8xf32>, vector<8x8xf32>, vector<8x8xf32> -> vector<8x8xf32>
    %393 = vector.broadcast %388 : vector<1x8xf32> to vector<8x8xf32>
    %394 = arith.addf %392, %393 : vector<8x8xf32>
    %cst_211 = arith.constant dense<0xFF800000> : vector<8xf32>
    %395 = vector.multi_reduction <maximumf>, %394, %cst_211 [1] : vector<8x8xf32> to vector<8xf32>
    %396 = vector.shape_cast %395 : vector<8xf32> to vector<8x1xf32>
    %397 = vector.broadcast %396 : vector<8x1xf32> to vector<8x8xf32>
    %398 = arith.subf %394, %397 : vector<8x8xf32>
    %399 = math.exp %398 : vector<8x8xf32>
    %cst_212 = arith.constant dense<0.000000e+00> : vector<8xf32>
    %400 = vector.multi_reduction <add>, %399, %cst_212 [1] : vector<8x8xf32> to vector<8xf32>
    %401 = vector.shape_cast %400 : vector<8xf32> to vector<8x1xf32>
    %402 = tpu.reciprocal %401 {approx = true} : vector<8x1xf32> -> vector<8x1xf32>
    %403 = vector.broadcast %402 : vector<8x1xf32> to vector<8x8xf32>
    %404 = arith.mulf %399, %403 : vector<8x8xf32>
    %cst_213 = arith.constant dense<0.000000e+00> : vector<8x8xf32>
    %405 = tpu.matmul %404, %391, %cst_213 {dimension_numbers = #tpu.dot_dimension_numbers<[1], [0], [0], [1], [0, 0, 1, 1], [], []>} : vector<8x8xf32>, vector<8x8xf32>, vector<8x8xf32> -> vector<8x8xf32>
    %406 = vector.extract_strided_slice %387 {offsets = [0, 8], sizes = [8, 8], strides = [1, 1]} : vector<16x96xf32> to vector<8x8xf32>
    %407 = vector.extract_strided_slice %387 {offsets = [0, 40], sizes = [8, 8], strides = [1, 1]} : vector<16x96xf32> to vector<8x8xf32>
    %408 = vector.extract_strided_slice %387 {offsets = [0, 72], sizes = [8, 8], strides = [1, 1]} : vector<16x96xf32> to vector<8x8xf32>
    %cst_214 = arith.constant dense<0.000000e+00> : vector<8x8xf32>
    %409 = tpu.matmul %406, %407, %cst_214 {dimension_numbers = #tpu.dot_dimension_numbers<[1], [1], [0], [0], [0, 0, 1, 0], [], []>} : vector<8x8xf32>, vector<8x8xf32>, vector<8x8xf32> -> vector<8x8xf32>
    %410 = vector.broadcast %388 : vector<1x8xf32> to vector<8x8xf32>
    %411 = arith.addf %409, %410 : vector<8x8xf32>
    %cst_215 = arith.constant dense<0xFF800000> : vector<8xf32>
    %412 = vector.multi_reduction <maximumf>, %411, %cst_215 [1] : vector<8x8xf32> to vector<8xf32>
    %413 = vector.shape_cast %412 : vector<8xf32> to vector<8x1xf32>
    %414 = vector.broadcast %413 : vector<8x1xf32> to vector<8x8xf32>
    %415 = arith.subf %411, %414 : vector<8x8xf32>
    %416 = math.exp %415 : vector<8x8xf32>
    %cst_216 = arith.constant dense<0.000000e+00> : vector<8xf32>
    %417 = vector.multi_reduction <add>, %416, %cst_216 [1] : vector<8x8xf32> to vector<8xf32>
    %418 = vector.shape_cast %417 : vector<8xf32> to vector<8x1xf32>
    %419 = tpu.reciprocal %418 {approx = true} : vector<8x1xf32> -> vector<8x1xf32>
    %420 = vector.broadcast %419 : vector<8x1xf32> to vector<8x8xf32>
    %421 = arith.mulf %416, %420 : vector<8x8xf32>
    %cst_217 = arith.constant dense<0.000000e+00> : vector<8x8xf32>
    %422 = tpu.matmul %421, %408, %cst_217 {dimension_numbers = #tpu.dot_dimension_numbers<[1], [0], [0], [1], [0, 0, 1, 1], [], []>} : vector<8x8xf32>, vector<8x8xf32>, vector<8x8xf32> -> vector<8x8xf32>
    %423 = vector.extract_strided_slice %387 {offsets = [0, 16], sizes = [8, 8], strides = [1, 1]} : vector<16x96xf32> to vector<8x8xf32>
    %424 = vector.extract_strided_slice %387 {offsets = [0, 48], sizes = [8, 8], strides = [1, 1]} : vector<16x96xf32> to vector<8x8xf32>
    %425 = vector.extract_strided_slice %387 {offsets = [0, 80], sizes = [8, 8], strides = [1, 1]} : vector<16x96xf32> to vector<8x8xf32>
    %cst_218 = arith.constant dense<0.000000e+00> : vector<8x8xf32>
    %426 = tpu.matmul %423, %424, %cst_218 {dimension_numbers = #tpu.dot_dimension_numbers<[1], [1], [0], [0], [0, 0, 1, 0], [], []>} : vector<8x8xf32>, vector<8x8xf32>, vector<8x8xf32> -> vector<8x8xf32>
    %427 = vector.broadcast %388 : vector<1x8xf32> to vector<8x8xf32>
    %428 = arith.addf %426, %427 : vector<8x8xf32>
    %cst_219 = arith.constant dense<0xFF800000> : vector<8xf32>
    %429 = vector.multi_reduction <maximumf>, %428, %cst_219 [1] : vector<8x8xf32> to vector<8xf32>
    %430 = vector.shape_cast %429 : vector<8xf32> to vector<8x1xf32>
    %431 = vector.broadcast %430 : vector<8x1xf32> to vector<8x8xf32>
    %432 = arith.subf %428, %431 : vector<8x8xf32>
    %433 = math.exp %432 : vector<8x8xf32>
    %cst_220 = arith.constant dense<0.000000e+00> : vector<8xf32>
    %434 = vector.multi_reduction <add>, %433, %cst_220 [1] : vector<8x8xf32> to vector<8xf32>
    %435 = vector.shape_cast %434 : vector<8xf32> to vector<8x1xf32>
    %436 = tpu.reciprocal %435 {approx = true} : vector<8x1xf32> -> vector<8x1xf32>
    %437 = vector.broadcast %436 : vector<8x1xf32> to vector<8x8xf32>
    %438 = arith.mulf %433, %437 : vector<8x8xf32>
    %cst_221 = arith.constant dense<0.000000e+00> : vector<8x8xf32>
    %439 = tpu.matmul %438, %425, %cst_221 {dimension_numbers = #tpu.dot_dimension_numbers<[1], [0], [0], [1], [0, 0, 1, 1], [], []>} : vector<8x8xf32>, vector<8x8xf32>, vector<8x8xf32> -> vector<8x8xf32>
    %440 = vector.extract_strided_slice %387 {offsets = [0, 24], sizes = [8, 8], strides = [1, 1]} : vector<16x96xf32> to vector<8x8xf32>
    %441 = vector.extract_strided_slice %387 {offsets = [0, 56], sizes = [8, 8], strides = [1, 1]} : vector<16x96xf32> to vector<8x8xf32>
    %442 = vector.extract_strided_slice %387 {offsets = [0, 88], sizes = [8, 8], strides = [1, 1]} : vector<16x96xf32> to vector<8x8xf32>
    %cst_222 = arith.constant dense<0.000000e+00> : vector<8x8xf32>
    %443 = tpu.matmul %440, %441, %cst_222 {dimension_numbers = #tpu.dot_dimension_numbers<[1], [1], [0], [0], [0, 0, 1, 0], [], []>} : vector<8x8xf32>, vector<8x8xf32>, vector<8x8xf32> -> vector<8x8xf32>
    %444 = vector.broadcast %388 : vector<1x8xf32> to vector<8x8xf32>
    %445 = arith.addf %443, %444 : vector<8x8xf32>
    %cst_223 = arith.constant dense<0xFF800000> : vector<8xf32>
    %446 = vector.multi_reduction <maximumf>, %445, %cst_223 [1] : vector<8x8xf32> to vector<8xf32>
    %447 = vector.shape_cast %446 : vector<8xf32> to vector<8x1xf32>
    %448 = vector.broadcast %447 : vector<8x1xf32> to vector<8x8xf32>
    %449 = arith.subf %445, %448 : vector<8x8xf32>
    %450 = math.exp %449 : vector<8x8xf32>
    %cst_224 = arith.constant dense<0.000000e+00> : vector<8xf32>
    %451 = vector.multi_reduction <add>, %450, %cst_224 [1] : vector<8x8xf32> to vector<8xf32>
    %452 = vector.shape_cast %451 : vector<8xf32> to vector<8x1xf32>
    %453 = tpu.reciprocal %452 {approx = true} : vector<8x1xf32> -> vector<8x1xf32>
    %454 = vector.broadcast %453 : vector<8x1xf32> to vector<8x8xf32>
    %455 = arith.mulf %450, %454 : vector<8x8xf32>
    %cst_225 = arith.constant dense<0.000000e+00> : vector<8x8xf32>
    %456 = tpu.matmul %455, %442, %cst_225 {dimension_numbers = #tpu.dot_dimension_numbers<[1], [0], [0], [1], [0, 0, 1, 1], [], []>} : vector<8x8xf32>, vector<8x8xf32>, vector<8x8xf32> -> vector<8x8xf32>
    %457 = tpu.concatenate %405, %422, %439, %456 in 1 : vector<8x8xf32>, vector<8x8xf32>, vector<8x8xf32>, vector<8x8xf32> -> vector<8x32xf32>
    %458 = vector.extract_strided_slice %158 {offsets = [1, 0], sizes = [1, 8], strides = [1, 1]} : vector<2x8xf32> to vector<1x8xf32>
    %459 = vector.extract_strided_slice %387 {offsets = [8, 0], sizes = [8, 8], strides = [1, 1]} : vector<16x96xf32> to vector<8x8xf32>
    %460 = vector.extract_strided_slice %387 {offsets = [8, 32], sizes = [8, 8], strides = [1, 1]} : vector<16x96xf32> to vector<8x8xf32>
    %461 = vector.extract_strided_slice %387 {offsets = [8, 64], sizes = [8, 8], strides = [1, 1]} : vector<16x96xf32> to vector<8x8xf32>
    %cst_226 = arith.constant dense<0.000000e+00> : vector<8x8xf32>
    %462 = tpu.matmul %459, %460, %cst_226 {dimension_numbers = #tpu.dot_dimension_numbers<[1], [1], [0], [0], [0, 0, 1, 0], [], []>} : vector<8x8xf32>, vector<8x8xf32>, vector<8x8xf32> -> vector<8x8xf32>
    %463 = vector.broadcast %458 : vector<1x8xf32> to vector<8x8xf32>
    %464 = arith.addf %462, %463 : vector<8x8xf32>
    %cst_227 = arith.constant dense<0xFF800000> : vector<8xf32>
    %465 = vector.multi_reduction <maximumf>, %464, %cst_227 [1] : vector<8x8xf32> to vector<8xf32>
    %466 = vector.shape_cast %465 : vector<8xf32> to vector<8x1xf32>
    %467 = vector.broadcast %466 : vector<8x1xf32> to vector<8x8xf32>
    %468 = arith.subf %464, %467 : vector<8x8xf32>
    %469 = math.exp %468 : vector<8x8xf32>
    %cst_228 = arith.constant dense<0.000000e+00> : vector<8xf32>
    %470 = vector.multi_reduction <add>, %469, %cst_228 [1] : vector<8x8xf32> to vector<8xf32>
    %471 = vector.shape_cast %470 : vector<8xf32> to vector<8x1xf32>
    %472 = tpu.reciprocal %471 {approx = true} : vector<8x1xf32> -> vector<8x1xf32>
    %473 = vector.broadcast %472 : vector<8x1xf32> to vector<8x8xf32>
    %474 = arith.mulf %469, %473 : vector<8x8xf32>
    %cst_229 = arith.constant dense<0.000000e+00> : vector<8x8xf32>
    %475 = tpu.matmul %474, %461, %cst_229 {dimension_numbers = #tpu.dot_dimension_numbers<[1], [0], [0], [1], [0, 0, 1, 1], [], []>} : vector<8x8xf32>, vector<8x8xf32>, vector<8x8xf32> -> vector<8x8xf32>
    %476 = vector.extract_strided_slice %387 {offsets = [8, 8], sizes = [8, 8], strides = [1, 1]} : vector<16x96xf32> to vector<8x8xf32>
    %477 = vector.extract_strided_slice %387 {offsets = [8, 40], sizes = [8, 8], strides = [1, 1]} : vector<16x96xf32> to vector<8x8xf32>
    %478 = vector.extract_strided_slice %387 {offsets = [8, 72], sizes = [8, 8], strides = [1, 1]} : vector<16x96xf32> to vector<8x8xf32>
    %cst_230 = arith.constant dense<0.000000e+00> : vector<8x8xf32>
    %479 = tpu.matmul %476, %477, %cst_230 {dimension_numbers = #tpu.dot_dimension_numbers<[1], [1], [0], [0], [0, 0, 1, 0], [], []>} : vector<8x8xf32>, vector<8x8xf32>, vector<8x8xf32> -> vector<8x8xf32>
    %480 = vector.broadcast %458 : vector<1x8xf32> to vector<8x8xf32>
    %481 = arith.addf %479, %480 : vector<8x8xf32>
    %cst_231 = arith.constant dense<0xFF800000> : vector<8xf32>
    %482 = vector.multi_reduction <maximumf>, %481, %cst_231 [1] : vector<8x8xf32> to vector<8xf32>
    %483 = vector.shape_cast %482 : vector<8xf32> to vector<8x1xf32>
    %484 = vector.broadcast %483 : vector<8x1xf32> to vector<8x8xf32>
    %485 = arith.subf %481, %484 : vector<8x8xf32>
    %486 = math.exp %485 : vector<8x8xf32>
    %cst_232 = arith.constant dense<0.000000e+00> : vector<8xf32>
    %487 = vector.multi_reduction <add>, %486, %cst_232 [1] : vector<8x8xf32> to vector<8xf32>
    %488 = vector.shape_cast %487 : vector<8xf32> to vector<8x1xf32>
    %489 = tpu.reciprocal %488 {approx = true} : vector<8x1xf32> -> vector<8x1xf32>
    %490 = vector.broadcast %489 : vector<8x1xf32> to vector<8x8xf32>
    %491 = arith.mulf %486, %490 : vector<8x8xf32>
    %cst_233 = arith.constant dense<0.000000e+00> : vector<8x8xf32>
    %492 = tpu.matmul %491, %478, %cst_233 {dimension_numbers = #tpu.dot_dimension_numbers<[1], [0], [0], [1], [0, 0, 1, 1], [], []>} : vector<8x8xf32>, vector<8x8xf32>, vector<8x8xf32> -> vector<8x8xf32>
    %493 = vector.extract_strided_slice %387 {offsets = [8, 16], sizes = [8, 8], strides = [1, 1]} : vector<16x96xf32> to vector<8x8xf32>
    %494 = vector.extract_strided_slice %387 {offsets = [8, 48], sizes = [8, 8], strides = [1, 1]} : vector<16x96xf32> to vector<8x8xf32>
    %495 = vector.extract_strided_slice %387 {offsets = [8, 80], sizes = [8, 8], strides = [1, 1]} : vector<16x96xf32> to vector<8x8xf32>
    %cst_234 = arith.constant dense<0.000000e+00> : vector<8x8xf32>
    %496 = tpu.matmul %493, %494, %cst_234 {dimension_numbers = #tpu.dot_dimension_numbers<[1], [1], [0], [0], [0, 0, 1, 0], [], []>} : vector<8x8xf32>, vector<8x8xf32>, vector<8x8xf32> -> vector<8x8xf32>
    %497 = vector.broadcast %458 : vector<1x8xf32> to vector<8x8xf32>
    %498 = arith.addf %496, %497 : vector<8x8xf32>
    %cst_235 = arith.constant dense<0xFF800000> : vector<8xf32>
    %499 = vector.multi_reduction <maximumf>, %498, %cst_235 [1] : vector<8x8xf32> to vector<8xf32>
    %500 = vector.shape_cast %499 : vector<8xf32> to vector<8x1xf32>
    %501 = vector.broadcast %500 : vector<8x1xf32> to vector<8x8xf32>
    %502 = arith.subf %498, %501 : vector<8x8xf32>
    %503 = math.exp %502 : vector<8x8xf32>
    %cst_236 = arith.constant dense<0.000000e+00> : vector<8xf32>
    %504 = vector.multi_reduction <add>, %503, %cst_236 [1] : vector<8x8xf32> to vector<8xf32>
    %505 = vector.shape_cast %504 : vector<8xf32> to vector<8x1xf32>
    %506 = tpu.reciprocal %505 {approx = true} : vector<8x1xf32> -> vector<8x1xf32>
    %507 = vector.broadcast %506 : vector<8x1xf32> to vector<8x8xf32>
    %508 = arith.mulf %503, %507 : vector<8x8xf32>
    %cst_237 = arith.constant dense<0.000000e+00> : vector<8x8xf32>
    %509 = tpu.matmul %508, %495, %cst_237 {dimension_numbers = #tpu.dot_dimension_numbers<[1], [0], [0], [1], [0, 0, 1, 1], [], []>} : vector<8x8xf32>, vector<8x8xf32>, vector<8x8xf32> -> vector<8x8xf32>
    %510 = vector.extract_strided_slice %387 {offsets = [8, 24], sizes = [8, 8], strides = [1, 1]} : vector<16x96xf32> to vector<8x8xf32>
    %511 = vector.extract_strided_slice %387 {offsets = [8, 56], sizes = [8, 8], strides = [1, 1]} : vector<16x96xf32> to vector<8x8xf32>
    %512 = vector.extract_strided_slice %387 {offsets = [8, 88], sizes = [8, 8], strides = [1, 1]} : vector<16x96xf32> to vector<8x8xf32>
    %cst_238 = arith.constant dense<0.000000e+00> : vector<8x8xf32>
    %513 = tpu.matmul %510, %511, %cst_238 {dimension_numbers = #tpu.dot_dimension_numbers<[1], [1], [0], [0], [0, 0, 1, 0], [], []>} : vector<8x8xf32>, vector<8x8xf32>, vector<8x8xf32> -> vector<8x8xf32>
    %514 = vector.broadcast %458 : vector<1x8xf32> to vector<8x8xf32>
    %515 = arith.addf %513, %514 : vector<8x8xf32>
    %cst_239 = arith.constant dense<0xFF800000> : vector<8xf32>
    %516 = vector.multi_reduction <maximumf>, %515, %cst_239 [1] : vector<8x8xf32> to vector<8xf32>
    %517 = vector.shape_cast %516 : vector<8xf32> to vector<8x1xf32>
    %518 = vector.broadcast %517 : vector<8x1xf32> to vector<8x8xf32>
    %519 = arith.subf %515, %518 : vector<8x8xf32>
    %520 = math.exp %519 : vector<8x8xf32>
    %cst_240 = arith.constant dense<0.000000e+00> : vector<8xf32>
    %521 = vector.multi_reduction <add>, %520, %cst_240 [1] : vector<8x8xf32> to vector<8xf32>
    %522 = vector.shape_cast %521 : vector<8xf32> to vector<8x1xf32>
    %523 = tpu.reciprocal %522 {approx = true} : vector<8x1xf32> -> vector<8x1xf32>
    %524 = vector.broadcast %523 : vector<8x1xf32> to vector<8x8xf32>
    %525 = arith.mulf %520, %524 : vector<8x8xf32>
    %cst_241 = arith.constant dense<0.000000e+00> : vector<8x8xf32>
    %526 = tpu.matmul %525, %512, %cst_241 {dimension_numbers = #tpu.dot_dimension_numbers<[1], [0], [0], [1], [0, 0, 1, 1], [], []>} : vector<8x8xf32>, vector<8x8xf32>, vector<8x8xf32> -> vector<8x8xf32>
    %527 = tpu.concatenate %475, %492, %509, %526 in 1 : vector<8x8xf32>, vector<8x8xf32>, vector<8x8xf32>, vector<8x8xf32> -> vector<8x32xf32>
    %528 = tpu.concatenate %457, %527 in 0 : vector<8x32xf32>, vector<8x32xf32> -> vector<16x32xf32>
    %c192 = arith.constant 192 : index
    %c0_242 = arith.constant 0 : index
    %529 = vector.load %arg3[%c192, %c0_242] : memref<352x128xf32, #tpu.memory_space<vmem>>, vector<32x32xf32>
    %cst_243 = arith.constant dense<0.000000e+00> : vector<16x32xf32>
    %530 = tpu.matmul %528, %529, %cst_243 {dimension_numbers = #tpu.dot_dimension_numbers<[1], [0], [0], [1], [0, 0, 1, 1], [], []>} : vector<16x32xf32>, vector<32x32xf32>, vector<16x32xf32> -> vector<16x32xf32>
    %c11_244 = arith.constant 11 : index
    %c0_245 = arith.constant 0 : index
    %531 = vector.load %arg4[%c11_244, %c0_245] : memref<19x128xf32, #tpu.memory_space<vmem>>, vector<1x32xf32>
    %532 = vector.broadcast %531 : vector<1x32xf32> to vector<16x32xf32>
    %533 = arith.addf %530, %532 : vector<16x32xf32>
    %534 = arith.addf %382, %533 : vector<16x32xf32>
    %c12_246 = arith.constant 12 : index
    %c0_247 = arith.constant 0 : index
    %535 = vector.load %arg4[%c12_246, %c0_247] : memref<19x128xf32, #tpu.memory_space<vmem>>, vector<1x32xf32>
    %c13_248 = arith.constant 13 : index
    %c0_249 = arith.constant 0 : index
    %536 = vector.load %arg4[%c13_248, %c0_249] : memref<19x128xf32, #tpu.memory_space<vmem>>, vector<1x32xf32>
    %cst_250 = arith.constant dense<0.000000e+00> : vector<16xf32>
    %537 = vector.multi_reduction <add>, %534, %cst_250 [1] : vector<16x32xf32> to vector<16xf32>
    %538 = vector.shape_cast %537 : vector<16xf32> to vector<16x1xf32>
    %cst_251 = arith.constant 3.200000e+01 : f32
    %539 = vector.broadcast %cst_251 : f32 to vector<16x1xf32>
    %540 = arith.divf %538, %539 : vector<16x1xf32>
    %541 = arith.mulf %534, %534 : vector<16x32xf32>
    %cst_252 = arith.constant dense<0.000000e+00> : vector<16xf32>
    %542 = vector.multi_reduction <add>, %541, %cst_252 [1] : vector<16x32xf32> to vector<16xf32>
    %543 = vector.shape_cast %542 : vector<16xf32> to vector<16x1xf32>
    %cst_253 = arith.constant 3.200000e+01 : f32
    %544 = vector.broadcast %cst_253 : f32 to vector<16x1xf32>
    %545 = arith.divf %543, %544 : vector<16x1xf32>
    %546 = vector.broadcast %540 : vector<16x1xf32> to vector<16x32xf32>
    %547 = arith.subf %534, %546 : vector<16x32xf32>
    %548 = arith.mulf %540, %540 : vector<16x1xf32>
    %549 = arith.subf %545, %548 : vector<16x1xf32>
    %cst_254 = arith.constant 9.99999996E-13 : f32
    %550 = vector.broadcast %cst_254 : f32 to vector<16x1xf32>
    %551 = arith.addf %549, %550 : vector<16x1xf32>
    %552 = math.rsqrt %551 : vector<16x1xf32>
    %553 = vector.broadcast %552 : vector<16x1xf32> to vector<16x32xf32>
    %554 = arith.mulf %547, %553 : vector<16x32xf32>
    %555 = vector.broadcast %535 : vector<1x32xf32> to vector<16x32xf32>
    %556 = arith.mulf %554, %555 : vector<16x32xf32>
    %557 = vector.broadcast %536 : vector<1x32xf32> to vector<16x32xf32>
    %558 = arith.addf %556, %557 : vector<16x32xf32>
    %c224 = arith.constant 224 : index
    %c0_255 = arith.constant 0 : index
    %559 = vector.load %arg3[%c224, %c0_255] : memref<352x128xf32, #tpu.memory_space<vmem>>, vector<32x64xf32>
    %cst_256 = arith.constant dense<0.000000e+00> : vector<16x64xf32>
    %560 = tpu.matmul %558, %559, %cst_256 {dimension_numbers = #tpu.dot_dimension_numbers<[1], [0], [0], [1], [0, 0, 1, 1], [], []>} : vector<16x32xf32>, vector<32x64xf32>, vector<16x64xf32> -> vector<16x64xf32>
    %c14_257 = arith.constant 14 : index
    %c0_258 = arith.constant 0 : index
    %561 = vector.load %arg4[%c14_257, %c0_258] : memref<19x128xf32, #tpu.memory_space<vmem>>, vector<1x64xf32>
    %562 = vector.broadcast %561 : vector<1x64xf32> to vector<16x64xf32>
    %563 = arith.addf %560, %562 : vector<16x64xf32>
    %564 = arith.mulf %563, %563 : vector<16x64xf32>
    %565 = arith.mulf %563, %564 : vector<16x64xf32>
    %cst_259 = arith.constant 4.471500e-02 : f32
    %566 = vector.broadcast %cst_259 : f32 to vector<16x64xf32>
    %567 = arith.mulf %566, %565 : vector<16x64xf32>
    %568 = arith.addf %563, %567 : vector<16x64xf32>
    %cst_260 = arith.constant 0.797884583 : f32
    %569 = vector.broadcast %cst_260 : f32 to vector<16x64xf32>
    %570 = arith.mulf %569, %568 : vector<16x64xf32>
    %571 = math.tanh %570 : vector<16x64xf32>
    %cst_261 = arith.constant 1.000000e+00 : f32
    %572 = vector.broadcast %cst_261 : f32 to vector<16x64xf32>
    %573 = arith.addf %572, %571 : vector<16x64xf32>
    %cst_262 = arith.constant 5.000000e-01 : f32
    %574 = vector.broadcast %cst_262 : f32 to vector<16x64xf32>
    %575 = arith.mulf %574, %573 : vector<16x64xf32>
    %576 = arith.mulf %563, %575 : vector<16x64xf32>
    %c256 = arith.constant 256 : index
    %c0_263 = arith.constant 0 : index
    %577 = vector.load %arg3[%c256, %c0_263] : memref<352x128xf32, #tpu.memory_space<vmem>>, vector<64x32xf32>
    %cst_264 = arith.constant dense<0.000000e+00> : vector<16x32xf32>
    %578 = tpu.matmul %576, %577, %cst_264 {dimension_numbers = #tpu.dot_dimension_numbers<[1], [0], [0], [1], [0, 0, 1, 1], [], []>} : vector<16x64xf32>, vector<64x32xf32>, vector<16x32xf32> -> vector<16x32xf32>
    %c15_265 = arith.constant 15 : index
    %c0_266 = arith.constant 0 : index
    %579 = vector.load %arg4[%c15_265, %c0_266] : memref<19x128xf32, #tpu.memory_space<vmem>>, vector<1x32xf32>
    %580 = vector.broadcast %579 : vector<1x32xf32> to vector<16x32xf32>
    %581 = arith.addf %578, %580 : vector<16x32xf32>
    %582 = arith.addf %558, %581 : vector<16x32xf32>
    %c16 = arith.constant 16 : index
    %c0_267 = arith.constant 0 : index
    %583 = vector.load %arg4[%c16, %c0_267] : memref<19x128xf32, #tpu.memory_space<vmem>>, vector<1x32xf32>
    %c17 = arith.constant 17 : index
    %c0_268 = arith.constant 0 : index
    %584 = vector.load %arg4[%c17, %c0_268] : memref<19x128xf32, #tpu.memory_space<vmem>>, vector<1x32xf32>
    %cst_269 = arith.constant dense<0.000000e+00> : vector<16xf32>
    %585 = vector.multi_reduction <add>, %582, %cst_269 [1] : vector<16x32xf32> to vector<16xf32>
    %586 = vector.shape_cast %585 : vector<16xf32> to vector<16x1xf32>
    %cst_270 = arith.constant 3.200000e+01 : f32
    %587 = vector.broadcast %cst_270 : f32 to vector<16x1xf32>
    %588 = arith.divf %586, %587 : vector<16x1xf32>
    %589 = arith.mulf %582, %582 : vector<16x32xf32>
    %cst_271 = arith.constant dense<0.000000e+00> : vector<16xf32>
    %590 = vector.multi_reduction <add>, %589, %cst_271 [1] : vector<16x32xf32> to vector<16xf32>
    %591 = vector.shape_cast %590 : vector<16xf32> to vector<16x1xf32>
    %cst_272 = arith.constant 3.200000e+01 : f32
    %592 = vector.broadcast %cst_272 : f32 to vector<16x1xf32>
    %593 = arith.divf %591, %592 : vector<16x1xf32>
    %594 = vector.broadcast %588 : vector<16x1xf32> to vector<16x32xf32>
    %595 = arith.subf %582, %594 : vector<16x32xf32>
    %596 = arith.mulf %588, %588 : vector<16x1xf32>
    %597 = arith.subf %593, %596 : vector<16x1xf32>
    %cst_273 = arith.constant 9.99999996E-13 : f32
    %598 = vector.broadcast %cst_273 : f32 to vector<16x1xf32>
    %599 = arith.addf %597, %598 : vector<16x1xf32>
    %600 = math.rsqrt %599 : vector<16x1xf32>
    %601 = vector.broadcast %600 : vector<16x1xf32> to vector<16x32xf32>
    %602 = arith.mulf %595, %601 : vector<16x32xf32>
    %603 = vector.broadcast %583 : vector<1x32xf32> to vector<16x32xf32>
    %604 = arith.mulf %602, %603 : vector<16x32xf32>
    %605 = vector.broadcast %584 : vector<1x32xf32> to vector<16x32xf32>
    %606 = arith.addf %604, %605 : vector<16x32xf32>
    %c320 = arith.constant 320 : index
    %c0_274 = arith.constant 0 : index
    %607 = vector.load %arg3[%c320, %c0_274] : memref<352x128xf32, #tpu.memory_space<vmem>>, vector<32x128xf32>
    %cst_275 = arith.constant dense<0.000000e+00> : vector<16x128xf32>
    %608 = tpu.matmul %606, %607, %cst_275 {dimension_numbers = #tpu.dot_dimension_numbers<[1], [0], [0], [1], [0, 0, 1, 1], [], []>} : vector<16x32xf32>, vector<32x128xf32>, vector<16x128xf32> -> vector<16x128xf32>
    %c18 = arith.constant 18 : index
    %c0_276 = arith.constant 0 : index
    %609 = vector.load %arg4[%c18, %c0_276] : memref<19x128xf32, #tpu.memory_space<vmem>>, vector<1x128xf32>
    %610 = vector.broadcast %609 : vector<1x128xf32> to vector<16x128xf32>
    %611 = arith.addf %608, %610 : vector<16x128xf32>
    %c0_277 = arith.constant 0 : index
    %c0_278 = arith.constant 0 : index
    %612 = vector.load %arg5[%c0_277, %c0_278] : memref<16x128xf32, #tpu.memory_space<vmem>>, vector<16x128xf32>
    tpu.vector_store %arg5[%c0_277, %c0_278], %611 {strides = array<i32>} : memref<16x128xf32, #tpu.memory_space<vmem>>, vector<16x128xf32>,
    return
  }
}

</mosaic_0001>

<llo_original>
// kernel: ner_forward.1
$region0: #{ner_forward.1}
  #allocation0 [shape = 'u32[]', space=smem, size = 0x4, offset = 0x4, fixed_abs, tag = 'smem constant byte address 0x4 - core index']
  #allocation1 [shape = 'u32[144,128]{1,0:T(1,128)}', space=vmem, size = 0x12000, scoped, tag = 'internal scratch']
  #allocation2 [shape = 'f32[16,32]{1,0:T(8,128)}', space=vmem, size = 0x2000, scoped, tag = 'scratch operand']
  %s0 = inlined_call_operand.vmem [shape: s32[2,8], index: 0, kind: input, shape index: {}]
  %s1 = inlined_call_operand.vmem [shape: f32[2,8], index: 1, kind: input, shape index: {}]
  %s2 = inlined_call_operand.vmem [shape: f32[116,1,32], index: 2, kind: input, shape index: {}]
  %s3 = inlined_call_operand.hbm [shape: f32[352,128], index: 3, kind: input, shape index: {}]
  %s4 = inlined_call_operand.vmem [shape: f32[19,128], index: 4, kind: input, shape index: {}]
  %s5 = inlined_call_operand.vmem [shape: f32[16,128], index: 5, kind: output, shape index: {}]
  %s6 = sld [smem:[#allocation0]]
  $region38: #{ner_forward.1} parent=0
    _
  %s8 = ssub.s32 1, %s6
  %s9 = scalar_select 0, %s8, %s6
  $region1: #{ner_forward.1} parent=0
    #allocation3 [shape = 'u8[1024]{0}', space=smem, size = 0x400, scoped, tag = 'input window, operand 0, single buffered']
    #allocation4 [shape = 's32[1]{0}', space=sflag, size = 0x4, scoped, tag = 'scoped memory for ner_forward.1']
    #allocation5 [shape = 's32[1]{0}', space=sflag, size = 0x4, scoped, tag = 'scoped memory for ner_forward.1']
    #allocation6 [shape = 'u8[180224]{0}', space=vmem, size = 0x2c000, scoped, tag = 'input window, operand 3, single buffered']
    %10 = vsyncpa [#allocation5], 0
    %11 = vsyncpa [#allocation4], 0
    // Predicated region
    $region2: #{ner_forward.1} parent=1 // pred_check
      _
    $region3: #{ner_forward.1} parent=1 // pred_check_branch
      %13 = sbr.rel (0) target = $region5
    $region4: #{ner_forward.1} parent=1 // pred_region
      %s15 = ssub.s32 32, 32
      %16 = vsyncadd [#allocation5], %s15
      %s18 = sshll.u32 %s0, 4
      %s19 = int_to_ptr.vmem [resolvable:$true] %s18
      %21 = dma.vmem_to_smem %s19, 32, [#allocation3], [#allocation5]
    $region5: #{ner_forward.1} parent=1 // pred_fallthru
      _
    // Predicated region
    $region6: #{ner_forward.1} parent=1 // pred_check
      _
    $region7: #{ner_forward.1} parent=1 // pred_check_branch
      %23 = sbr.rel (0) target = $region9
    $region8: #{ner_forward.1} parent=1 // pred_region
      _
    $region9: #{ner_forward.1} parent=1 // pred_fallthru
      _
    // Predicated region
    $region10: #{ner_forward.1} parent=1 // pred_check
      _
    $region11: #{ner_forward.1} parent=1 // pred_check_branch
      %25 = sbr.rel (0) target = $region13
    $region12: #{ner_forward.1} parent=1 // pred_region
      _
    $region13: #{ner_forward.1} parent=1 // pred_fallthru
      _
    // Predicated region
    $region14: #{ner_forward.1} parent=1 // pred_check
      _
    $region15: #{ner_forward.1} parent=1 // pred_check_branch
      %27 = sbr.rel (0) target = $region17
    $region16: #{ner_forward.1} parent=1 // pred_region
      %s29 = ssub.s32 5632, 5632
      %30 = vsyncadd [#allocation4], %s29
      %s31 = sshll.u32 [#allocation6], 4
      %s32 = int_to_ptr.vmem [resolvable:$true] %s31
      %37 = dma.hbm_to_vmem [thread:$0]  %s3, 5632, %s32, [#allocation4], 128, 128, 8
    $region17: #{ner_forward.1} parent=1 // pred_fallthru
      _
    // Predicated region
    $region18: #{ner_forward.1} parent=1 // pred_check
      _
    $region19: #{ner_forward.1} parent=1 // pred_check_branch
      %39 = sbr.rel (0) target = $region21
    $region20: #{ner_forward.1} parent=1 // pred_region
      _
    $region21: #{ner_forward.1} parent=1 // pred_fallthru
      _
    // Predicated region
    $region22: #{ner_forward.1} parent=1 // pred_check
      _
    $region23: #{ner_forward.1} parent=1 // pred_check_branch
      %41 = sbr.rel (0) target = $region25
    $region24: #{ner_forward.1} parent=1 // pred_region
      %42 = dma.done [#allocation5], 32
    $region25: #{ner_forward.1} parent=1 // pred_fallthru
      _
    // Predicated region
    $region26: #{ner_forward.1} parent=1 // pred_check
      _
    $region27: #{ner_forward.1} parent=1 // pred_check_branch
      %44 = sbr.rel (0) target = $region29
    $region28: #{ner_forward.1} parent=1 // pred_region
      %45 = dma.done [#allocation4], 5632
    $region29: #{ner_forward.1} parent=1 // pred_fallthru
      _
    %46 = sfence
    %s47 = sld [smem:[#allocation3]]
    %s48 = scalar_lea.vmem %s2, %s47
    %v49 = vld [vmem:[%s48] sm:$0x1]
    %s50 = scalar_lea.vmem %s2, 100
    %v51 = vld [vmem:[%s50] sm:$0x1]
    %v52 = vadd.f32 %v49, %v51
    %vm53 = vcmask 253952
    %54 = vst.msk [vmem:[#allocation2] sm:$0x1] %vm53, %v52
    %s55 = sld [smem:[#allocation3 + $0x1]]
    %s56 = scalar_lea.vmem %s2, %s55
    %v57 = vld [vmem:[%s56] sm:$0x1]
    %s58 = scalar_lea.vmem %s2, 101
    %v59 = vld [vmem:[%s58] sm:$0x1]
    %v60 = vadd.f32 %v57, %v59
    %61 = vst.msk [vmem:[#allocation2 + $0x1] sm:$0x1] %vm53, %v60
    %s62 = sld [smem:[#allocation3 + $0x2]]
    %s63 = scalar_lea.vmem %s2, %s62
    %v64 = vld [vmem:[%s63] sm:$0x1]
    %s65 = scalar_lea.vmem %s2, 102
    %v66 = vld [vmem:[%s65] sm:$0x1]
    %v67 = vadd.f32 %v64, %v66
    %68 = vst.msk [vmem:[#allocation2 + $0x2] sm:$0x1] %vm53, %v67
    %s69 = sld [smem:[#allocation3 + $0x3]]
    %s70 = scalar_lea.vmem %s2, %s69
    %v71 = vld [vmem:[%s70] sm:$0x1]
    %s72 = scalar_lea.vmem %s2, 103
    %v73 = vld [vmem:[%s72] sm:$0x1]
    %v74 = vadd.f32 %v71, %v73
    %75 = vst.msk [vmem:[#allocation2 + $0x3] sm:$0x1] %vm53, %v74
    %s76 = sld [smem:[#allocation3 + $0x4]]
    %s77 = scalar_lea.vmem %s2, %s76
    %v78 = vld [vmem:[%s77] sm:$0x1]
    %s79 = scalar_lea.vmem %s2, 104
    %v80 = vld [vmem:[%s79] sm:$0x1]
    %v81 = vadd.f32 %v78, %v80
    %82 = vst.msk [vmem:[#allocation2 + $0x4] sm:$0x1] %vm53, %v81
    %s83 = sld [smem:[#allocation3 + $0x5]]
    %s84 = scalar_lea.vmem %s2, %s83
    %v85 = vld [vmem:[%s84] sm:$0x1]
    %s86 = scalar_lea.vmem %s2, 105
    %v87 = vld [vmem:[%s86] sm:$0x1]
    %v88 = vadd.f32 %v85, %v87
    %89 = vst.msk [vmem:[#allocation2 + $0x5] sm:$0x1] %vm53, %v88
    %s90 = sld [smem:[#allocation3 + $0x6]]
    %s91 = scalar_lea.vmem %s2, %s90
    %v92 = vld [vmem:[%s91] sm:$0x1]
    %s93 = scalar_lea.vmem %s2, 106
    %v94 = vld [vmem:[%s93] sm:$0x1]
    %v95 = vadd.f32 %v92, %v94
    %96 = vst.msk [vmem:[#allocation2 + $0x6] sm:$0x1] %vm53, %v95
    %s97 = sld [smem:[#allocation3 + $0x7]]
    %s98 = scalar_lea.vmem %s2, %s97
    %v99 = vld [vmem:[%s98] sm:$0x1]
    %s100 = scalar_lea.vmem %s2, 107
    %v101 = vld [vmem:[%s100] sm:$0x1]
    %v102 = vadd.f32 %v99, %v101
    %103 = vst.msk [vmem:[#allocation2 + $0x7] sm:$0x1] %vm53, %v102
    %s104 = sld [smem:[#allocation3 + $0x80]]
    %s105 = scalar_lea.vmem %s2, %s104
    %v106 = vld [vmem:[%s105] sm:$0x1]
    %v107 = vld [vmem:[%s50] sm:$0x1]
    %v108 = vadd.f32 %v106, %v107
    %109 = vst.msk [vmem:[#allocation2 + $0x8] sm:$0x1] %vm53, %v108
    %s110 = sld [smem:[#allocation3 + $0x81]]
    %s111 = scalar_lea.vmem %s2, %s110
    %v112 = vld [vmem:[%s111] sm:$0x1]
    %v113 = vld [vmem:[%s58] sm:$0x1]
    %v114 = vadd.f32 %v112, %v113
    %115 = vst.msk [vmem:[#allocation2 + $0x9] sm:$0x1] %vm53, %v114
    %s116 = sld [smem:[#allocation3 + $0x82]]
    %s117 = scalar_lea.vmem %s2, %s116
    %v118 = vld [vmem:[%s117] sm:$0x1]
    %v119 = vld [vmem:[%s65] sm:$0x1]
    %v120 = vadd.f32 %v118, %v119
    %121 = vst.msk [vmem:[#allocation2 + $0xa] sm:$0x1] %vm53, %v120
    %s122 = sld [smem:[#allocation3 + $0x83]]
    %s123 = scalar_lea.vmem %s2, %s122
    %v124 = vld [vmem:[%s123] sm:$0x1]
    %v125 = vld [vmem:[%s72] sm:$0x1]
    %v126 = vadd.f32 %v124, %v125
    %127 = vst.msk [vmem:[#allocation2 + $0xb] sm:$0x1] %vm53, %v126
    %s128 = sld [smem:[#allocation3 + $0x84]]
    %s129 = scalar_lea.vmem %s2, %s128
    %v130 = vld [vmem:[%s129] sm:$0x1]
    %v131 = vld [vmem:[%s79] sm:$0x1]
    %v132 = vadd.f32 %v130, %v131
    %133 = vst.msk [vmem:[#allocation2 + $0xc] sm:$0x1] %vm53, %v132
    %s134 = sld [smem:[#allocation3 + $0x85]]
    %s135 = scalar_lea.vmem %s2, %s134
    %v136 = vld [vmem:[%s135] sm:$0x1]
    %v137 = vld [vmem:[%s86] sm:$0x1]
    %v138 = vadd.f32 %v136, %v137
    %139 = vst.msk [vmem:[#allocation2 + $0xd] sm:$0x1] %vm53, %v138
    %s140 = sld [smem:[#allocation3 + $0x86]]
    %s141 = scalar_lea.vmem %s2, %s140
    %v142 = vld [vmem:[%s141] sm:$0x1]
    %v143 = vld [vmem:[%s93] sm:$0x1]
    %v144 = vadd.f32 %v142, %v143
    %145 = vst.msk [vmem:[#allocation2 + $0xe] sm:$0x1] %vm53, %v144
    %s146 = sld [smem:[#allocation3 + $0x87]]
    %s147 = scalar_lea.vmem %s2, %s146
    %v148 = vld [vmem:[%s147] sm:$0x1]
    %v149 = vld [vmem:[%s100] sm:$0x1]
    %v150 = vadd.f32 %v148, %v149
    %151 = vst.msk [vmem:[#allocation2 + $0xf] sm:$0x1] %vm53, %v150
    %v152 = vld [vmem:[#allocation2] sm:$0xff]
    %v153 = vld [vmem:[#allocation2 + $0x8] sm:$0xff]
    %v154 = vld [vmem:[%s4] sm:$0x1]
    %v155 = vld [vmem:[%s4 + $0x1] sm:$0x1]
    %vm156 = vcmask 261120
    %v157 = vsel %vm156, %v152, 0.0
    %158 = vadd.xlane.f32.xlu0 %v157
    %v159 = vpop.xlane.xlu0 %158
    %v160 = vsel %vm156, %v153, 0.0
    %161 = vadd.xlane.f32.xlu0 %v160
    %v162 = vpop.xlane.xlu0 %161
    %v163 = vrcp.pop 32.0
    %v164 = vmul.f32 %v159, %v163
    %v165 = vmul.f32 %v162, %v163
    %v166 = vmul.f32 %v152, %v152
    %v167 = vmul.f32 %v153, %v153
    %v168 = vsel %vm156, %v166, 0.0
    %169 = vadd.xlane.f32.xlu0 %v168
    %v170 = vpop.xlane.xlu0 %169
    %v171 = vsel %vm156, %v167, 0.0
    %172 = vadd.xlane.f32.xlu0 %v171
    %v173 = vpop.xlane.xlu0 %172
    %v174 = vmul.f32 %v170, %v163
    %v175 = vmul.f32 %v173, %v163
    %v176 = vsub.f32 %v152, %v164
    %v177 = vsub.f32 %v153, %v165
    %v178 = vmul.f32 %v164, %v164
    %v179 = vmul.f32 %v165, %v165
    %v180 = vsub.f32 %v174, %v178
    %v181 = vsub.f32 %v175, %v179
    %v182 = vadd.f32 %v180, 1e-12
    %v183 = vadd.f32 %v181, 1e-12
    %v184 = vrsqrt.pop %v182
    %v185 = vrsqrt.pop %v183
    %v186 = vmul.f32 %v176, %v184
    %v187 = vmul.f32 %v177, %v185
    %v188 = vlaneseq
    %v189 = vshrl.u32 %v188, 7
    %v190 = vsub.s32 0, %v189
    %v191 = vrot.slane %v154, %v190
    %v192 = vmul.f32 %v186, %v191
    %v193 = vmul.f32 %v187, %v191
    %v194 = vlaneseq
    %v195 = vshrl.u32 %v194, 7
    %v196 = vsub.s32 0, %v195
    %v197 = vrot.slane %v155, %v196
    %v198 = vadd.f32 %v192, %v197
    %v199 = vadd.f32 %v193, %v197
    %v200 = vld [vmem:[%s1] sm:$0x3]
    %vm201 = vcmp.gt.f32.partialorder %v200, 0.5
    %v202 = vsel %vm201, 0.0, -1e+09
    %v203 = vld [vmem:[#allocation6] sm:$0xff]
    %v204 = vld [vmem:[#allocation6 + $0x8] sm:$0xff]
    %v205 = vld [vmem:[#allocation6 + $0x10] sm:$0xff]
    %v206 = vld [vmem:[#allocation6 + $0x18] sm:$0xff]
    %v207 = vld [vmem:[%s4 + $0x2] sm:$0x1]
    %v208 = vlaneseq
    %v209 = vshrl.u32 %v208, 7
    %v210 = vsub.s32 0, %v209
    %v211 = vrot.slane %v207, %v210
    %v213 = vsel %vm156, %v198, 0
    %v216 = vsel %vm156, %v199, 0
    %218 = vmatprep.subr.mxu0 0.0
    %219 = vmatpush1.msra.mxu0 %v203
    %220 = vmatprep.subr.mxu0 0.0
    %221 = vmatpush1.msra.mxu0 %v204
    %222 = vmatprep.subr.mxu0 0.0
    %223 = vmatpush1.msra.mxu0 %v205
    %224 = vmatprep.subr.mxu0 0.0
    %225 = vmatpush1.msra.mxu0 %v206
    %226 = vmatprep.subr.mxu0 0.0
    %227 = vmatpush1.msra.mxu0 0.0
    %228 = vmatprep.subr.mxu0 0.0
    %229 = vmatpush1.msra.mxu0 0.0
    %230 = vmatprep.subr.mxu0 0.0
    %231 = vmatpush1.msra.mxu0 0.0
    %232 = vmatprep.subr.mxu0 0.0
    %233 = vmatpush1.msra.mxu0 0.0
    %234 = vmatprep.subr.mxu0 0.0
    %235 = vmatpush1.msra.mxu0 0.0
    %236 = vmatprep.subr.mxu0 0.0
    %237 = vmatpush1.msra.mxu0 0.0
    %238 = vmatprep.subr.mxu0 0.0
    %239 = vmatpush1.msra.mxu0 0.0
    %240 = vmatprep.subr.mxu0 0.0
    %241 = vmatpush1.msra.mxu0 0.0
    %242 = vmatprep.subr.mxu0 0.0
    %243 = vmatpush1.msra.mxu0 0.0
    %244 = vmatprep.subr.mxu0 0.0
    %245 = vmatpush1.msra.mxu0 0.0
    %246 = vmatprep.subr.mxu0 0.0
    %247 = vmatpush1.msra.mxu0 0.0
    %248 = vmatprep.subr.mxu0 0.0
    %249 = vmatpush1.msra.mxu0 0.0
    %250 = vmatprep.subr.mxu0 0.0
    %251 = vmatpush1.msra.mxu0 0.0
    %252 = vmatprep.subr.mxu0 0.0
    %253 = vmatpush1.msra.mxu0 0.0
    %254 = vmatprep.subr.mxu0 0.0
    %255 = vmatpush1.msra.mxu0 0.0
    %256 = vmatprep.subr.mxu0 0.0
    %257 = vmatpush1.msra.mxu0 0.0
    %258 = vmatprep.subr.mxu0 0.0
    %259 = vmatpush1.msra.mxu0 0.0
    %260 = vmatprep.subr.mxu0 0.0
    %261 = vmatpush1.msra.mxu0 0.0
    %262 = vmatprep.subr.mxu0 0.0
    %263 = vmatpush1.msra.mxu0 0.0
    %264 = vmatprep.subr.mxu0 0.0
    %265 = vmatpush1.msra.mxu0 0.0
    %266 = vmatprep.subr.mxu0 0.0
    %267 = vmatpush1.msra.mxu0 0.0
    %268 = vmatprep.subr.mxu0 0.0
    %269 = vmatpush1.msra.mxu0 0.0
    %270 = vmatprep.subr.mxu0 0.0
    %271 = vmatpush1.msra.mxu0 0.0
    %272 = vmatprep.subr.mxu0 0.0
    %273 = vmatpush1.msra.mxu0 0.0
    %274 = vmatprep.subr.mxu0 0.0
    %275 = vmatpush1.msra.mxu0 0.0
    %276 = vmatprep.subr.mxu0 0.0
    %277 = vmatpush1.msra.mxu0 0.0
    %278 = vmatprep.subr.mxu0 0.0
    %279 = vmatpush1.msra.mxu0 0.0
    %280 = vmatprep.subr.mxu0 0.0
    %281 = vmatpush1.msra.mxu0 0.0
    %282 = vmatprep.mubr.f32.mxu0 0.0
    %283 = vmatmul.mubr.f32.gmra.mrb[0].mxu0 %v213
    %v284 = vpop.f32.mrb[0].mxu0
    %v285 = vadd.f32 %v211, %v284
    %v286 = vpop.f32.mrb[0].mxu0
    %287 = vmatprep.mubr.f32.mxu0 0.0
    %288 = vmatmul.mubr.f32.gmra.mrb[0].mxu0 %v216
    %v289 = vpop.f32.mrb[0].mxu0
    %v290 = vadd.f32 %v211, %v289
    %v291 = vpop.f32.mrb[0].mxu0
    %292 = vdwg.mxu0
    %v293 = vlaneseq
    %v294 = vshrl.u32 %v293, 7
    %v295 = vsub.s32 0, %v294
    %v296 = vrot.slane %v202, %v295
    %298 = vrot.lane.b32.xlu0 %v285, 96
    %v299 = vpop.permute.xlu0 %298
    %vm300 = vcmask 64512
    %v301 = vsel %vm300, %v285, 0
    %v303 = vsel %vm300, %v299, 0
    %305 = vmatprep.subr.mxu0 0.0
    %306 = vmatpush1.xpose.msra.mxu0 %v303
    %307 = vmatprep.subr.mxu0 0.0
    %308 = vmatpush1.xpose.msra.mxu0 0.0
    %309 = vmatprep.subr.mxu0 0.0
    %310 = vmatpush1.xpose.msra.mxu0 0.0
    %311 = vmatprep.subr.mxu0 0.0
    %312 = vmatpush1.xpose.msra.mxu0 0.0
    %313 = vmatprep.subr.mxu0 0.0
    %314 = vmatpush1.xpose.msra.mxu0 0.0
    %315 = vmatprep.subr.mxu0 0.0
    %316 = vmatpush1.xpose.msra.mxu0 0.0
    %317 = vmatprep.subr.mxu0 0.0
    %318 = vmatpush1.xpose.msra.mxu0 0.0
    %319 = vmatprep.subr.mxu0 0.0
    %320 = vmatpush1.xpose.msra.mxu0 0.0
    %321 = vmatprep.subr.mxu0 0.0
    %322 = vmatpush1.xpose.msra.mxu0 0.0
    %323 = vmatprep.subr.mxu0 0.0
    %324 = vmatpush1.xpose.msra.mxu0 0.0
    %325 = vmatprep.subr.mxu0 0.0
    %326 = vmatpush1.xpose.msra.mxu0 0.0
    %327 = vmatprep.subr.mxu0 0.0
    %328 = vmatpush1.xpose.msra.mxu0 0.0
    %329 = vmatprep.subr.mxu0 0.0
    %330 = vmatpush1.xpose.msra.mxu0 0.0
    %331 = vmatprep.subr.mxu0 0.0
    %332 = vmatpush1.xpose.msra.mxu0 0.0
    %333 = vmatprep.subr.mxu0 0.0
    %334 = vmatpush1.xpose.msra.mxu0 0.0
    %335 = vmatprep.subr.mxu0 0.0
    %336 = vmatpush1.xpose.msra.mxu0 0.0
    %337 = vmatprep.subr.mxu0 0.0
    %338 = vmatpush1.xpose.msra.mxu0 0.0
    %339 = vmatprep.subr.mxu0 0.0
    %340 = vmatpush1.xpose.msra.mxu0 0.0
    %341 = vmatprep.subr.mxu0 0.0
    %342 = vmatpush1.xpose.msra.mxu0 0.0
    %343 = vmatprep.subr.mxu0 0.0
    %344 = vmatpush1.xpose.msra.mxu0 0.0
    %345 = vmatprep.subr.mxu0 0.0
    %346 = vmatpush1.xpose.msra.mxu0 0.0
    %347 = vmatprep.subr.mxu0 0.0
    %348 = vmatpush1.xpose.msra.mxu0 0.0
    %349 = vmatprep.subr.mxu0 0.0
    %350 = vmatpush1.xpose.msra.mxu0 0.0
    %351 = vmatprep.subr.mxu0 0.0
    %352 = vmatpush1.xpose.msra.mxu0 0.0
    %353 = vmatprep.subr.mxu0 0.0
    %354 = vmatpush1.xpose.msra.mxu0 0.0
    %355 = vmatprep.subr.mxu0 0.0
    %356 = vmatpush1.xpose.msra.mxu0 0.0
    %357 = vmatprep.subr.mxu0 0.0
    %358 = vmatpush1.xpose.msra.mxu0 0.0
    %359 = vmatprep.subr.mxu0 0.0
    %360 = vmatpush1.xpose.msra.mxu0 0.0
    %361 = vmatprep.subr.mxu0 0.0
    %362 = vmatpush1.xpose.msra.mxu0 0.0
    %363 = vmatprep.subr.mxu0 0.0
    %364 = vmatpush1.xpose.msra.mxu0 0.0
    %365 = vmatprep.subr.mxu0 0.0
    %366 = vmatpush1.xpose.msra.mxu0 0.0
    %367 = vmatprep.subr.mxu0 0.0
    %368 = vmatpush1.xpose.msra.mxu0 0.0
    %369 = vmatprep.mubr.f32.mxu0 0.0
    %370 = vmatmul.mubr.f32.gmra.mrb[0].mxu0 %v301
    %v371 = vpop.f32.mrb[0].mxu0
    %v372 = vadd.f32 %v296, %v371
    %v373 = vpop.f32.mrb[0].mxu0
    %374 = vdwg.mxu0
    %v375 = vsel %vm300, %v372, -inf
    %376 = vmax.xlane.f32.xlu0 %v375
    %v377 = vpop.xlane.xlu0 %376
    %v378 = vsub.f32 %v372, %v377
    %v379 = vmul.f32 %v378, 1.442695
    %v380 = vpow.pop %v379
    %v381 = vsel %vm300, %v380, 0.0
    %382 = vadd.xlane.f32.xlu0 %v381
    %v383 = vpop.xlane.xlu0 %382
    %v384 = vrcp.pop %v383
    %v385 = vmul.f32 %v380, %v384
    %386 = vrot.lane.b32.xlu0 %v285, 64
    %v387 = vpop.permute.xlu0 %386
    %v390 = vsel %vm300, %v385, 0
    %392 = vmatprep.subr.mxu0 0.0
    %393 = vmatpush1.msra.mxu0 %v387
    %394 = vmatprep.subr.mxu0 0.0
    %395 = vmatpush1.msra.mxu0 0.0
    %396 = vmatprep.subr.mxu0 0.0
    %397 = vmatpush1.msra.mxu0 0.0
    %398 = vmatprep.subr.mxu0 0.0
    %399 = vmatpush1.msra.mxu0 0.0
    %400 = vmatprep.subr.mxu0 0.0
    %401 = vmatpush1.msra.mxu0 0.0
    %402 = vmatprep.subr.mxu0 0.0
    %403 = vmatpush1.msra.mxu0 0.0
    %404 = vmatprep.subr.mxu0 0.0
    %405 = vmatpush1.msra.mxu0 0.0
    %406 = vmatprep.subr.mxu0 0.0
    %407 = vmatpush1.msra.mxu0 0.0
    %408 = vmatprep.subr.mxu0 0.0
    %409 = vmatpush1.msra.mxu0 0.0
    %410 = vmatprep.subr.mxu0 0.0
    %411 = vmatpush1.msra.mxu0 0.0
    %412 = vmatprep.subr.mxu0 0.0
    %413 = vmatpush1.msra.mxu0 0.0
    %414 = vmatprep.subr.mxu0 0.0
    %415 = vmatpush1.msra.mxu0 0.0
    %416 = vmatprep.subr.mxu0 0.0
    %417 = vmatpush1.msra.mxu0 0.0
    %418 = vmatprep.subr.mxu0 0.0
    %419 = vmatpush1.msra.mxu0 0.0
    %420 = vmatprep.subr.mxu0 0.0
    %421 = vmatpush1.msra.mxu0 0.0
    %422 = vmatprep.subr.mxu0 0.0
    %423 = vmatpush1.msra.mxu0 0.0
    %424 = vmatprep.subr.mxu0 0.0
    %425 = vmatpush1.msra.mxu0 0.0
    %426 = vmatprep.subr.mxu0 0.0
    %427 = vmatpush1.msra.mxu0 0.0
    %428 = vmatprep.subr.mxu0 0.0
    %429 = vmatpush1.msra.mxu0 0.0
    %430 = vmatprep.subr.mxu0 0.0
    %431 = vmatpush1.msra.mxu0 0.0
    %432 = vmatprep.subr.mxu0 0.0
    %433 = vmatpush1.msra.mxu0 0.0
    %434 = vmatprep.subr.mxu0 0.0
    %435 = vmatpush1.msra.mxu0 0.0
    %436 = vmatprep.subr.mxu0 0.0
    %437 = vmatpush1.msra.mxu0 0.0
    %438 = vmatprep.subr.mxu0 0.0
    %439 = vmatpush1.msra.mxu0 0.0
    %440 = vmatprep.subr.mxu0 0.0
    %441 = vmatpush1.msra.mxu0 0.0
    %442 = vmatprep.subr.mxu0 0.0
    %443 = vmatpush1.msra.mxu0 0.0
    %444 = vmatprep.subr.mxu0 0.0
    %445 = vmatpush1.msra.mxu0 0.0
    %446 = vmatprep.subr.mxu0 0.0
    %447 = vmatpush1.msra.mxu0 0.0
    %448 = vmatprep.subr.mxu0 0.0
    %449 = vmatpush1.msra.mxu0 0.0
    %450 = vmatprep.subr.mxu0 0.0
    %451 = vmatpush1.msra.mxu0 0.0
    %452 = vmatprep.subr.mxu0 0.0
    %453 = vmatpush1.msra.mxu0 0.0
    %454 = vmatprep.subr.mxu0 0.0
    %455 = vmatpush1.msra.mxu0 0.0
    %456 = vmatprep.mubr.f32.mxu0 0.0
    %457 = vmatmul.mubr.f32.gmra.mrb[0].mxu0 %v390
    %v458 = vpop.f32.mrb[0].mxu0
    %v459 = vadd.f32 0.0, %v458
    %v460 = vpop.f32.mrb[0].mxu0
    %461 = vdwg.mxu0
    %462 = vrot.lane.b32.xlu0 %v285, 120
    %v463 = vpop.permute.xlu0 %462
    %464 = vrot.lane.b32.xlu0 %v285, 88
    %v465 = vpop.permute.xlu0 %464
    %v466 = vsel %vm300, %v463, 0
    %v468 = vsel %vm300, %v465, 0
    %470 = vmatprep.subr.mxu0 0.0
    %471 = vmatpush1.xpose.msra.mxu0 %v468
    %472 = vmatprep.subr.mxu0 0.0
    %473 = vmatpush1.xpose.msra.mxu0 0.0
    %474 = vmatprep.subr.mxu0 0.0
    %475 = vmatpush1.xpose.msra.mxu0 0.0
    %476 = vmatprep.subr.mxu0 0.0
    %477 = vmatpush1.xpose.msra.mxu0 0.0
    %478 = vmatprep.subr.mxu0 0.0
    %479 = vmatpush1.xpose.msra.mxu0 0.0
    %480 = vmatprep.subr.mxu0 0.0
    %481 = vmatpush1.xpose.msra.mxu0 0.0
    %482 = vmatprep.subr.mxu0 0.0
    %483 = vmatpush1.xpose.msra.mxu0 0.0
    %484 = vmatprep.subr.mxu0 0.0
    %485 = vmatpush1.xpose.msra.mxu0 0.0
    %486 = vmatprep.subr.mxu0 0.0
    %487 = vmatpush1.xpose.msra.mxu0 0.0
    %488 = vmatprep.subr.mxu0 0.0
    %489 = vmatpush1.xpose.msra.mxu0 0.0
    %490 = vmatprep.subr.mxu0 0.0
    %491 = vmatpush1.xpose.msra.mxu0 0.0
    %492 = vmatprep.subr.mxu0 0.0
    %493 = vmatpush1.xpose.msra.mxu0 0.0
    %494 = vmatprep.subr.mxu0 0.0
    %495 = vmatpush1.xpose.msra.mxu0 0.0
    %496 = vmatprep.subr.mxu0 0.0
    %497 = vmatpush1.xpose.msra.mxu0 0.0
    %498 = vmatprep.subr.mxu0 0.0
    %499 = vmatpush1.xpose.msra.mxu0 0.0
    %500 = vmatprep.subr.mxu0 0.0
    %501 = vmatpush1.xpose.msra.mxu0 0.0
    %502 = vmatprep.subr.mxu0 0.0
    %503 = vmatpush1.xpose.msra.mxu0 0.0
    %504 = vmatprep.subr.mxu0 0.0
    %505 = vmatpush1.xpose.msra.mxu0 0.0
    %506 = vmatprep.subr.mxu0 0.0
    %507 = vmatpush1.xpose.msra.mxu0 0.0
    %508 = vmatprep.subr.mxu0 0.0
    %509 = vmatpush1.xpose.msra.mxu0 0.0
    %510 = vmatprep.subr.mxu0 0.0
    %511 = vmatpush1.xpose.msra.mxu0 0.0
    %512 = vmatprep.subr.mxu0 0.0
    %513 = vmatpush1.xpose.msra.mxu0 0.0
    %514 = vmatprep.subr.mxu0 0.0
    %515 = vmatpush1.xpose.msra.mxu0 0.0
    %516 = vmatprep.subr.mxu0 0.0
    %517 = vmatpush1.xpose.msra.mxu0 0.0
    %518 = vmatprep.subr.mxu0 0.0
    %519 = vmatpush1.xpose.msra.mxu0 0.0
    %520 = vmatprep.subr.mxu0 0.0
    %521 = vmatpush1.xpose.msra.mxu0 0.0
    %522 = vmatprep.subr.mxu0 0.0
    %523 = vmatpush1.xpose.msra.mxu0 0.0
    %524 = vmatprep.subr.mxu0 0.0
    %525 = vmatpush1.xpose.msra.mxu0 0.0
    %526 = vmatprep.subr.mxu0 0.0
    %527 = vmatpush1.xpose.msra.mxu0 0.0
    %528 = vmatprep.subr.mxu0 0.0
    %529 = vmatpush1.xpose.msra.mxu0 0.0
    %530 = vmatprep.subr.mxu0 0.0
    %531 = vmatpush1.xpose.msra.mxu0 0.0
    %532 = vmatprep.subr.mxu0 0.0
    %533 = vmatpush1.xpose.msra.mxu0 0.0
    %534 = vmatprep.mubr.f32.mxu0 0.0
    %535 = vmatmul.mubr.f32.gmra.mrb[0].mxu0 %v466
    %v536 = vpop.f32.mrb[0].mxu0
    %v537 = vadd.f32 %v296, %v536
    %v538 = vpop.f32.mrb[0].mxu0
    %539 = vdwg.mxu0
    %v540 = vsel %vm300, %v537, -inf
    %541 = vmax.xlane.f32.xlu0 %v540
    %v542 = vpop.xlane.xlu0 %541
    %v543 = vsub.f32 %v537, %v542
    %v544 = vmul.f32 %v543, 1.442695
    %v545 = vpow.pop %v544
    %v546 = vsel %vm300, %v545, 0.0
    %547 = vadd.xlane.f32.xlu0 %v546
    %v548 = vpop.xlane.xlu0 %547
    %v549 = vrcp.pop %v548
    %v550 = vmul.f32 %v545, %v549
    %551 = vrot.lane.b32.xlu0 %v285, 56
    %v552 = vpop.permute.xlu0 %551
    %v555 = vsel %vm300, %v550, 0
    %557 = vmatprep.subr.mxu0 0.0
    %558 = vmatpush1.msra.mxu0 %v552
    %559 = vmatprep.subr.mxu0 0.0
    %560 = vmatpush1.msra.mxu0 0.0
    %561 = vmatprep.subr.mxu0 0.0
    %562 = vmatpush1.msra.mxu0 0.0
    %563 = vmatprep.subr.mxu0 0.0
    %564 = vmatpush1.msra.mxu0 0.0
    %565 = vmatprep.subr.mxu0 0.0
    %566 = vmatpush1.msra.mxu0 0.0
    %567 = vmatprep.subr.mxu0 0.0
    %568 = vmatpush1.msra.mxu0 0.0
    %569 = vmatprep.subr.mxu0 0.0
    %570 = vmatpush1.msra.mxu0 0.0
    %571 = vmatprep.subr.mxu0 0.0
    %572 = vmatpush1.msra.mxu0 0.0
    %573 = vmatprep.subr.mxu0 0.0
    %574 = vmatpush1.msra.mxu0 0.0
    %575 = vmatprep.subr.mxu0 0.0
    %576 = vmatpush1.msra.mxu0 0.0
    %577 = vmatprep.subr.mxu0 0.0
    %578 = vmatpush1.msra.mxu0 0.0
    %579 = vmatprep.subr.mxu0 0.0
    %580 = vmatpush1.msra.mxu0 0.0
    %581 = vmatprep.subr.mxu0 0.0
    %582 = vmatpush1.msra.mxu0 0.0
    %583 = vmatprep.subr.mxu0 0.0
    %584 = vmatpush1.msra.mxu0 0.0
    %585 = vmatprep.subr.mxu0 0.0
    %586 = vmatpush1.msra.mxu0 0.0
    %587 = vmatprep.subr.mxu0 0.0
    %588 = vmatpush1.msra.mxu0 0.0
    %589 = vmatprep.subr.mxu0 0.0
    %590 = vmatpush1.msra.mxu0 0.0
    %591 = vmatprep.subr.mxu0 0.0
    %592 = vmatpush1.msra.mxu0 0.0
    %593 = vmatprep.subr.mxu0 0.0
    %594 = vmatpush1.msra.mxu0 0.0
    %595 = vmatprep.subr.mxu0 0.0
    %596 = vmatpush1.msra.mxu0 0.0
    %597 = vmatprep.subr.mxu0 0.0
    %598 = vmatpush1.msra.mxu0 0.0
    %599 = vmatprep.subr.mxu0 0.0
    %600 = vmatpush1.msra.mxu0 0.0
    %601 = vmatprep.subr.mxu0 0.0
    %602 = vmatpush1.msra.mxu0 0.0
    %603 = vmatprep.subr.mxu0 0.0
    %604 = vmatpush1.msra.mxu0 0.0
    %605 = vmatprep.subr.mxu0 0.0
    %606 = vmatpush1.msra.mxu0 0.0
    %607 = vmatprep.subr.mxu0 0.0
    %608 = vmatpush1.msra.mxu0 0.0
    %609 = vmatprep.subr.mxu0 0.0
    %610 = vmatpush1.msra.mxu0 0.0
    %611 = vmatprep.subr.mxu0 0.0
    %612 = vmatpush1.msra.mxu0 0.0
    %613 = vmatprep.subr.mxu0 0.0
    %614 = vmatpush1.msra.mxu0 0.0
    %615 = vmatprep.subr.mxu0 0.0
    %616 = vmatpush1.msra.mxu0 0.0
    %617 = vmatprep.subr.mxu0 0.0
    %618 = vmatpush1.msra.mxu0 0.0
    %619 = vmatprep.subr.mxu0 0.0
    %620 = vmatpush1.msra.mxu0 0.0
    %621 = vmatprep.mubr.f32.mxu0 0.0
    %622 = vmatmul.mubr.f32.gmra.mrb[0].mxu0 %v555
    %v623 = vpop.f32.mrb[0].mxu0
    %v624 = vadd.f32 0.0, %v623
    %v625 = vpop.f32.mrb[0].mxu0
    %626 = vdwg.mxu0
    %627 = vrot.lane.b32.xlu0 %v285, 112
    %v628 = vpop.permute.xlu0 %627
    %629 = vrot.lane.b32.xlu0 %v285, 80
    %v630 = vpop.permute.xlu0 %629
    %v631 = vsel %vm300, %v628, 0
    %v633 = vsel %vm300, %v630, 0
    %635 = vmatprep.subr.mxu0 0.0
    %636 = vmatpush1.xpose.msra.mxu0 %v633
    %637 = vmatprep.subr.mxu0 0.0
    %638 = vmatpush1.xpose.msra.mxu0 0.0
    %639 = vmatprep.subr.mxu0 0.0
    %640 = vmatpush1.xpose.msra.mxu0 0.0
    %641 = vmatprep.subr.mxu0 0.0
    %642 = vmatpush1.xpose.msra.mxu0 0.0
    %643 = vmatprep.subr.mxu0 0.0
    %644 = vmatpush1.xpose.msra.mxu0 0.0
    %645 = vmatprep.subr.mxu0 0.0
    %646 = vmatpush1.xpose.msra.mxu0 0.0
    %647 = vmatprep.subr.mxu0 0.0
    %648 = vmatpush1.xpose.msra.mxu0 0.0
    %649 = vmatprep.subr.mxu0 0.0
    %650 = vmatpush1.xpose.msra.mxu0 0.0
    %651 = vmatprep.subr.mxu0 0.0
    %652 = vmatpush1.xpose.msra.mxu0 0.0
    %653 = vmatprep.subr.mxu0 0.0
    %654 = vmatpush1.xpose.msra.mxu0 0.0
    %655 = vmatprep.subr.mxu0 0.0
    %656 = vmatpush1.xpose.msra.mxu0 0.0
    %657 = vmatprep.subr.mxu0 0.0
    %658 = vmatpush1.xpose.msra.mxu0 0.0
    %659 = vmatprep.subr.mxu0 0.0
    %660 = vmatpush1.xpose.msra.mxu0 0.0
    %661 = vmatprep.subr.mxu0 0.0
    %662 = vmatpush1.xpose.msra.mxu0 0.0
    %663 = vmatprep.subr.mxu0 0.0
    %664 = vmatpush1.xpose.msra.mxu0 0.0
    %665 = vmatprep.subr.mxu0 0.0
    %666 = vmatpush1.xpose.msra.mxu0 0.0
    %667 = vmatprep.subr.mxu0 0.0
    %668 = vmatpush1.xpose.msra.mxu0 0.0
    %669 = vmatprep.subr.mxu0 0.0
    %670 = vmatpush1.xpose.msra.mxu0 0.0
    %671 = vmatprep.subr.mxu0 0.0
    %672 = vmatpush1.xpose.msra.mxu0 0.0
    %673 = vmatprep.subr.mxu0 0.0
    %674 = vmatpush1.xpose.msra.mxu0 0.0
    %675 = vmatprep.subr.mxu0 0.0
    %676 = vmatpush1.xpose.msra.mxu0 0.0
    %677 = vmatprep.subr.mxu0 0.0
    %678 = vmatpush1.xpose.msra.mxu0 0.0
    %679 = vmatprep.subr.mxu0 0.0
    %680 = vmatpush1.xpose.msra.mxu0 0.0
    %681 = vmatprep.subr.mxu0 0.0
    %682 = vmatpush1.xpose.msra.mxu0 0.0
    %683 = vmatprep.subr.mxu0 0.0
    %684 = vmatpush1.xpose.msra.mxu0 0.0
    %685 = vmatprep.subr.mxu0 0.0
    %686 = vmatpush1.xpose.msra.mxu0 0.0
    %687 = vmatprep.subr.mxu0 0.0
    %688 = vmatpush1.xpose.msra.mxu0 0.0
    %689 = vmatprep.subr.mxu0 0.0
    %690 = vmatpush1.xpose.msra.mxu0 0.0
    %691 = vmatprep.subr.mxu0 0.0
    %692 = vmatpush1.xpose.msra.mxu0 0.0
    %693 = vmatprep.subr.mxu0 0.0
    %694 = vmatpush1.xpose.msra.mxu0 0.0
    %695 = vmatprep.subr.mxu0 0.0
    %696 = vmatpush1.xpose.msra.mxu0 0.0
    %697 = vmatprep.subr.mxu0 0.0
    %698 = vmatpush1.xpose.msra.mxu0 0.0
    %699 = vmatprep.mubr.f32.mxu0 0.0
    %700 = vmatmul.mubr.f32.gmra.mrb[0].mxu0 %v631
    %v701 = vpop.f32.mrb[0].mxu0
    %v702 = vadd.f32 %v296, %v701
    %v703 = vpop.f32.mrb[0].mxu0
    %704 = vdwg.mxu0
    %v705 = vsel %vm300, %v702, -inf
    %706 = vmax.xlane.f32.xlu0 %v705
    %v707 = vpop.xlane.xlu0 %706
    %v708 = vsub.f32 %v702, %v707
    %v709 = vmul.f32 %v708, 1.442695
    %v710 = vpow.pop %v709
    %v711 = vsel %vm300, %v710, 0.0
    %712 = vadd.xlane.f32.xlu0 %v711
    %v713 = vpop.xlane.xlu0 %712
    %v714 = vrcp.pop %v713
    %v715 = vmul.f32 %v710, %v714
    %716 = vrot.lane.b32.xlu0 %v285, 48
    %v717 = vpop.permute.xlu0 %716
    %v720 = vsel %vm300, %v715, 0
    %722 = vmatprep.subr.mxu0 0.0
    %723 = vmatpush1.msra.mxu0 %v717
    %724 = vmatprep.subr.mxu0 0.0
    %725 = vmatpush1.msra.mxu0 0.0
    %726 = vmatprep.subr.mxu0 0.0
    %727 = vmatpush1.msra.mxu0 0.0
    %728 = vmatprep.subr.mxu0 0.0
    %729 = vmatpush1.msra.mxu0 0.0
    %730 = vmatprep.subr.mxu0 0.0
    %731 = vmatpush1.msra.mxu0 0.0
    %732 = vmatprep.subr.mxu0 0.0
    %733 = vmatpush1.msra.mxu0 0.0
    %734 = vmatprep.subr.mxu0 0.0
    %735 = vmatpush1.msra.mxu0 0.0
    %736 = vmatprep.subr.mxu0 0.0
    %737 = vmatpush1.msra.mxu0 0.0
    %738 = vmatprep.subr.mxu0 0.0
    %739 = vmatpush1.msra.mxu0 0.0
    %740 = vmatprep.subr.mxu0 0.0
    %741 = vmatpush1.msra.mxu0 0.0
    %742 = vmatprep.subr.mxu0 0.0
    %743 = vmatpush1.msra.mxu0 0.0
    %744 = vmatprep.subr.mxu0 0.0
    %745 = vmatpush1.msra.mxu0 0.0
    %746 = vmatprep.subr.mxu0 0.0
    %747 = vmatpush1.msra.mxu0 0.0
    %748 = vmatprep.subr.mxu0 0.0
    %749 = vmatpush1.msra.mxu0 0.0
    %750 = vmatprep.subr.mxu0 0.0
    %751 = vmatpush1.msra.mxu0 0.0
    %752 = vmatprep.subr.mxu0 0.0
    %753 = vmatpush1.msra.mxu0 0.0
    %754 = vmatprep.subr.mxu0 0.0
    %755 = vmatpush1.msra.mxu0 0.0
    %756 = vmatprep.subr.mxu0 0.0
    %757 = vmatpush1.msra.mxu0 0.0
    %758 = vmatprep.subr.mxu0 0.0
    %759 = vmatpush1.msra.mxu0 0.0
    %760 = vmatprep.subr.mxu0 0.0
    %761 = vmatpush1.msra.mxu0 0.0
    %762 = vmatprep.subr.mxu0 0.0
    %763 = vmatpush1.msra.mxu0 0.0
    %764 = vmatprep.subr.mxu0 0.0
    %765 = vmatpush1.msra.mxu0 0.0
    %766 = vmatprep.subr.mxu0 0.0
    %767 = vmatpush1.msra.mxu0 0.0
    %768 = vmatprep.subr.mxu0 0.0
    %769 = vmatpush1.msra.mxu0 0.0
    %770 = vmatprep.subr.mxu0 0.0
    %771 = vmatpush1.msra.mxu0 0.0
    %772 = vmatprep.subr.mxu0 0.0
    %773 = vmatpush1.msra.mxu0 0.0
    %774 = vmatprep.subr.mxu0 0.0
    %775 = vmatpush1.msra.mxu0 0.0
    %776 = vmatprep.subr.mxu0 0.0
    %777 = vmatpush1.msra.mxu0 0.0
    %778 = vmatprep.subr.mxu0 0.0
    %779 = vmatpush1.msra.mxu0 0.0
    %780 = vmatprep.subr.mxu0 0.0
    %781 = vmatpush1.msra.mxu0 0.0
    %782 = vmatprep.subr.mxu0 0.0
    %783 = vmatpush1.msra.mxu0 0.0
    %784 = vmatprep.subr.mxu0 0.0
    %785 = vmatpush1.msra.mxu0 0.0
    %786 = vmatprep.mubr.f32.mxu0 0.0
    %787 = vmatmul.mubr.f32.gmra.mrb[0].mxu0 %v720
    %v788 = vpop.f32.mrb[0].mxu0
    %v789 = vadd.f32 0.0, %v788
    %v790 = vpop.f32.mrb[0].mxu0
    %791 = vdwg.mxu0
    %792 = vrot.lane.b32.xlu0 %v285, 104
    %v793 = vpop.permute.xlu0 %792
    %794 = vrot.lane.b32.xlu0 %v285, 72
    %v795 = vpop.permute.xlu0 %794
    %v796 = vsel %vm300, %v793, 0
    %v798 = vsel %vm300, %v795, 0
    %800 = vmatprep.subr.mxu0 0.0
    %801 = vmatpush1.xpose.msra.mxu0 %v798
    %802 = vmatprep.subr.mxu0 0.0
    %803 = vmatpush1.xpose.msra.mxu0 0.0
    %804 = vmatprep.subr.mxu0 0.0
    %805 = vmatpush1.xpose.msra.mxu0 0.0
    %806 = vmatprep.subr.mxu0 0.0
    %807 = vmatpush1.xpose.msra.mxu0 0.0
    %808 = vmatprep.subr.mxu0 0.0
    %809 = vmatpush1.xpose.msra.mxu0 0.0
    %810 = vmatprep.subr.mxu0 0.0
    %811 = vmatpush1.xpose.msra.mxu0 0.0
    %812 = vmatprep.subr.mxu0 0.0
    %813 = vmatpush1.xpose.msra.mxu0 0.0
    %814 = vmatprep.subr.mxu0 0.0
    %815 = vmatpush1.xpose.msra.mxu0 0.0
    %816 = vmatprep.subr.mxu0 0.0
    %817 = vmatpush1.xpose.msra.mxu0 0.0
    %818 = vmatprep.subr.mxu0 0.0
    %819 = vmatpush1.xpose.msra.mxu0 0.0
    %820 = vmatprep.subr.mxu0 0.0
    %821 = vmatpush1.xpose.msra.mxu0 0.0
    %822 = vmatprep.subr.mxu0 0.0
    %823 = vmatpush1.xpose.msra.mxu0 0.0
    %824 = vmatprep.subr.mxu0 0.0
    %825 = vmatpush1.xpose.msra.mxu0 0.0
    %826 = vmatprep.subr.mxu0 0.0
    %827 = vmatpush1.xpose.msra.mxu0 0.0
    %828 = vmatprep.subr.mxu0 0.0
    %829 = vmatpush1.xpose.msra.mxu0 0.0
    %830 = vmatprep.subr.mxu0 0.0
    %831 = vmatpush1.xpose.msra.mxu0 0.0
    %832 = vmatprep.subr.mxu0 0.0
    %833 = vmatpush1.xpose.msra.mxu0 0.0
    %834 = vmatprep.subr.mxu0 0.0
    %835 = vmatpush1.xpose.msra.mxu0 0.0
    %836 = vmatprep.subr.mxu0 0.0
    %837 = vmatpush1.xpose.msra.mxu0 0.0
    %838 = vmatprep.subr.mxu0 0.0
    %839 = vmatpush1.xpose.msra.mxu0 0.0
    %840 = vmatprep.subr.mxu0 0.0
    %841 = vmatpush1.xpose.msra.mxu0 0.0
    %842 = vmatprep.subr.mxu0 0.0
    %843 = vmatpush1.xpose.msra.mxu0 0.0
    %844 = vmatprep.subr.mxu0 0.0
    %845 = vmatpush1.xpose.msra.mxu0 0.0
    %846 = vmatprep.subr.mxu0 0.0
    %847 = vmatpush1.xpose.msra.mxu0 0.0
    %848 = vmatprep.subr.mxu0 0.0
    %849 = vmatpush1.xpose.msra.mxu0 0.0
    %850 = vmatprep.subr.mxu0 0.0
    %851 = vmatpush1.xpose.msra.mxu0 0.0
    %852 = vmatprep.subr.mxu0 0.0
    %853 = vmatpush1.xpose.msra.mxu0 0.0
    %854 = vmatprep.subr.mxu0 0.0
    %855 = vmatpush1.xpose.msra.mxu0 0.0
    %856 = vmatprep.subr.mxu0 0.0
    %857 = vmatpush1.xpose.msra.mxu0 0.0
    %858 = vmatprep.subr.mxu0 0.0
    %859 = vmatpush1.xpose.msra.mxu0 0.0
    %860 = vmatprep.subr.mxu0 0.0
    %861 = vmatpush1.xpose.msra.mxu0 0.0
    %862 = vmatprep.subr.mxu0 0.0
    %863 = vmatpush1.xpose.msra.mxu0 0.0
    %864 = vmatprep.mubr.f32.mxu0 0.0
    %865 = vmatmul.mubr.f32.gmra.mrb[0].mxu0 %v796
    %v866 = vpop.f32.mrb[0].mxu0
    %v867 = vadd.f32 %v296, %v866
    %v868 = vpop.f32.mrb[0].mxu0
    %869 = vdwg.mxu0
    %v870 = vsel %vm300, %v867, -inf
    %871 = vmax.xlane.f32.xlu0 %v870
    %v872 = vpop.xlane.xlu0 %871
    %v873 = vsub.f32 %v867, %v872
    %v874 = vmul.f32 %v873, 1.442695
    %v875 = vpow.pop %v874
    %v876 = vsel %vm300, %v875, 0.0
    %877 = vadd.xlane.f32.xlu0 %v876
    %v878 = vpop.xlane.xlu0 %877
    %v879 = vrcp.pop %v878
    %v880 = vmul.f32 %v875, %v879
    %881 = vrot.lane.b32.xlu0 %v285, 40
    %v882 = vpop.permute.xlu0 %881
    %v885 = vsel %vm300, %v880, 0
    %887 = vmatprep.subr.mxu0 0.0
    %888 = vmatpush1.msra.mxu0 %v882
    %889 = vmatprep.subr.mxu0 0.0
    %890 = vmatpush1.msra.mxu0 0.0
    %891 = vmatprep.subr.mxu0 0.0
    %892 = vmatpush1.msra.mxu0 0.0
    %893 = vmatprep.subr.mxu0 0.0
    %894 = vmatpush1.msra.mxu0 0.0
    %895 = vmatprep.subr.mxu0 0.0
    %896 = vmatpush1.msra.mxu0 0.0
    %897 = vmatprep.subr.mxu0 0.0
    %898 = vmatpush1.msra.mxu0 0.0
    %899 = vmatprep.subr.mxu0 0.0
    %900 = vmatpush1.msra.mxu0 0.0
    %901 = vmatprep.subr.mxu0 0.0
    %902 = vmatpush1.msra.mxu0 0.0
    %903 = vmatprep.subr.mxu0 0.0
    %904 = vmatpush1.msra.mxu0 0.0
    %905 = vmatprep.subr.mxu0 0.0
    %906 = vmatpush1.msra.mxu0 0.0
    %907 = vmatprep.subr.mxu0 0.0
    %908 = vmatpush1.msra.mxu0 0.0
    %909 = vmatprep.subr.mxu0 0.0
    %910 = vmatpush1.msra.mxu0 0.0
    %911 = vmatprep.subr.mxu0 0.0
    %912 = vmatpush1.msra.mxu0 0.0
    %913 = vmatprep.subr.mxu0 0.0
    %914 = vmatpush1.msra.mxu0 0.0
    %915 = vmatprep.subr.mxu0 0.0
    %916 = vmatpush1.msra.mxu0 0.0
    %917 = vmatprep.subr.mxu0 0.0
    %918 = vmatpush1.msra.mxu0 0.0
    %919 = vmatprep.subr.mxu0 0.0
    %920 = vmatpush1.msra.mxu0 0.0
    %921 = vmatprep.subr.mxu0 0.0
    %922 = vmatpush1.msra.mxu0 0.0
    %923 = vmatprep.subr.mxu0 0.0
    %924 = vmatpush1.msra.mxu0 0.0
    %925 = vmatprep.subr.mxu0 0.0
    %926 = vmatpush1.msra.mxu0 0.0
    %927 = vmatprep.subr.mxu0 0.0
    %928 = vmatpush1.msra.mxu0 0.0
    %929 = vmatprep.subr.mxu0 0.0
    %930 = vmatpush1.msra.mxu0 0.0
    %931 = vmatprep.subr.mxu0 0.0
    %932 = vmatpush1.msra.mxu0 0.0
    %933 = vmatprep.subr.mxu0 0.0
    %934 = vmatpush1.msra.mxu0 0.0
    %935 = vmatprep.subr.mxu0 0.0
    %936 = vmatpush1.msra.mxu0 0.0
    %937 = vmatprep.subr.mxu0 0.0
    %938 = vmatpush1.msra.mxu0 0.0
    %939 = vmatprep.subr.mxu0 0.0
    %940 = vmatpush1.msra.mxu0 0.0
    %941 = vmatprep.subr.mxu0 0.0
    %942 = vmatpush1.msra.mxu0 0.0
    %943 = vmatprep.subr.mxu0 0.0
    %944 = vmatpush1.msra.mxu0 0.0
    %945 = vmatprep.subr.mxu0 0.0
    %946 = vmatpush1.msra.mxu0 0.0
    %947 = vmatprep.subr.mxu0 0.0
    %948 = vmatpush1.msra.mxu0 0.0
    %949 = vmatprep.subr.mxu0 0.0
    %950 = vmatpush1.msra.mxu0 0.0
    %951 = vmatprep.mubr.f32.mxu0 0.0
    %952 = vmatmul.mubr.f32.gmra.mrb[0].mxu0 %v885
    %v953 = vpop.f32.mrb[0].mxu0
    %v954 = vadd.f32 0.0, %v953
    %v955 = vpop.f32.mrb[0].mxu0
    %956 = vdwg.mxu0
    %958 = vrot.lane.b32.xlu0 %v624, 8
    %v959 = vpop.permute.xlu0 %958
    %962 = vrot.lane.b32.xlu0 %v789, 16
    %v963 = vpop.permute.xlu0 %962
    %966 = vrot.lane.b32.xlu0 %v954, 24
    %v967 = vpop.permute.xlu0 %966
    %v969 = vsel %vm300, %v459, %v959
    %vm970 = vcmask 130048
    %v971 = vsel %vm970, %v969, %v963
    %vm972 = vcmask 195584
    %v973 = vsel %vm972, %v971, %v967
    %v974 = vlaneseq
    %v975 = vshrl.u32 %v974, 7
    %v976 = vsub.s32 1, %v975
    %v977 = vrot.slane %v202, %v976
    %979 = vrot.lane.b32.xlu0 %v290, 96
    %v980 = vpop.permute.xlu0 %979
    %v981 = vsel %vm300, %v290, 0
    %v983 = vsel %vm300, %v980, 0
    %985 = vmatprep.subr.mxu0 0.0
    %986 = vmatpush1.xpose.msra.mxu0 %v983
    %987 = vmatprep.subr.mxu0 0.0
    %988 = vmatpush1.xpose.msra.mxu0 0.0
    %989 = vmatprep.subr.mxu0 0.0
    %990 = vmatpush1.xpose.msra.mxu0 0.0
    %991 = vmatprep.subr.mxu0 0.0
    %992 = vmatpush1.xpose.msra.mxu0 0.0
    %993 = vmatprep.subr.mxu0 0.0
    %994 = vmatpush1.xpose.msra.mxu0 0.0
    %995 = vmatprep.subr.mxu0 0.0
    %996 = vmatpush1.xpose.msra.mxu0 0.0
    %997 = vmatprep.subr.mxu0 0.0
    %998 = vmatpush1.xpose.msra.mxu0 0.0
    %999 = vmatprep.subr.mxu0 0.0
    %1000 = vmatpush1.xpose.msra.mxu0 0.0
    %1001 = vmatprep.subr.mxu0 0.0
    %1002 = vmatpush1.xpose.msra.mxu0 0.0
    %1003 = vmatprep.subr.mxu0 0.0
    %1004 = vmatpush1.xpose.msra.mxu0 0.0
    %1005 = vmatprep.subr.mxu0 0.0
    %1006 = vmatpush1.xpose.msra.mxu0 0.0
    %1007 = vmatprep.subr.mxu0 0.0
    %1008 = vmatpush1.xpose.msra.mxu0 0.0
    %1009 = vmatprep.subr.mxu0 0.0
    %1010 = vmatpush1.xpose.msra.mxu0 0.0
    %1011 = vmatprep.subr.mxu0 0.0
    %1012 = vmatpush1.xpose.msra.mxu0 0.0
    %1013 = vmatprep.subr.mxu0 0.0
    %1014 = vmatpush1.xpose.msra.mxu0 0.0
    %1015 = vmatprep.subr.mxu0 0.0
    %1016 = vmatpush1.xpose.msra.mxu0 0.0
    %1017 = vmatprep.subr.mxu0 0.0
    %1018 = vmatpush1.xpose.msra.mxu0 0.0
    %1019 = vmatprep.subr.mxu0 0.0
    %1020 = vmatpush1.xpose.msra.mxu0 0.0
    %1021 = vmatprep.subr.mxu0 0.0
    %1022 = vmatpush1.xpose.msra.mxu0 0.0
    %1023 = vmatprep.subr.mxu0 0.0
    %1024 = vmatpush1.xpose.msra.mxu0 0.0
    %1025 = vmatprep.subr.mxu0 0.0
    %1026 = vmatpush1.xpose.msra.mxu0 0.0
    %1027 = vmatprep.subr.mxu0 0.0
    %1028 = vmatpush1.xpose.msra.mxu0 0.0
    %1029 = vmatprep.subr.mxu0 0.0
    %1030 = vmatpush1.xpose.msra.mxu0 0.0
    %1031 = vmatprep.subr.mxu0 0.0
    %1032 = vmatpush1.xpose.msra.mxu0 0.0
    %1033 = vmatprep.subr.mxu0 0.0
    %1034 = vmatpush1.xpose.msra.mxu0 0.0
    %1035 = vmatprep.subr.mxu0 0.0
    %1036 = vmatpush1.xpose.msra.mxu0 0.0
    %1037 = vmatprep.subr.mxu0 0.0
    %1038 = vmatpush1.xpose.msra.mxu0 0.0
    %1039 = vmatprep.subr.mxu0 0.0
    %1040 = vmatpush1.xpose.msra.mxu0 0.0
    %1041 = vmatprep.subr.mxu0 0.0
    %1042 = vmatpush1.xpose.msra.mxu0 0.0
    %1043 = vmatprep.subr.mxu0 0.0
    %1044 = vmatpush1.xpose.msra.mxu0 0.0
    %1045 = vmatprep.subr.mxu0 0.0
    %1046 = vmatpush1.xpose.msra.mxu0 0.0
    %1047 = vmatprep.subr.mxu0 0.0
    %1048 = vmatpush1.xpose.msra.mxu0 0.0
    %1049 = vmatprep.mubr.f32.mxu0 0.0
    %1050 = vmatmul.mubr.f32.gmra.mrb[0].mxu0 %v981
    %v1051 = vpop.f32.mrb[0].mxu0
    %v1052 = vadd.f32 %v977, %v1051
    %v1053 = vpop.f32.mrb[0].mxu0
    %1054 = vdwg.mxu0
    %v1055 = vsel %vm300, %v1052, -inf
    %1056 = vmax.xlane.f32.xlu0 %v1055
    %v1057 = vpop.xlane.xlu0 %1056
    %v1058 = vsub.f32 %v1052, %v1057
    %v1059 = vmul.f32 %v1058, 1.442695
    %v1060 = vpow.pop %v1059
    %v1061 = vsel %vm300, %v1060, 0.0
    %1062 = vadd.xlane.f32.xlu0 %v1061
    %v1063 = vpop.xlane.xlu0 %1062
    %v1064 = vrcp.pop %v1063
    %v1065 = vmul.f32 %v1060, %v1064
    %1066 = vrot.lane.b32.xlu0 %v290, 64
    %v1067 = vpop.permute.xlu0 %1066
    %v1070 = vsel %vm300, %v1065, 0
    %1072 = vmatprep.subr.mxu0 0.0
    %1073 = vmatpush1.msra.mxu0 %v1067
    %1074 = vmatprep.subr.mxu0 0.0
    %1075 = vmatpush1.msra.mxu0 0.0
    %1076 = vmatprep.subr.mxu0 0.0
    %1077 = vmatpush1.msra.mxu0 0.0
    %1078 = vmatprep.subr.mxu0 0.0
    %1079 = vmatpush1.msra.mxu0 0.0
    %1080 = vmatprep.subr.mxu0 0.0
    %1081 = vmatpush1.msra.mxu0 0.0
    %1082 = vmatprep.subr.mxu0 0.0
    %1083 = vmatpush1.msra.mxu0 0.0
    %1084 = vmatprep.subr.mxu0 0.0
    %1085 = vmatpush1.msra.mxu0 0.0
    %1086 = vmatprep.subr.mxu0 0.0
    %1087 = vmatpush1.msra.mxu0 0.0
    %1088 = vmatprep.subr.mxu0 0.0
    %1089 = vmatpush1.msra.mxu0 0.0
    %1090 = vmatprep.subr.mxu0 0.0
    %1091 = vmatpush1.msra.mxu0 0.0
    %1092 = vmatprep.subr.mxu0 0.0
    %1093 = vmatpush1.msra.mxu0 0.0
    %1094 = vmatprep.subr.mxu0 0.0
    %1095 = vmatpush1.msra.mxu0 0.0
    %1096 = vmatprep.subr.mxu0 0.0
    %1097 = vmatpush1.msra.mxu0 0.0
    %1098 = vmatprep.subr.mxu0 0.0
    %1099 = vmatpush1.msra.mxu0 0.0
    %1100 = vmatprep.subr.mxu0 0.0
    %1101 = vmatpush1.msra.mxu0 0.0
    %1102 = vmatprep.subr.mxu0 0.0
    %1103 = vmatpush1.msra.mxu0 0.0
    %1104 = vmatprep.subr.mxu0 0.0
    %1105 = vmatpush1.msra.mxu0 0.0
    %1106 = vmatprep.subr.mxu0 0.0
    %1107 = vmatpush1.msra.mxu0 0.0
    %1108 = vmatprep.subr.mxu0 0.0
    %1109 = vmatpush1.msra.mxu0 0.0
    %1110 = vmatprep.subr.mxu0 0.0
    %1111 = vmatpush1.msra.mxu0 0.0
    %1112 = vmatprep.subr.mxu0 0.0
    %1113 = vmatpush1.msra.mxu0 0.0
    %1114 = vmatprep.subr.mxu0 0.0
    %1115 = vmatpush1.msra.mxu0 0.0
    %1116 = vmatprep.subr.mxu0 0.0
    %1117 = vmatpush1.msra.mxu0 0.0
    %1118 = vmatprep.subr.mxu0 0.0
    %1119 = vmatpush1.msra.mxu0 0.0
    %1120 = vmatprep.subr.mxu0 0.0
    %1121 = vmatpush1.msra.mxu0 0.0
    %1122 = vmatprep.subr.mxu0 0.0
    %1123 = vmatpush1.msra.mxu0 0.0
    %1124 = vmatprep.subr.mxu0 0.0
    %1125 = vmatpush1.msra.mxu0 0.0
    %1126 = vmatprep.subr.mxu0 0.0
    %1127 = vmatpush1.msra.mxu0 0.0
    %1128 = vmatprep.subr.mxu0 0.0
    %1129 = vmatpush1.msra.mxu0 0.0
    %1130 = vmatprep.subr.mxu0 0.0
    %1131 = vmatpush1.msra.mxu0 0.0
    %1132 = vmatprep.subr.mxu0 0.0
    %1133 = vmatpush1.msra.mxu0 0.0
    %1134 = vmatprep.subr.mxu0 0.0
    %1135 = vmatpush1.msra.mxu0 0.0
    %1136 = vmatprep.mubr.f32.mxu0 0.0
    %1137 = vmatmul.mubr.f32.gmra.mrb[0].mxu0 %v1070
    %v1138 = vpop.f32.mrb[0].mxu0
    %v1139 = vadd.f32 0.0, %v1138
    %v1140 = vpop.f32.mrb[0].mxu0
    %1141 = vdwg.mxu0
    %1142 = vrot.lane.b32.xlu0 %v290, 120
    %v1143 = vpop.permute.xlu0 %1142
    %1144 = vrot.lane.b32.xlu0 %v290, 88
    %v1145 = vpop.permute.xlu0 %1144
    %v1146 = vsel %vm300, %v1143, 0
    %v1148 = vsel %vm300, %v1145, 0
    %1150 = vmatprep.subr.mxu0 0.0
    %1151 = vmatpush1.xpose.msra.mxu0 %v1148
    %1152 = vmatprep.subr.mxu0 0.0
    %1153 = vmatpush1.xpose.msra.mxu0 0.0
    %1154 = vmatprep.subr.mxu0 0.0
    %1155 = vmatpush1.xpose.msra.mxu0 0.0
    %1156 = vmatprep.subr.mxu0 0.0
    %1157 = vmatpush1.xpose.msra.mxu0 0.0
    %1158 = vmatprep.subr.mxu0 0.0
    %1159 = vmatpush1.xpose.msra.mxu0 0.0
    %1160 = vmatprep.subr.mxu0 0.0
    %1161 = vmatpush1.xpose.msra.mxu0 0.0
    %1162 = vmatprep.subr.mxu0 0.0
    %1163 = vmatpush1.xpose.msra.mxu0 0.0
    %1164 = vmatprep.subr.mxu0 0.0
    %1165 = vmatpush1.xpose.msra.mxu0 0.0
    %1166 = vmatprep.subr.mxu0 0.0
    %1167 = vmatpush1.xpose.msra.mxu0 0.0
    %1168 = vmatprep.subr.mxu0 0.0
    %1169 = vmatpush1.xpose.msra.mxu0 0.0
    %1170 = vmatprep.subr.mxu0 0.0
    %1171 = vmatpush1.xpose.msra.mxu0 0.0
    %1172 = vmatprep.subr.mxu0 0.0
    %1173 = vmatpush1.xpose.msra.mxu0 0.0
    %1174 = vmatprep.subr.mxu0 0.0
    %1175 = vmatpush1.xpose.msra.mxu0 0.0
    %1176 = vmatprep.subr.mxu0 0.0
    %1177 = vmatpush1.xpose.msra.mxu0 0.0
    %1178 = vmatprep.subr.mxu0 0.0
    %1179 = vmatpush1.xpose.msra.mxu0 0.0
    %1180 = vmatprep.subr.mxu0 0.0
    %1181 = vmatpush1.xpose.msra.mxu0 0.0
    %1182 = vmatprep.subr.mxu0 0.0
    %1183 = vmatpush1.xpose.msra.mxu0 0.0
    %1184 = vmatprep.subr.mxu0 0.0
    %1185 = vmatpush1.xpose.msra.mxu0 0.0
    %1186 = vmatprep.subr.mxu0 0.0
    %1187 = vmatpush1.xpose.msra.mxu0 0.0
    %1188 = vmatprep.subr.mxu0 0.0
    %1189 = vmatpush1.xpose.msra.mxu0 0.0
    %1190 = vmatprep.subr.mxu0 0.0
    %1191 = vmatpush1.xpose.msra.mxu0 0.0
    %1192 = vmatprep.subr.mxu0 0.0
    %1193 = vmatpush1.xpose.msra.mxu0 0.0
    %1194 = vmatprep.subr.mxu0 0.0
    %1195 = vmatpush1.xpose.msra.mxu0 0.0
    %1196 = vmatprep.subr.mxu0 0.0
    %1197 = vmatpush1.xpose.msra.mxu0 0.0
    %1198 = vmatprep.subr.mxu0 0.0
    %1199 = vmatpush1.xpose.msra.mxu0 0.0
    %1200 = vmatprep.subr.mxu0 0.0
    %1201 = vmatpush1.xpose.msra.mxu0 0.0
    %1202 = vmatprep.subr.mxu0 0.0
    %1203 = vmatpush1.xpose.msra.mxu0 0.0
    %1204 = vmatprep.subr.mxu0 0.0
    %1205 = vmatpush1.xpose.msra.mxu0 0.0
    %1206 = vmatprep.subr.mxu0 0.0
    %1207 = vmatpush1.xpose.msra.mxu0 0.0
    %1208 = vmatprep.subr.mxu0 0.0
    %1209 = vmatpush1.xpose.msra.mxu0 0.0
    %1210 = vmatprep.subr.mxu0 0.0
    %1211 = vmatpush1.xpose.msra.mxu0 0.0
    %1212 = vmatprep.subr.mxu0 0.0
    %1213 = vmatpush1.xpose.msra.mxu0 0.0
    %1214 = vmatprep.mubr.f32.mxu0 0.0
    %1215 = vmatmul.mubr.f32.gmra.mrb[0].mxu0 %v1146
    %v1216 = vpop.f32.mrb[0].mxu0
    %v1217 = vadd.f32 %v977, %v1216
    %v1218 = vpop.f32.mrb[0].mxu0
    %1219 = vdwg.mxu0
    %v1220 = vsel %vm300, %v1217, -inf
    %1221 = vmax.xlane.f32.xlu0 %v1220
    %v1222 = vpop.xlane.xlu0 %1221
    %v1223 = vsub.f32 %v1217, %v1222
    %v1224 = vmul.f32 %v1223, 1.442695
    %v1225 = vpow.pop %v1224
    %v1226 = vsel %vm300, %v1225, 0.0
    %1227 = vadd.xlane.f32.xlu0 %v1226
    %v1228 = vpop.xlane.xlu0 %1227
    %v1229 = vrcp.pop %v1228
    %v1230 = vmul.f32 %v1225, %v1229
    %1231 = vrot.lane.b32.xlu0 %v290, 56
    %v1232 = vpop.permute.xlu0 %1231
    %v1235 = vsel %vm300, %v1230, 0
    %1237 = vmatprep.subr.mxu0 0.0
    %1238 = vmatpush1.msra.mxu0 %v1232
    %1239 = vmatprep.subr.mxu0 0.0
    %1240 = vmatpush1.msra.mxu0 0.0
    %1241 = vmatprep.subr.mxu0 0.0
    %1242 = vmatpush1.msra.mxu0 0.0
    %1243 = vmatprep.subr.mxu0 0.0
    %1244 = vmatpush1.msra.mxu0 0.0
    %1245 = vmatprep.subr.mxu0 0.0
    %1246 = vmatpush1.msra.mxu0 0.0
    %1247 = vmatprep.subr.mxu0 0.0
    %1248 = vmatpush1.msra.mxu0 0.0
    %1249 = vmatprep.subr.mxu0 0.0
    %1250 = vmatpush1.msra.mxu0 0.0
    %1251 = vmatprep.subr.mxu0 0.0
    %1252 = vmatpush1.msra.mxu0 0.0
    %1253 = vmatprep.subr.mxu0 0.0
    %1254 = vmatpush1.msra.mxu0 0.0
    %1255 = vmatprep.subr.mxu0 0.0
    %1256 = vmatpush1.msra.mxu0 0.0
    %1257 = vmatprep.subr.mxu0 0.0
    %1258 = vmatpush1.msra.mxu0 0.0
    %1259 = vmatprep.subr.mxu0 0.0
    %1260 = vmatpush1.msra.mxu0 0.0
    %1261 = vmatprep.subr.mxu0 0.0
    %1262 = vmatpush1.msra.mxu0 0.0
    %1263 = vmatprep.subr.mxu0 0.0
    %1264 = vmatpush1.msra.mxu0 0.0
    %1265 = vmatprep.subr.mxu0 0.0
    %1266 = vmatpush1.msra.mxu0 0.0
    %1267 = vmatprep.subr.mxu0 0.0
    %1268 = vmatpush1.msra.mxu0 0.0
    %1269 = vmatprep.subr.mxu0 0.0
    %1270 = vmatpush1.msra.mxu0 0.0
    %1271 = vmatprep.subr.mxu0 0.0
    %1272 = vmatpush1.msra.mxu0 0.0
    %1273 = vmatprep.subr.mxu0 0.0
    %1274 = vmatpush1.msra.mxu0 0.0
    %1275 = vmatprep.subr.mxu0 0.0
    %1276 = vmatpush1.msra.mxu0 0.0
    %1277 = vmatprep.subr.mxu0 0.0
    %1278 = vmatpush1.msra.mxu0 0.0
    %1279 = vmatprep.subr.mxu0 0.0
    %1280 = vmatpush1.msra.mxu0 0.0
    %1281 = vmatprep.subr.mxu0 0.0
    %1282 = vmatpush1.msra.mxu0 0.0
    %1283 = vmatprep.subr.mxu0 0.0
    %1284 = vmatpush1.msra.mxu0 0.0
    %1285 = vmatprep.subr.mxu0 0.0
    %1286 = vmatpush1.msra.mxu0 0.0
    %1287 = vmatprep.subr.mxu0 0.0
    %1288 = vmatpush1.msra.mxu0 0.0
    %1289 = vmatprep.subr.mxu0 0.0
    %1290 = vmatpush1.msra.mxu0 0.0
    %1291 = vmatprep.subr.mxu0 0.0
    %1292 = vmatpush1.msra.mxu0 0.0
    %1293 = vmatprep.subr.mxu0 0.0
    %1294 = vmatpush1.msra.mxu0 0.0
    %1295 = vmatprep.subr.mxu0 0.0
    %1296 = vmatpush1.msra.mxu0 0.0
    %1297 = vmatprep.subr.mxu0 0.0
    %1298 = vmatpush1.msra.mxu0 0.0
    %1299 = vmatprep.subr.mxu0 0.0
    %1300 = vmatpush1.msra.mxu0 0.0
    %1301 = vmatprep.mubr.f32.mxu0 0.0
    %1302 = vmatmul.mubr.f32.gmra.mrb[0].mxu0 %v1235
    %v1303 = vpop.f32.mrb[0].mxu0
    %v1304 = vadd.f32 0.0, %v1303
    %v1305 = vpop.f32.mrb[0].mxu0
    %1306 = vdwg.mxu0
    %1307 = vrot.lane.b32.xlu0 %v290, 112
    %v1308 = vpop.permute.xlu0 %1307
    %1309 = vrot.lane.b32.xlu0 %v290, 80
    %v1310 = vpop.permute.xlu0 %1309
    %v1311 = vsel %vm300, %v1308, 0
    %v1313 = vsel %vm300, %v1310, 0
    %1315 = vmatprep.subr.mxu0 0.0
    %1316 = vmatpush1.xpose.msra.mxu0 %v1313
    %1317 = vmatprep.subr.mxu0 0.0
    %1318 = vmatpush1.xpose.msra.mxu0 0.0
    %1319 = vmatprep.subr.mxu0 0.0
    %1320 = vmatpush1.xpose.msra.mxu0 0.0
    %1321 = vmatprep.subr.mxu0 0.0
    %1322 = vmatpush1.xpose.msra.mxu0 0.0
    %1323 = vmatprep.subr.mxu0 0.0
    %1324 = vmatpush1.xpose.msra.mxu0 0.0
    %1325 = vmatprep.subr.mxu0 0.0
    %1326 = vmatpush1.xpose.msra.mxu0 0.0
    %1327 = vmatprep.subr.mxu0 0.0
    %1328 = vmatpush1.xpose.msra.mxu0 0.0
    %1329 = vmatprep.subr.mxu0 0.0
    %1330 = vmatpush1.xpose.msra.mxu0 0.0
    %1331 = vmatprep.subr.mxu0 0.0
    %1332 = vmatpush1.xpose.msra.mxu0 0.0
    %1333 = vmatprep.subr.mxu0 0.0
    %1334 = vmatpush1.xpose.msra.mxu0 0.0
    %1335 = vmatprep.subr.mxu0 0.0
    %1336 = vmatpush1.xpose.msra.mxu0 0.0
    %1337 = vmatprep.subr.mxu0 0.0
    %1338 = vmatpush1.xpose.msra.mxu0 0.0
    %1339 = vmatprep.subr.mxu0 0.0
    %1340 = vmatpush1.xpose.msra.mxu0 0.0
    %1341 = vmatprep.subr.mxu0 0.0
    %1342 = vmatpush1.xpose.msra.mxu0 0.0
    %1343 = vmatprep.subr.mxu0 0.0
    %1344 = vmatpush1.xpose.msra.mxu0 0.0
    %1345 = vmatprep.subr.mxu0 0.0
    %1346 = vmatpush1.xpose.msra.mxu0 0.0
    %1347 = vmatprep.subr.mxu0 0.0
    %1348 = vmatpush1.xpose.msra.mxu0 0.0
    %1349 = vmatprep.subr.mxu0 0.0
    %1350 = vmatpush1.xpose.msra.mxu0 0.0
    %1351 = vmatprep.subr.mxu0 0.0
    %1352 = vmatpush1.xpose.msra.mxu0 0.0
    %1353 = vmatprep.subr.mxu0 0.0
    %1354 = vmatpush1.xpose.msra.mxu0 0.0
    %1355 = vmatprep.subr.mxu0 0.0
    %1356 = vmatpush1.xpose.msra.mxu0 0.0
    %1357 = vmatprep.subr.mxu0 0.0
    %1358 = vmatpush1.xpose.msra.mxu0 0.0
    %1359 = vmatprep.subr.mxu0 0.0
    %1360 = vmatpush1.xpose.msra.mxu0 0.0
    %1361 = vmatprep.subr.mxu0 0.0
    %1362 = vmatpush1.xpose.msra.mxu0 0.0
    %1363 = vmatprep.subr.mxu0 0.0
    %1364 = vmatpush1.xpose.msra.mxu0 0.0
    %1365 = vmatprep.subr.mxu0 0.0
    %1366 = vmatpush1.xpose.msra.mxu0 0.0
    %1367 = vmatprep.subr.mxu0 0.0
    %1368 = vmatpush1.xpose.msra.mxu0 0.0
    %1369 = vmatprep.subr.mxu0 0.0
    %1370 = vmatpush1.xpose.msra.mxu0 0.0
    %1371 = vmatprep.subr.mxu0 0.0
    %1372 = vmatpush1.xpose.msra.mxu0 0.0
    %1373 = vmatprep.subr.mxu0 0.0
    %1374 = vmatpush1.xpose.msra.mxu0 0.0
    %1375 = vmatprep.subr.mxu0 0.0
    %1376 = vmatpush1.xpose.msra.mxu0 0.0
    %1377 = vmatprep.subr.mxu0 0.0
    %1378 = vmatpush1.xpose.msra.mxu0 0.0
    %1379 = vmatprep.mubr.f32.mxu0 0.0
    %1380 = vmatmul.mubr.f32.gmra.mrb[0].mxu0 %v1311
    %v1381 = vpop.f32.mrb[0].mxu0
    %v1382 = vadd.f32 %v977, %v1381
    %v1383 = vpop.f32.mrb[0].mxu0
    %1384 = vdwg.mxu0
    %v1385 = vsel %vm300, %v1382, -inf
    %1386 = vmax.xlane.f32.xlu0 %v1385
    %v1387 = vpop.xlane.xlu0 %1386
    %v1388 = vsub.f32 %v1382, %v1387
    %v1389 = vmul.f32 %v1388, 1.442695
    %v1390 = vpow.pop %v1389
    %v1391 = vsel %vm300, %v1390, 0.0
    %1392 = vadd.xlane.f32.xlu0 %v1391
    %v1393 = vpop.xlane.xlu0 %1392
    %v1394 = vrcp.pop %v1393
    %v1395 = vmul.f32 %v1390, %v1394
    %1396 = vrot.lane.b32.xlu0 %v290, 48
    %v1397 = vpop.permute.xlu0 %1396
    %v1400 = vsel %vm300, %v1395, 0
    %1402 = vmatprep.subr.mxu0 0.0
    %1403 = vmatpush1.msra.mxu0 %v1397
    %1404 = vmatprep.subr.mxu0 0.0
    %1405 = vmatpush1.msra.mxu0 0.0
    %1406 = vmatprep.subr.mxu0 0.0
    %1407 = vmatpush1.msra.mxu0 0.0
    %1408 = vmatprep.subr.mxu0 0.0
    %1409 = vmatpush1.msra.mxu0 0.0
    %1410 = vmatprep.subr.mxu0 0.0
    %1411 = vmatpush1.msra.mxu0 0.0
    %1412 = vmatprep.subr.mxu0 0.0
    %1413 = vmatpush1.msra.mxu0 0.0
    %1414 = vmatprep.subr.mxu0 0.0
    %1415 = vmatpush1.msra.mxu0 0.0
    %1416 = vmatprep.subr.mxu0 0.0
    %1417 = vmatpush1.msra.mxu0 0.0
    %1418 = vmatprep.subr.mxu0 0.0
    %1419 = vmatpush1.msra.mxu0 0.0
    %1420 = vmatprep.subr.mxu0 0.0
    %1421 = vmatpush1.msra.mxu0 0.0
    %1422 = vmatprep.subr.mxu0 0.0
    %1423 = vmatpush1.msra.mxu0 0.0
    %1424 = vmatprep.subr.mxu0 0.0
    %1425 = vmatpush1.msra.mxu0 0.0
    %1426 = vmatprep.subr.mxu0 0.0
    %1427 = vmatpush1.msra.mxu0 0.0
    %1428 = vmatprep.subr.mxu0 0.0
    %1429 = vmatpush1.msra.mxu0 0.0
    %1430 = vmatprep.subr.mxu0 0.0
    %1431 = vmatpush1.msra.mxu0 0.0
    %1432 = vmatprep.subr.mxu0 0.0
    %1433 = vmatpush1.msra.mxu0 0.0
    %1434 = vmatprep.subr.mxu0 0.0
    %1435 = vmatpush1.msra.mxu0 0.0
    %1436 = vmatprep.subr.mxu0 0.0
    %1437 = vmatpush1.msra.mxu0 0.0
    %1438 = vmatprep.subr.mxu0 0.0
    %1439 = vmatpush1.msra.mxu0 0.0
    %1440 = vmatprep.subr.mxu0 0.0
    %1441 = vmatpush1.msra.mxu0 0.0
    %1442 = vmatprep.subr.mxu0 0.0
    %1443 = vmatpush1.msra.mxu0 0.0
    %1444 = vmatprep.subr.mxu0 0.0
    %1445 = vmatpush1.msra.mxu0 0.0
    %1446 = vmatprep.subr.mxu0 0.0
    %1447 = vmatpush1.msra.mxu0 0.0
    %1448 = vmatprep.subr.mxu0 0.0
    %1449 = vmatpush1.msra.mxu0 0.0
    %1450 = vmatprep.subr.mxu0 0.0
    %1451 = vmatpush1.msra.mxu0 0.0
    %1452 = vmatprep.subr.mxu0 0.0
    %1453 = vmatpush1.msra.mxu0 0.0
    %1454 = vmatprep.subr.mxu0 0.0
    %1455 = vmatpush1.msra.mxu0 0.0
    %1456 = vmatprep.subr.mxu0 0.0
    %1457 = vmatpush1.msra.mxu0 0.0
    %1458 = vmatprep.subr.mxu0 0.0
    %1459 = vmatpush1.msra.mxu0 0.0
    %1460 = vmatprep.subr.mxu0 0.0
    %1461 = vmatpush1.msra.mxu0 0.0
    %1462 = vmatprep.subr.mxu0 0.0
    %1463 = vmatpush1.msra.mxu0 0.0
    %1464 = vmatprep.subr.mxu0 0.0
    %1465 = vmatpush1.msra.mxu0 0.0
    %1466 = vmatprep.mubr.f32.mxu0 0.0
    %1467 = vmatmul.mubr.f32.gmra.mrb[0].mxu0 %v1400
    %v1468 = vpop.f32.mrb[0].mxu0
    %v1469 = vadd.f32 0.0, %v1468
    %v1470 = vpop.f32.mrb[0].mxu0
    %1471 = vdwg.mxu0
    %1472 = vrot.lane.b32.xlu0 %v290, 104
    %v1473 = vpop.permute.xlu0 %1472
    %1474 = vrot.lane.b32.xlu0 %v290, 72
    %v1475 = vpop.permute.xlu0 %1474
    %v1476 = vsel %vm300, %v1473, 0
    %v1478 = vsel %vm300, %v1475, 0
    %1480 = vmatprep.subr.mxu0 0.0
    %1481 = vmatpush1.xpose.msra.mxu0 %v1478
    %1482 = vmatprep.subr.mxu0 0.0
    %1483 = vmatpush1.xpose.msra.mxu0 0.0
    %1484 = vmatprep.subr.mxu0 0.0
    %1485 = vmatpush1.xpose.msra.mxu0 0.0
    %1486 = vmatprep.subr.mxu0 0.0
    %1487 = vmatpush1.xpose.msra.mxu0 0.0
    %1488 = vmatprep.subr.mxu0 0.0
    %1489 = vmatpush1.xpose.msra.mxu0 0.0
    %1490 = vmatprep.subr.mxu0 0.0
    %1491 = vmatpush1.xpose.msra.mxu0 0.0
    %1492 = vmatprep.subr.mxu0 0.0
    %1493 = vmatpush1.xpose.msra.mxu0 0.0
    %1494 = vmatprep.subr.mxu0 0.0
    %1495 = vmatpush1.xpose.msra.mxu0 0.0
    %1496 = vmatprep.subr.mxu0 0.0
    %1497 = vmatpush1.xpose.msra.mxu0 0.0
    %1498 = vmatprep.subr.mxu0 0.0
    %1499 = vmatpush1.xpose.msra.mxu0 0.0
    %1500 = vmatprep.subr.mxu0 0.0
    %1501 = vmatpush1.xpose.msra.mxu0 0.0
    %1502 = vmatprep.subr.mxu0 0.0
    %1503 = vmatpush1.xpose.msra.mxu0 0.0
    %1504 = vmatprep.subr.mxu0 0.0
    %1505 = vmatpush1.xpose.msra.mxu0 0.0
    %1506 = vmatprep.subr.mxu0 0.0
    %1507 = vmatpush1.xpose.msra.mxu0 0.0
    %1508 = vmatprep.subr.mxu0 0.0
    %1509 = vmatpush1.xpose.msra.mxu0 0.0
    %1510 = vmatprep.subr.mxu0 0.0
    %1511 = vmatpush1.xpose.msra.mxu0 0.0
    %1512 = vmatprep.subr.mxu0 0.0
    %1513 = vmatpush1.xpose.msra.mxu0 0.0
    %1514 = vmatprep.subr.mxu0 0.0
    %1515 = vmatpush1.xpose.msra.mxu0 0.0
    %1516 = vmatprep.subr.mxu0 0.0
    %1517 = vmatpush1.xpose.msra.mxu0 0.0
    %1518 = vmatprep.subr.mxu0 0.0
    %1519 = vmatpush1.xpose.msra.mxu0 0.0
    %1520 = vmatprep.subr.mxu0 0.0
    %1521 = vmatpush1.xpose.msra.mxu0 0.0
    %1522 = vmatprep.subr.mxu0 0.0
    %1523 = vmatpush1.xpose.msra.mxu0 0.0
    %1524 = vmatprep.subr.mxu0 0.0
    %1525 = vmatpush1.xpose.msra.mxu0 0.0
    %1526 = vmatprep.subr.mxu0 0.0
    %1527 = vmatpush1.xpose.msra.mxu0 0.0
    %1528 = vmatprep.subr.mxu0 0.0
    %1529 = vmatpush1.xpose.msra.mxu0 0.0
    %1530 = vmatprep.subr.mxu0 0.0
    %1531 = vmatpush1.xpose.msra.mxu0 0.0
    %1532 = vmatprep.subr.mxu0 0.0
    %1533 = vmatpush1.xpose.msra.mxu0 0.0
    %1534 = vmatprep.subr.mxu0 0.0
    %1535 = vmatpush1.xpose.msra.mxu0 0.0
    %1536 = vmatprep.subr.mxu0 0.0
    %1537 = vmatpush1.xpose.msra.mxu0 0.0
    %1538 = vmatprep.subr.mxu0 0.0
    %1539 = vmatpush1.xpose.msra.mxu0 0.0
    %1540 = vmatprep.subr.mxu0 0.0
    %1541 = vmatpush1.xpose.msra.mxu0 0.0
    %1542 = vmatprep.subr.mxu0 0.0
    %1543 = vmatpush1.xpose.msra.mxu0 0.0
    %1544 = vmatprep.mubr.f32.mxu0 0.0
    %1545 = vmatmul.mubr.f32.gmra.mrb[0].mxu0 %v1476
    %v1546 = vpop.f32.mrb[0].mxu0
    %v1547 = vadd.f32 %v977, %v1546
    %v1548 = vpop.f32.mrb[0].mxu0
    %1549 = vdwg.mxu0
    %v1550 = vsel %vm300, %v1547, -inf
    %1551 = vmax.xlane.f32.xlu0 %v1550
    %v1552 = vpop.xlane.xlu0 %1551
    %v1553 = vsub.f32 %v1547, %v1552
    %v1554 = vmul.f32 %v1553, 1.442695
    %v1555 = vpow.pop %v1554
    %v1556 = vsel %vm300, %v1555, 0.0
    %1557 = vadd.xlane.f32.xlu0 %v1556
    %v1558 = vpop.xlane.xlu0 %1557
    %v1559 = vrcp.pop %v1558
    %v1560 = vmul.f32 %v1555, %v1559
    %1561 = vrot.lane.b32.xlu0 %v290, 40
    %v1562 = vpop.permute.xlu0 %1561
    %v1565 = vsel %vm300, %v1560, 0
    %1567 = vmatprep.subr.mxu0 0.0
    %1568 = vmatpush1.msra.mxu0 %v1562
    %1569 = vmatprep.subr.mxu0 0.0
    %1570 = vmatpush1.msra.mxu0 0.0
    %1571 = vmatprep.subr.mxu0 0.0
    %1572 = vmatpush1.msra.mxu0 0.0
    %1573 = vmatprep.subr.mxu0 0.0
    %1574 = vmatpush1.msra.mxu0 0.0
    %1575 = vmatprep.subr.mxu0 0.0
    %1576 = vmatpush1.msra.mxu0 0.0
    %1577 = vmatprep.subr.mxu0 0.0
    %1578 = vmatpush1.msra.mxu0 0.0
    %1579 = vmatprep.subr.mxu0 0.0
    %1580 = vmatpush1.msra.mxu0 0.0
    %1581 = vmatprep.subr.mxu0 0.0
    %1582 = vmatpush1.msra.mxu0 0.0
    %1583 = vmatprep.subr.mxu0 0.0
    %1584 = vmatpush1.msra.mxu0 0.0
    %1585 = vmatprep.subr.mxu0 0.0
    %1586 = vmatpush1.msra.mxu0 0.0
    %1587 = vmatprep.subr.mxu0 0.0
    %1588 = vmatpush1.msra.mxu0 0.0
    %1589 = vmatprep.subr.mxu0 0.0
    %1590 = vmatpush1.msra.mxu0 0.0
    %1591 = vmatprep.subr.mxu0 0.0
    %1592 = vmatpush1.msra.mxu0 0.0
    %1593 = vmatprep.subr.mxu0 0.0
    %1594 = vmatpush1.msra.mxu0 0.0
    %1595 = vmatprep.subr.mxu0 0.0
    %1596 = vmatpush1.msra.mxu0 0.0
    %1597 = vmatprep.subr.mxu0 0.0
    %1598 = vmatpush1.msra.mxu0 0.0
    %1599 = vmatprep.subr.mxu0 0.0
    %1600 = vmatpush1.msra.mxu0 0.0
    %1601 = vmatprep.subr.mxu0 0.0
    %1602 = vmatpush1.msra.mxu0 0.0
    %1603 = vmatprep.subr.mxu0 0.0
    %1604 = vmatpush1.msra.mxu0 0.0
    %1605 = vmatprep.subr.mxu0 0.0
    %1606 = vmatpush1.msra.mxu0 0.0
    %1607 = vmatprep.subr.mxu0 0.0
    %1608 = vmatpush1.msra.mxu0 0.0
    %1609 = vmatprep.subr.mxu0 0.0
    %1610 = vmatpush1.msra.mxu0 0.0
    %1611 = vmatprep.subr.mxu0 0.0
    %1612 = vmatpush1.msra.mxu0 0.0
    %1613 = vmatprep.subr.mxu0 0.0
    %1614 = vmatpush1.msra.mxu0 0.0
    %1615 = vmatprep.subr.mxu0 0.0
    %1616 = vmatpush1.msra.mxu0 0.0
    %1617 = vmatprep.subr.mxu0 0.0
    %1618 = vmatpush1.msra.mxu0 0.0
    %1619 = vmatprep.subr.mxu0 0.0
    %1620 = vmatpush1.msra.mxu0 0.0
    %1621 = vmatprep.subr.mxu0 0.0
    %1622 = vmatpush1.msra.mxu0 0.0
    %1623 = vmatprep.subr.mxu0 0.0
    %1624 = vmatpush1.msra.mxu0 0.0
    %1625 = vmatprep.subr.mxu0 0.0
    %1626 = vmatpush1.msra.mxu0 0.0
    %1627 = vmatprep.subr.mxu0 0.0
    %1628 = vmatpush1.msra.mxu0 0.0
    %1629 = vmatprep.subr.mxu0 0.0
    %1630 = vmatpush1.msra.mxu0 0.0
    %1631 = vmatprep.mubr.f32.mxu0 0.0
    %1632 = vmatmul.mubr.f32.gmra.mrb[0].mxu0 %v1565
    %v1633 = vpop.f32.mrb[0].mxu0
    %v1634 = vadd.f32 0.0, %v1633
    %v1635 = vpop.f32.mrb[0].mxu0
    %1636 = vdwg.mxu0
    %1638 = vrot.lane.b32.xlu0 %v1304, 8
    %v1639 = vpop.permute.xlu0 %1638
    %1642 = vrot.lane.b32.xlu0 %v1469, 16
    %v1643 = vpop.permute.xlu0 %1642
    %1646 = vrot.lane.b32.xlu0 %v1634, 24
    %v1647 = vpop.permute.xlu0 %1646
    %v1649 = vsel %vm300, %v1139, %v1639
    %v1650 = vsel %vm970, %v1649, %v1643
    %v1651 = vsel %vm972, %v1650, %v1647
    %v1652 = vld [vmem:[#allocation6 + $0x20] sm:$0xff]
    %v1653 = vld [vmem:[#allocation6 + $0x28] sm:$0xff]
    %v1654 = vld [vmem:[#allocation6 + $0x30] sm:$0xff]
    %v1655 = vld [vmem:[#allocation6 + $0x38] sm:$0xff]
    %v1656 = vld [vmem:[%s4 + $0x3] sm:$0x1]
    %v1657 = vlaneseq
    %v1658 = vshrl.u32 %v1657, 7
    %v1659 = vsub.s32 0, %v1658
    %v1660 = vrot.slane %v1656, %v1659
    %v1662 = vsel %vm156, %v973, 0
    %v1665 = vsel %vm156, %v1651, 0
    %1667 = vmatprep.subr.mxu0 0.0
    %1668 = vmatpush1.msra.mxu0 %v1652
    %1669 = vmatprep.subr.mxu0 0.0
    %1670 = vmatpush1.msra.mxu0 %v1653
    %1671 = vmatprep.subr.mxu0 0.0
    %1672 = vmatpush1.msra.mxu0 %v1654
    %1673 = vmatprep.subr.mxu0 0.0
    %1674 = vmatpush1.msra.mxu0 %v1655
    %1675 = vmatprep.subr.mxu0 0.0
    %1676 = vmatpush1.msra.mxu0 0.0
    %1677 = vmatprep.subr.mxu0 0.0
    %1678 = vmatpush1.msra.mxu0 0.0
    %1679 = vmatprep.subr.mxu0 0.0
    %1680 = vmatpush1.msra.mxu0 0.0
    %1681 = vmatprep.subr.mxu0 0.0
    %1682 = vmatpush1.msra.mxu0 0.0
    %1683 = vmatprep.subr.mxu0 0.0
    %1684 = vmatpush1.msra.mxu0 0.0
    %1685 = vmatprep.subr.mxu0 0.0
    %1686 = vmatpush1.msra.mxu0 0.0
    %1687 = vmatprep.subr.mxu0 0.0
    %1688 = vmatpush1.msra.mxu0 0.0
    %1689 = vmatprep.subr.mxu0 0.0
    %1690 = vmatpush1.msra.mxu0 0.0
    %1691 = vmatprep.subr.mxu0 0.0
    %1692 = vmatpush1.msra.mxu0 0.0
    %1693 = vmatprep.subr.mxu0 0.0
    %1694 = vmatpush1.msra.mxu0 0.0
    %1695 = vmatprep.subr.mxu0 0.0
    %1696 = vmatpush1.msra.mxu0 0.0
    %1697 = vmatprep.subr.mxu0 0.0
    %1698 = vmatpush1.msra.mxu0 0.0
    %1699 = vmatprep.subr.mxu0 0.0
    %1700 = vmatpush1.msra.mxu0 0.0
    %1701 = vmatprep.subr.mxu0 0.0
    %1702 = vmatpush1.msra.mxu0 0.0
    %1703 = vmatprep.subr.mxu0 0.0
    %1704 = vmatpush1.msra.mxu0 0.0
    %1705 = vmatprep.subr.mxu0 0.0
    %1706 = vmatpush1.msra.mxu0 0.0
    %1707 = vmatprep.subr.mxu0 0.0
    %1708 = vmatpush1.msra.mxu0 0.0
    %1709 = vmatprep.subr.mxu0 0.0
    %1710 = vmatpush1.msra.mxu0 0.0
    %1711 = vmatprep.subr.mxu0 0.0
    %1712 = vmatpush1.msra.mxu0 0.0
    %1713 = vmatprep.subr.mxu0 0.0
    %1714 = vmatpush1.msra.mxu0 0.0
    %1715 = vmatprep.subr.mxu0 0.0
    %1716 = vmatpush1.msra.mxu0 0.0
    %1717 = vmatprep.subr.mxu0 0.0
    %1718 = vmatpush1.msra.mxu0 0.0
    %1719 = vmatprep.subr.mxu0 0.0
    %1720 = vmatpush1.msra.mxu0 0.0
    %1721 = vmatprep.subr.mxu0 0.0
    %1722 = vmatpush1.msra.mxu0 0.0
    %1723 = vmatprep.subr.mxu0 0.0
    %1724 = vmatpush1.msra.mxu0 0.0
    %1725 = vmatprep.subr.mxu0 0.0
    %1726 = vmatpush1.msra.mxu0 0.0
    %1727 = vmatprep.subr.mxu0 0.0
    %1728 = vmatpush1.msra.mxu0 0.0
    %1729 = vmatprep.subr.mxu0 0.0
    %1730 = vmatpush1.msra.mxu0 0.0
    %1731 = vmatprep.mubr.f32.mxu0 0.0
    %1732 = vmatmul.mubr.f32.gmra.mrb[0].mxu0 %v1662
    %v1733 = vpop.f32.mrb[0].mxu0
    %v1734 = vadd.f32 %v1660, %v1733
    %v1735 = vpop.f32.mrb[0].mxu0
    %1736 = vmatprep.mubr.f32.mxu0 0.0
    %1737 = vmatmul.mubr.f32.gmra.mrb[0].mxu0 %v1665
    %v1738 = vpop.f32.mrb[0].mxu0
    %v1739 = vadd.f32 %v1660, %v1738
    %v1740 = vpop.f32.mrb[0].mxu0
    %1741 = vdwg.mxu0
    %v1742 = vadd.f32 %v198, %v1734
    %v1743 = vadd.f32 %v199, %v1739
    %v1744 = vld [vmem:[%s4 + $0x4] sm:$0x1]
    %v1745 = vld [vmem:[%s4 + $0x5] sm:$0x1]
    %v1746 = vsel %vm156, %v1742, 0.0
    %1747 = vadd.xlane.f32.xlu0 %v1746
    %v1748 = vpop.xlane.xlu0 %1747
    %v1749 = vsel %vm156, %v1743, 0.0
    %1750 = vadd.xlane.f32.xlu0 %v1749
    %v1751 = vpop.xlane.xlu0 %1750
    %v1752 = vmul.f32 %v1748, %v163
    %v1753 = vmul.f32 %v1751, %v163
    %v1754 = vmul.f32 %v1742, %v1742
    %v1755 = vmul.f32 %v1743, %v1743
    %v1756 = vsel %vm156, %v1754, 0.0
    %1757 = vadd.xlane.f32.xlu0 %v1756
    %v1758 = vpop.xlane.xlu0 %1757
    %v1759 = vsel %vm156, %v1755, 0.0
    %1760 = vadd.xlane.f32.xlu0 %v1759
    %v1761 = vpop.xlane.xlu0 %1760
    %v1762 = vmul.f32 %v1758, %v163
    %v1763 = vmul.f32 %v1761, %v163
    %v1764 = vsub.f32 %v1742, %v1752
    %v1765 = vsub.f32 %v1743, %v1753
    %v1766 = vmul.f32 %v1752, %v1752
    %v1767 = vmul.f32 %v1753, %v1753
    %v1768 = vsub.f32 %v1762, %v1766
    %v1769 = vsub.f32 %v1763, %v1767
    %v1770 = vadd.f32 %v1768, 1e-12
    %v1771 = vadd.f32 %v1769, 1e-12
    %v1772 = vrsqrt.pop %v1770
    %v1773 = vrsqrt.pop %v1771
    %v1774 = vmul.f32 %v1764, %v1772
    %v1775 = vmul.f32 %v1765, %v1773
    %v1776 = vlaneseq
    %v1777 = vshrl.u32 %v1776, 7
    %v1778 = vsub.s32 0, %v1777
    %v1779 = vrot.slane %v1744, %v1778
    %v1780 = vmul.f32 %v1774, %v1779
    %v1781 = vmul.f32 %v1775, %v1779
    %v1782 = vlaneseq
    %v1783 = vshrl.u32 %v1782, 7
    %v1784 = vsub.s32 0, %v1783
    %v1785 = vrot.slane %v1745, %v1784
    %v1786 = vadd.f32 %v1780, %v1785
    %v1787 = vadd.f32 %v1781, %v1785
    %v1788 = vld [vmem:[#allocation6 + $0x40] sm:$0xff]
    %v1789 = vld [vmem:[#allocation6 + $0x48] sm:$0xff]
    %v1790 = vld [vmem:[#allocation6 + $0x50] sm:$0xff]
    %v1791 = vld [vmem:[#allocation6 + $0x58] sm:$0xff]
    %v1792 = vld [vmem:[%s4 + $0x6] sm:$0x1]
    %v1793 = vlaneseq
    %v1794 = vshrl.u32 %v1793, 7
    %v1795 = vsub.s32 0, %v1794
    %v1796 = vrot.slane %v1792, %v1795
    %v1798 = vsel %vm156, %v1786, 0
    %v1801 = vsel %vm156, %v1787, 0
    %1803 = vmatprep.subr.mxu0 0.0
    %1804 = vmatpush1.msra.mxu0 %v1788
    %1805 = vmatprep.subr.mxu0 0.0
    %1806 = vmatpush1.msra.mxu0 %v1789
    %1807 = vmatprep.subr.mxu0 0.0
    %1808 = vmatpush1.msra.mxu0 %v1790
    %1809 = vmatprep.subr.mxu0 0.0
    %1810 = vmatpush1.msra.mxu0 %v1791
    %1811 = vmatprep.subr.mxu0 0.0
    %1812 = vmatpush1.msra.mxu0 0.0
    %1813 = vmatprep.subr.mxu0 0.0
    %1814 = vmatpush1.msra.mxu0 0.0
    %1815 = vmatprep.subr.mxu0 0.0
    %1816 = vmatpush1.msra.mxu0 0.0
    %1817 = vmatprep.subr.mxu0 0.0
    %1818 = vmatpush1.msra.mxu0 0.0
    %1819 = vmatprep.subr.mxu0 0.0
    %1820 = vmatpush1.msra.mxu0 0.0
    %1821 = vmatprep.subr.mxu0 0.0
    %1822 = vmatpush1.msra.mxu0 0.0
    %1823 = vmatprep.subr.mxu0 0.0
    %1824 = vmatpush1.msra.mxu0 0.0
    %1825 = vmatprep.subr.mxu0 0.0
    %1826 = vmatpush1.msra.mxu0 0.0
    %1827 = vmatprep.subr.mxu0 0.0
    %1828 = vmatpush1.msra.mxu0 0.0
    %1829 = vmatprep.subr.mxu0 0.0
    %1830 = vmatpush1.msra.mxu0 0.0
    %1831 = vmatprep.subr.mxu0 0.0
    %1832 = vmatpush1.msra.mxu0 0.0
    %1833 = vmatprep.subr.mxu0 0.0
    %1834 = vmatpush1.msra.mxu0 0.0
    %1835 = vmatprep.subr.mxu0 0.0
    %1836 = vmatpush1.msra.mxu0 0.0
    %1837 = vmatprep.subr.mxu0 0.0
    %1838 = vmatpush1.msra.mxu0 0.0
    %1839 = vmatprep.subr.mxu0 0.0
    %1840 = vmatpush1.msra.mxu0 0.0
    %1841 = vmatprep.subr.mxu0 0.0
    %1842 = vmatpush1.msra.mxu0 0.0
    %1843 = vmatprep.subr.mxu0 0.0
    %1844 = vmatpush1.msra.mxu0 0.0
    %1845 = vmatprep.subr.mxu0 0.0
    %1846 = vmatpush1.msra.mxu0 0.0
    %1847 = vmatprep.subr.mxu0 0.0
    %1848 = vmatpush1.msra.mxu0 0.0
    %1849 = vmatprep.subr.mxu0 0.0
    %1850 = vmatpush1.msra.mxu0 0.0
    %1851 = vmatprep.subr.mxu0 0.0
    %1852 = vmatpush1.msra.mxu0 0.0
    %1853 = vmatprep.subr.mxu0 0.0
    %1854 = vmatpush1.msra.mxu0 0.0
    %1855 = vmatprep.subr.mxu0 0.0
    %1856 = vmatpush1.msra.mxu0 0.0
    %1857 = vmatprep.subr.mxu0 0.0
    %1858 = vmatpush1.msra.mxu0 0.0
    %1859 = vmatprep.subr.mxu0 0.0
    %1860 = vmatpush1.msra.mxu0 0.0
    %1861 = vmatprep.subr.mxu0 0.0
    %1862 = vmatpush1.msra.mxu0 0.0
    %1863 = vmatprep.subr.mxu0 0.0
    %1864 = vmatpush1.msra.mxu0 0.0
    %1865 = vmatprep.subr.mxu0 0.0
    %1866 = vmatpush1.msra.mxu0 0.0
    %1867 = vmatprep.mubr.f32.mxu0 0.0
    %1868 = vmatmul.mubr.f32.gmra.mrb[0].mxu0 %v1798
    %v1869 = vpop.f32.mrb[0].mxu0
    %v1870 = vadd.f32 %v1796, %v1869
    %v1871 = vpop.f32.mrb[0].mxu0
    %1872 = vmatprep.mubr.f32.mxu0 0.0
    %1873 = vmatmul.mubr.f32.gmra.mrb[0].mxu0 %v1801
    %v1874 = vpop.f32.mrb[0].mxu0
    %v1875 = vadd.f32 %v1796, %v1874
    %v1876 = vpop.f32.mrb[0].mxu0
    %1877 = vdwg.mxu0
    %v1878 = vmul.f32 %v1870, %v1870
    %v1879 = vmul.f32 %v1875, %v1875
    %v1880 = vmul.f32 %v1870, %v1878
    %v1881 = vmul.f32 %v1875, %v1879
    %v1882 = vmul.f32 %v1880, 0.044715
    %v1883 = vmul.f32 %v1881, 0.044715
    %v1884 = vadd.f32 %v1870, %v1882
    %v1885 = vadd.f32 %v1875, %v1883
    %v1886 = vmul.f32 %v1884, 0.7978846
    %v1887 = vmul.f32 %v1885, 0.7978846
    %v1888 = vtanh.pop %v1886
    %v1889 = vtanh.pop %v1887
    %v1890 = vadd.f32 %v1888, 1.0
    %v1891 = vadd.f32 %v1889, 1.0
    %v1892 = vmul.f32 %v1890, 0.5
    %v1893 = vmul.f32 %v1891, 0.5
    %v1894 = vmul.f32 %v1870, %v1892
    %v1895 = vmul.f32 %v1875, %v1893
    %v1896 = vld [vmem:[#allocation6 + $0x60] sm:$0xff]
    %v1897 = vld [vmem:[#allocation6 + $0x68] sm:$0xff]
    %v1898 = vld [vmem:[#allocation6 + $0x70] sm:$0xff]
    %v1899 = vld [vmem:[#allocation6 + $0x78] sm:$0xff]
    %v1900 = vld [vmem:[#allocation6 + $0x80] sm:$0xff]
    %v1901 = vld [vmem:[#allocation6 + $0x88] sm:$0xff]
    %v1902 = vld [vmem:[#allocation6 + $0x90] sm:$0xff]
    %v1903 = vld [vmem:[#allocation6 + $0x98] sm:$0xff]
    %v1904 = vld [vmem:[%s4 + $0x7] sm:$0x1]
    %v1905 = vlaneseq
    %v1906 = vshrl.u32 %v1905, 7
    %v1907 = vsub.s32 0, %v1906
    %v1908 = vrot.slane %v1904, %v1907
    %vm1909 = vcmask 523264
    %v1911 = vsel %vm1909, %v1894, 0
    %v1914 = vsel %vm1909, %v1895, 0
    %1916 = vmatprep.subr.mxu0 0.0
    %1917 = vmatpush1.msra.mxu0 %v1896
    %1918 = vmatprep.subr.mxu0 0.0
    %1919 = vmatpush1.msra.mxu0 %v1897
    %1920 = vmatprep.subr.mxu0 0.0
    %1921 = vmatpush1.msra.mxu0 %v1898
    %1922 = vmatprep.subr.mxu0 0.0
    %1923 = vmatpush1.msra.mxu0 %v1899
    %1924 = vmatprep.subr.mxu0 0.0
    %1925 = vmatpush1.msra.mxu0 %v1900
    %1926 = vmatprep.subr.mxu0 0.0
    %1927 = vmatpush1.msra.mxu0 %v1901
    %1928 = vmatprep.subr.mxu0 0.0
    %1929 = vmatpush1.msra.mxu0 %v1902
    %1930 = vmatprep.subr.mxu0 0.0
    %1931 = vmatpush1.msra.mxu0 %v1903
    %1932 = vmatprep.subr.mxu0 0.0
    %1933 = vmatpush1.msra.mxu0 0.0
    %1934 = vmatprep.subr.mxu0 0.0
    %1935 = vmatpush1.msra.mxu0 0.0
    %1936 = vmatprep.subr.mxu0 0.0
    %1937 = vmatpush1.msra.mxu0 0.0
    %1938 = vmatprep.subr.mxu0 0.0
    %1939 = vmatpush1.msra.mxu0 0.0
    %1940 = vmatprep.subr.mxu0 0.0
    %1941 = vmatpush1.msra.mxu0 0.0
    %1942 = vmatprep.subr.mxu0 0.0
    %1943 = vmatpush1.msra.mxu0 0.0
    %1944 = vmatprep.subr.mxu0 0.0
    %1945 = vmatpush1.msra.mxu0 0.0
    %1946 = vmatprep.subr.mxu0 0.0
    %1947 = vmatpush1.msra.mxu0 0.0
    %1948 = vmatprep.subr.mxu0 0.0
    %1949 = vmatpush1.msra.mxu0 0.0
    %1950 = vmatprep.subr.mxu0 0.0
    %1951 = vmatpush1.msra.mxu0 0.0
    %1952 = vmatprep.subr.mxu0 0.0
    %1953 = vmatpush1.msra.mxu0 0.0
    %1954 = vmatprep.subr.mxu0 0.0
    %1955 = vmatpush1.msra.mxu0 0.0
    %1956 = vmatprep.subr.mxu0 0.0
    %1957 = vmatpush1.msra.mxu0 0.0
    %1958 = vmatprep.subr.mxu0 0.0
    %1959 = vmatpush1.msra.mxu0 0.0
    %1960 = vmatprep.subr.mxu0 0.0
    %1961 = vmatpush1.msra.mxu0 0.0
    %1962 = vmatprep.subr.mxu0 0.0
    %1963 = vmatpush1.msra.mxu0 0.0
    %1964 = vmatprep.subr.mxu0 0.0
    %1965 = vmatpush1.msra.mxu0 0.0
    %1966 = vmatprep.subr.mxu0 0.0
    %1967 = vmatpush1.msra.mxu0 0.0
    %1968 = vmatprep.subr.mxu0 0.0
    %1969 = vmatpush1.msra.mxu0 0.0
    %1970 = vmatprep.subr.mxu0 0.0
    %1971 = vmatpush1.msra.mxu0 0.0
    %1972 = vmatprep.subr.mxu0 0.0
    %1973 = vmatpush1.msra.mxu0 0.0
    %1974 = vmatprep.subr.mxu0 0.0
    %1975 = vmatpush1.msra.mxu0 0.0
    %1976 = vmatprep.subr.mxu0 0.0
    %1977 = vmatpush1.msra.mxu0 0.0
    %1978 = vmatprep.subr.mxu0 0.0
    %1979 = vmatpush1.msra.mxu0 0.0
    %1980 = vmatprep.mubr.f32.mxu0 0.0
    %1981 = vmatmul.mubr.f32.gmra.mrb[0].mxu0 %v1911
    %v1982 = vpop.f32.mrb[0].mxu0
    %v1983 = vadd.f32 %v1908, %v1982
    %v1984 = vpop.f32.mrb[0].mxu0
    %1985 = vmatprep.mubr.f32.mxu0 0.0
    %1986 = vmatmul.mubr.f32.gmra.mrb[0].mxu0 %v1914
    %v1987 = vpop.f32.mrb[0].mxu0
    %v1988 = vadd.f32 %v1908, %v1987
    %v1989 = vpop.f32.mrb[0].mxu0
    %1990 = vdwg.mxu0
    %v1991 = vadd.f32 %v1786, %v1983
    %v1992 = vadd.f32 %v1787, %v1988
    %v1993 = vld [vmem:[%s4 + $0x8] sm:$0x1]
    %v1994 = vld [vmem:[%s4 + $0x9] sm:$0x1]
    %v1995 = vsel %vm156, %v1991, 0.0
    %1996 = vadd.xlane.f32.xlu0 %v1995
    %v1997 = vpop.xlane.xlu0 %1996
    %v1998 = vsel %vm156, %v1992, 0.0
    %1999 = vadd.xlane.f32.xlu0 %v1998
    %v2000 = vpop.xlane.xlu0 %1999
    %v2001 = vmul.f32 %v1997, %v163
    %v2002 = vmul.f32 %v2000, %v163
    %v2003 = vmul.f32 %v1991, %v1991
    %v2004 = vmul.f32 %v1992, %v1992
    %v2005 = vsel %vm156, %v2003, 0.0
    %2006 = vadd.xlane.f32.xlu0 %v2005
    %v2007 = vpop.xlane.xlu0 %2006
    %v2008 = vsel %vm156, %v2004, 0.0
    %2009 = vadd.xlane.f32.xlu0 %v2008
    %v2010 = vpop.xlane.xlu0 %2009
    %v2011 = vmul.f32 %v2007, %v163
    %v2012 = vmul.f32 %v2010, %v163
    %v2013 = vsub.f32 %v1991, %v2001
    %v2014 = vsub.f32 %v1992, %v2002
    %v2015 = vmul.f32 %v2001, %v2001
    %v2016 = vmul.f32 %v2002, %v2002
    %v2017 = vsub.f32 %v2011, %v2015
    %v2018 = vsub.f32 %v2012, %v2016
    %v2019 = vadd.f32 %v2017, 1e-12
    %v2020 = vadd.f32 %v2018, 1e-12
    %v2021 = vrsqrt.pop %v2019
    %v2022 = vrsqrt.pop %v2020
    %v2023 = vmul.f32 %v2013, %v2021
    %v2024 = vmul.f32 %v2014, %v2022
    %v2025 = vlaneseq
    %v2026 = vshrl.u32 %v2025, 7
    %v2027 = vsub.s32 0, %v2026
    %v2028 = vrot.slane %v1993, %v2027
    %v2029 = vmul.f32 %v2023, %v2028
    %v2030 = vmul.f32 %v2024, %v2028
    %v2031 = vlaneseq
    %v2032 = vshrl.u32 %v2031, 7
    %v2033 = vsub.s32 0, %v2032
    %v2034 = vrot.slane %v1994, %v2033
    %v2035 = vadd.f32 %v2029, %v2034
    %v2036 = vadd.f32 %v2030, %v2034
    %v2037 = vld [vmem:[#allocation6 + $0xa0] sm:$0xff]
    %v2038 = vld [vmem:[#allocation6 + $0xa8] sm:$0xff]
    %v2039 = vld [vmem:[#allocation6 + $0xb0] sm:$0xff]
    %v2040 = vld [vmem:[#allocation6 + $0xb8] sm:$0xff]
    %v2041 = vld [vmem:[%s4 + $0xa] sm:$0x1]
    %v2042 = vlaneseq
    %v2043 = vshrl.u32 %v2042, 7
    %v2044 = vsub.s32 0, %v2043
    %v2045 = vrot.slane %v2041, %v2044
    %v2047 = vsel %vm156, %v2035, 0
    %v2050 = vsel %vm156, %v2036, 0
    %2052 = vmatprep.subr.mxu0 0.0
    %2053 = vmatpush1.msra.mxu0 %v2037
    %2054 = vmatprep.subr.mxu0 0.0
    %2055 = vmatpush1.msra.mxu0 %v2038
    %2056 = vmatprep.subr.mxu0 0.0
    %2057 = vmatpush1.msra.mxu0 %v2039
    %2058 = vmatprep.subr.mxu0 0.0
    %2059 = vmatpush1.msra.mxu0 %v2040
    %2060 = vmatprep.subr.mxu0 0.0
    %2061 = vmatpush1.msra.mxu0 0.0
    %2062 = vmatprep.subr.mxu0 0.0
    %2063 = vmatpush1.msra.mxu0 0.0
    %2064 = vmatprep.subr.mxu0 0.0
    %2065 = vmatpush1.msra.mxu0 0.0
    %2066 = vmatprep.subr.mxu0 0.0
    %2067 = vmatpush1.msra.mxu0 0.0
    %2068 = vmatprep.subr.mxu0 0.0
    %2069 = vmatpush1.msra.mxu0 0.0
    %2070 = vmatprep.subr.mxu0 0.0
    %2071 = vmatpush1.msra.mxu0 0.0
    %2072 = vmatprep.subr.mxu0 0.0
    %2073 = vmatpush1.msra.mxu0 0.0
    %2074 = vmatprep.subr.mxu0 0.0
    %2075 = vmatpush1.msra.mxu0 0.0
    %2076 = vmatprep.subr.mxu0 0.0
    %2077 = vmatpush1.msra.mxu0 0.0
    %2078 = vmatprep.subr.mxu0 0.0
    %2079 = vmatpush1.msra.mxu0 0.0
    %2080 = vmatprep.subr.mxu0 0.0
    %2081 = vmatpush1.msra.mxu0 0.0
    %2082 = vmatprep.subr.mxu0 0.0
    %2083 = vmatpush1.msra.mxu0 0.0
    %2084 = vmatprep.subr.mxu0 0.0
    %2085 = vmatpush1.msra.mxu0 0.0
    %2086 = vmatprep.subr.mxu0 0.0
    %2087 = vmatpush1.msra.mxu0 0.0
    %2088 = vmatprep.subr.mxu0 0.0
    %2089 = vmatpush1.msra.mxu0 0.0
    %2090 = vmatprep.subr.mxu0 0.0
    %2091 = vmatpush1.msra.mxu0 0.0
    %2092 = vmatprep.subr.mxu0 0.0
    %2093 = vmatpush1.msra.mxu0 0.0
    %2094 = vmatprep.subr.mxu0 0.0
    %2095 = vmatpush1.msra.mxu0 0.0
    %2096 = vmatprep.subr.mxu0 0.0
    %2097 = vmatpush1.msra.mxu0 0.0
    %2098 = vmatprep.subr.mxu0 0.0
    %2099 = vmatpush1.msra.mxu0 0.0
    %2100 = vmatprep.subr.mxu0 0.0
    %2101 = vmatpush1.msra.mxu0 0.0
    %2102 = vmatprep.subr.mxu0 0.0
    %2103 = vmatpush1.msra.mxu0 0.0
    %2104 = vmatprep.subr.mxu0 0.0
    %2105 = vmatpush1.msra.mxu0 0.0
    %2106 = vmatprep.subr.mxu0 0.0
    %2107 = vmatpush1.msra.mxu0 0.0
    %2108 = vmatprep.subr.mxu0 0.0
    %2109 = vmatpush1.msra.mxu0 0.0
    %2110 = vmatprep.subr.mxu0 0.0
    %2111 = vmatpush1.msra.mxu0 0.0
    %2112 = vmatprep.subr.mxu0 0.0
    %2113 = vmatpush1.msra.mxu0 0.0
    %2114 = vmatprep.subr.mxu0 0.0
    %2115 = vmatpush1.msra.mxu0 0.0
    %2116 = vmatprep.mubr.f32.mxu0 0.0
    %2117 = vmatmul.mubr.f32.gmra.mrb[0].mxu0 %v2047
    %v2118 = vpop.f32.mrb[0].mxu0
    %v2119 = vadd.f32 %v2045, %v2118
    %v2120 = vpop.f32.mrb[0].mxu0
    %2121 = vmatprep.mubr.f32.mxu0 0.0
    %2122 = vmatmul.mubr.f32.gmra.mrb[0].mxu0 %v2050
    %v2123 = vpop.f32.mrb[0].mxu0
    %v2124 = vadd.f32 %v2045, %v2123
    %v2125 = vpop.f32.mrb[0].mxu0
    %2126 = vdwg.mxu0
    %2128 = vrot.lane.b32.xlu0 %v2119, 96
    %v2129 = vpop.permute.xlu0 %2128
    %v2130 = vsel %vm300, %v2119, 0
    %v2132 = vsel %vm300, %v2129, 0
    %2134 = vmatprep.subr.mxu0 0.0
    %2135 = vmatpush1.xpose.msra.mxu0 %v2132
    %2136 = vmatprep.subr.mxu0 0.0
    %2137 = vmatpush1.xpose.msra.mxu0 0.0
    %2138 = vmatprep.subr.mxu0 0.0
    %2139 = vmatpush1.xpose.msra.mxu0 0.0
    %2140 = vmatprep.subr.mxu0 0.0
    %2141 = vmatpush1.xpose.msra.mxu0 0.0
    %2142 = vmatprep.subr.mxu0 0.0
    %2143 = vmatpush1.xpose.msra.mxu0 0.0
    %2144 = vmatprep.subr.mxu0 0.0
    %2145 = vmatpush1.xpose.msra.mxu0 0.0
    %2146 = vmatprep.subr.mxu0 0.0
    %2147 = vmatpush1.xpose.msra.mxu0 0.0
    %2148 = vmatprep.subr.mxu0 0.0
    %2149 = vmatpush1.xpose.msra.mxu0 0.0
    %2150 = vmatprep.subr.mxu0 0.0
    %2151 = vmatpush1.xpose.msra.mxu0 0.0
    %2152 = vmatprep.subr.mxu0 0.0
    %2153 = vmatpush1.xpose.msra.mxu0 0.0
    %2154 = vmatprep.subr.mxu0 0.0
    %2155 = vmatpush1.xpose.msra.mxu0 0.0
    %2156 = vmatprep.subr.mxu0 0.0
    %2157 = vmatpush1.xpose.msra.mxu0 0.0
    %2158 = vmatprep.subr.mxu0 0.0
    %2159 = vmatpush1.xpose.msra.mxu0 0.0
    %2160 = vmatprep.subr.mxu0 0.0
    %2161 = vmatpush1.xpose.msra.mxu0 0.0
    %2162 = vmatprep.subr.mxu0 0.0
    %2163 = vmatpush1.xpose.msra.mxu0 0.0
    %2164 = vmatprep.subr.mxu0 0.0
    %2165 = vmatpush1.xpose.msra.mxu0 0.0
    %2166 = vmatprep.subr.mxu0 0.0
    %2167 = vmatpush1.xpose.msra.mxu0 0.0
    %2168 = vmatprep.subr.mxu0 0.0
    %2169 = vmatpush1.xpose.msra.mxu0 0.0
    %2170 = vmatprep.subr.mxu0 0.0
    %2171 = vmatpush1.xpose.msra.mxu0 0.0
    %2172 = vmatprep.subr.mxu0 0.0
    %2173 = vmatpush1.xpose.msra.mxu0 0.0
    %2174 = vmatprep.subr.mxu0 0.0
    %2175 = vmatpush1.xpose.msra.mxu0 0.0
    %2176 = vmatprep.subr.mxu0 0.0
    %2177 = vmatpush1.xpose.msra.mxu0 0.0
    %2178 = vmatprep.subr.mxu0 0.0
    %2179 = vmatpush1.xpose.msra.mxu0 0.0
    %2180 = vmatprep.subr.mxu0 0.0
    %2181 = vmatpush1.xpose.msra.mxu0 0.0
    %2182 = vmatprep.subr.mxu0 0.0
    %2183 = vmatpush1.xpose.msra.mxu0 0.0
    %2184 = vmatprep.subr.mxu0 0.0
    %2185 = vmatpush1.xpose.msra.mxu0 0.0
    %2186 = vmatprep.subr.mxu0 0.0
    %2187 = vmatpush1.xpose.msra.mxu0 0.0
    %2188 = vmatprep.subr.mxu0 0.0
    %2189 = vmatpush1.xpose.msra.mxu0 0.0
    %2190 = vmatprep.subr.mxu0 0.0
    %2191 = vmatpush1.xpose.msra.mxu0 0.0
    %2192 = vmatprep.subr.mxu0 0.0
    %2193 = vmatpush1.xpose.msra.mxu0 0.0
    %2194 = vmatprep.subr.mxu0 0.0
    %2195 = vmatpush1.xpose.msra.mxu0 0.0
    %2196 = vmatprep.subr.mxu0 0.0
    %2197 = vmatpush1.xpose.msra.mxu0 0.0
    %2198 = vmatprep.mubr.f32.mxu0 0.0
    %2199 = vmatmul.mubr.f32.gmra.mrb[0].mxu0 %v2130
    %v2200 = vpop.f32.mrb[0].mxu0
    %v2201 = vadd.f32 %v296, %v2200
    %v2202 = vpop.f32.mrb[0].mxu0
    %2203 = vdwg.mxu0
    %v2204 = vsel %vm300, %v2201, -inf
    %2205 = vmax.xlane.f32.xlu0 %v2204
    %v2206 = vpop.xlane.xlu0 %2205
    %v2207 = vsub.f32 %v2201, %v2206
    %v2208 = vmul.f32 %v2207, 1.442695
    %v2209 = vpow.pop %v2208
    %v2210 = vsel %vm300, %v2209, 0.0
    %2211 = vadd.xlane.f32.xlu0 %v2210
    %v2212 = vpop.xlane.xlu0 %2211
    %v2213 = vrcp.pop %v2212
    %v2214 = vmul.f32 %v2209, %v2213
    %2215 = vrot.lane.b32.xlu0 %v2119, 64
    %v2216 = vpop.permute.xlu0 %2215
    %v2219 = vsel %vm300, %v2214, 0
    %2221 = vmatprep.subr.mxu0 0.0
    %2222 = vmatpush1.msra.mxu0 %v2216
    %2223 = vmatprep.subr.mxu0 0.0
    %2224 = vmatpush1.msra.mxu0 0.0
    %2225 = vmatprep.subr.mxu0 0.0
    %2226 = vmatpush1.msra.mxu0 0.0
    %2227 = vmatprep.subr.mxu0 0.0
    %2228 = vmatpush1.msra.mxu0 0.0
    %2229 = vmatprep.subr.mxu0 0.0
    %2230 = vmatpush1.msra.mxu0 0.0
    %2231 = vmatprep.subr.mxu0 0.0
    %2232 = vmatpush1.msra.mxu0 0.0
    %2233 = vmatprep.subr.mxu0 0.0
    %2234 = vmatpush1.msra.mxu0 0.0
    %2235 = vmatprep.subr.mxu0 0.0
    %2236 = vmatpush1.msra.mxu0 0.0
    %2237 = vmatprep.subr.mxu0 0.0
    %2238 = vmatpush1.msra.mxu0 0.0
    %2239 = vmatprep.subr.mxu0 0.0
    %2240 = vmatpush1.msra.mxu0 0.0
    %2241 = vmatprep.subr.mxu0 0.0
    %2242 = vmatpush1.msra.mxu0 0.0
    %2243 = vmatprep.subr.mxu0 0.0
    %2244 = vmatpush1.msra.mxu0 0.0
    %2245 = vmatprep.subr.mxu0 0.0
    %2246 = vmatpush1.msra.mxu0 0.0
    %2247 = vmatprep.subr.mxu0 0.0
    %2248 = vmatpush1.msra.mxu0 0.0
    %2249 = vmatprep.subr.mxu0 0.0
    %2250 = vmatpush1.msra.mxu0 0.0
    %2251 = vmatprep.subr.mxu0 0.0
    %2252 = vmatpush1.msra.mxu0 0.0
    %2253 = vmatprep.subr.mxu0 0.0
    %2254 = vmatpush1.msra.mxu0 0.0
    %2255 = vmatprep.subr.mxu0 0.0
    %2256 = vmatpush1.msra.mxu0 0.0
    %2257 = vmatprep.subr.mxu0 0.0
    %2258 = vmatpush1.msra.mxu0 0.0
    %2259 = vmatprep.subr.mxu0 0.0
    %2260 = vmatpush1.msra.mxu0 0.0
    %2261 = vmatprep.subr.mxu0 0.0
    %2262 = vmatpush1.msra.mxu0 0.0
    %2263 = vmatprep.subr.mxu0 0.0
    %2264 = vmatpush1.msra.mxu0 0.0
    %2265 = vmatprep.subr.mxu0 0.0
    %2266 = vmatpush1.msra.mxu0 0.0
    %2267 = vmatprep.subr.mxu0 0.0
    %2268 = vmatpush1.msra.mxu0 0.0
    %2269 = vmatprep.subr.mxu0 0.0
    %2270 = vmatpush1.msra.mxu0 0.0
    %2271 = vmatprep.subr.mxu0 0.0
    %2272 = vmatpush1.msra.mxu0 0.0
    %2273 = vmatprep.subr.mxu0 0.0
    %2274 = vmatpush1.msra.mxu0 0.0
    %2275 = vmatprep.subr.mxu0 0.0
    %2276 = vmatpush1.msra.mxu0 0.0
    %2277 = vmatprep.subr.mxu0 0.0
    %2278 = vmatpush1.msra.mxu0 0.0
    %2279 = vmatprep.subr.mxu0 0.0
    %2280 = vmatpush1.msra.mxu0 0.0
    %2281 = vmatprep.subr.mxu0 0.0
    %2282 = vmatpush1.msra.mxu0 0.0
    %2283 = vmatprep.subr.mxu0 0.0
    %2284 = vmatpush1.msra.mxu0 0.0
    %2285 = vmatprep.mubr.f32.mxu0 0.0
    %2286 = vmatmul.mubr.f32.gmra.mrb[0].mxu0 %v2219
    %v2287 = vpop.f32.mrb[0].mxu0
    %v2288 = vadd.f32 0.0, %v2287
    %v2289 = vpop.f32.mrb[0].mxu0
    %2290 = vdwg.mxu0
    %2291 = vrot.lane.b32.xlu0 %v2119, 120
    %v2292 = vpop.permute.xlu0 %2291
    %2293 = vrot.lane.b32.xlu0 %v2119, 88
    %v2294 = vpop.permute.xlu0 %2293
    %v2295 = vsel %vm300, %v2292, 0
    %v2297 = vsel %vm300, %v2294, 0
    %2299 = vmatprep.subr.mxu0 0.0
    %2300 = vmatpush1.xpose.msra.mxu0 %v2297
    %2301 = vmatprep.subr.mxu0 0.0
    %2302 = vmatpush1.xpose.msra.mxu0 0.0
    %2303 = vmatprep.subr.mxu0 0.0
    %2304 = vmatpush1.xpose.msra.mxu0 0.0
    %2305 = vmatprep.subr.mxu0 0.0
    %2306 = vmatpush1.xpose.msra.mxu0 0.0
    %2307 = vmatprep.subr.mxu0 0.0
    %2308 = vmatpush1.xpose.msra.mxu0 0.0
    %2309 = vmatprep.subr.mxu0 0.0
    %2310 = vmatpush1.xpose.msra.mxu0 0.0
    %2311 = vmatprep.subr.mxu0 0.0
    %2312 = vmatpush1.xpose.msra.mxu0 0.0
    %2313 = vmatprep.subr.mxu0 0.0
    %2314 = vmatpush1.xpose.msra.mxu0 0.0
    %2315 = vmatprep.subr.mxu0 0.0
    %2316 = vmatpush1.xpose.msra.mxu0 0.0
    %2317 = vmatprep.subr.mxu0 0.0
    %2318 = vmatpush1.xpose.msra.mxu0 0.0
    %2319 = vmatprep.subr.mxu0 0.0
    %2320 = vmatpush1.xpose.msra.mxu0 0.0
    %2321 = vmatprep.subr.mxu0 0.0
    %2322 = vmatpush1.xpose.msra.mxu0 0.0
    %2323 = vmatprep.subr.mxu0 0.0
    %2324 = vmatpush1.xpose.msra.mxu0 0.0
    %2325 = vmatprep.subr.mxu0 0.0
    %2326 = vmatpush1.xpose.msra.mxu0 0.0
    %2327 = vmatprep.subr.mxu0 0.0
    %2328 = vmatpush1.xpose.msra.mxu0 0.0
    %2329 = vmatprep.subr.mxu0 0.0
    %2330 = vmatpush1.xpose.msra.mxu0 0.0
    %2331 = vmatprep.subr.mxu0 0.0
    %2332 = vmatpush1.xpose.msra.mxu0 0.0
    %2333 = vmatprep.subr.mxu0 0.0
    %2334 = vmatpush1.xpose.msra.mxu0 0.0
    %2335 = vmatprep.subr.mxu0 0.0
    %2336 = vmatpush1.xpose.msra.mxu0 0.0
    %2337 = vmatprep.subr.mxu0 0.0
    %2338 = vmatpush1.xpose.msra.mxu0 0.0
    %2339 = vmatprep.subr.mxu0 0.0
    %2340 = vmatpush1.xpose.msra.mxu0 0.0
    %2341 = vmatprep.subr.mxu0 0.0
    %2342 = vmatpush1.xpose.msra.mxu0 0.0
    %2343 = vmatprep.subr.mxu0 0.0
    %2344 = vmatpush1.xpose.msra.mxu0 0.0
    %2345 = vmatprep.subr.mxu0 0.0
    %2346 = vmatpush1.xpose.msra.mxu0 0.0
    %2347 = vmatprep.subr.mxu0 0.0
    %2348 = vmatpush1.xpose.msra.mxu0 0.0
    %2349 = vmatprep.subr.mxu0 0.0
    %2350 = vmatpush1.xpose.msra.mxu0 0.0
    %2351 = vmatprep.subr.mxu0 0.0
    %2352 = vmatpush1.xpose.msra.mxu0 0.0
    %2353 = vmatprep.subr.mxu0 0.0
    %2354 = vmatpush1.xpose.msra.mxu0 0.0
    %2355 = vmatprep.subr.mxu0 0.0
    %2356 = vmatpush1.xpose.msra.mxu0 0.0
    %2357 = vmatprep.subr.mxu0 0.0
    %2358 = vmatpush1.xpose.msra.mxu0 0.0
    %2359 = vmatprep.subr.mxu0 0.0
    %2360 = vmatpush1.xpose.msra.mxu0 0.0
    %2361 = vmatprep.subr.mxu0 0.0
    %2362 = vmatpush1.xpose.msra.mxu0 0.0
    %2363 = vmatprep.mubr.f32.mxu0 0.0
    %2364 = vmatmul.mubr.f32.gmra.mrb[0].mxu0 %v2295
    %v2365 = vpop.f32.mrb[0].mxu0
    %v2366 = vadd.f32 %v296, %v2365
    %v2367 = vpop.f32.mrb[0].mxu0
    %2368 = vdwg.mxu0
    %v2369 = vsel %vm300, %v2366, -inf
    %2370 = vmax.xlane.f32.xlu0 %v2369
    %v2371 = vpop.xlane.xlu0 %2370
    %v2372 = vsub.f32 %v2366, %v2371
    %v2373 = vmul.f32 %v2372, 1.442695
    %v2374 = vpow.pop %v2373
    %v2375 = vsel %vm300, %v2374, 0.0
    %2376 = vadd.xlane.f32.xlu0 %v2375
    %v2377 = vpop.xlane.xlu0 %2376
    %v2378 = vrcp.pop %v2377
    %v2379 = vmul.f32 %v2374, %v2378
    %2380 = vrot.lane.b32.xlu0 %v2119, 56
    %v2381 = vpop.permute.xlu0 %2380
    %v2384 = vsel %vm300, %v2379, 0
    %2386 = vmatprep.subr.mxu0 0.0
    %2387 = vmatpush1.msra.mxu0 %v2381
    %2388 = vmatprep.subr.mxu0 0.0
    %2389 = vmatpush1.msra.mxu0 0.0
    %2390 = vmatprep.subr.mxu0 0.0
    %2391 = vmatpush1.msra.mxu0 0.0
    %2392 = vmatprep.subr.mxu0 0.0
    %2393 = vmatpush1.msra.mxu0 0.0
    %2394 = vmatprep.subr.mxu0 0.0
    %2395 = vmatpush1.msra.mxu0 0.0
    %2396 = vmatprep.subr.mxu0 0.0
    %2397 = vmatpush1.msra.mxu0 0.0
    %2398 = vmatprep.subr.mxu0 0.0
    %2399 = vmatpush1.msra.mxu0 0.0
    %2400 = vmatprep.subr.mxu0 0.0
    %2401 = vmatpush1.msra.mxu0 0.0
    %2402 = vmatprep.subr.mxu0 0.0
    %2403 = vmatpush1.msra.mxu0 0.0
    %2404 = vmatprep.subr.mxu0 0.0
    %2405 = vmatpush1.msra.mxu0 0.0
    %2406 = vmatprep.subr.mxu0 0.0
    %2407 = vmatpush1.msra.mxu0 0.0
    %2408 = vmatprep.subr.mxu0 0.0
    %2409 = vmatpush1.msra.mxu0 0.0
    %2410 = vmatprep.subr.mxu0 0.0
    %2411 = vmatpush1.msra.mxu0 0.0
    %2412 = vmatprep.subr.mxu0 0.0
    %2413 = vmatpush1.msra.mxu0 0.0
    %2414 = vmatprep.subr.mxu0 0.0
    %2415 = vmatpush1.msra.mxu0 0.0
    %2416 = vmatprep.subr.mxu0 0.0
    %2417 = vmatpush1.msra.mxu0 0.0
    %2418 = vmatprep.subr.mxu0 0.0
    %2419 = vmatpush1.msra.mxu0 0.0
    %2420 = vmatprep.subr.mxu0 0.0
    %2421 = vmatpush1.msra.mxu0 0.0
    %2422 = vmatprep.subr.mxu0 0.0
    %2423 = vmatpush1.msra.mxu0 0.0
    %2424 = vmatprep.subr.mxu0 0.0
    %2425 = vmatpush1.msra.mxu0 0.0
    %2426 = vmatprep.subr.mxu0 0.0
    %2427 = vmatpush1.msra.mxu0 0.0
    %2428 = vmatprep.subr.mxu0 0.0
    %2429 = vmatpush1.msra.mxu0 0.0
    %2430 = vmatprep.subr.mxu0 0.0
    %2431 = vmatpush1.msra.mxu0 0.0
    %2432 = vmatprep.subr.mxu0 0.0
    %2433 = vmatpush1.msra.mxu0 0.0
    %2434 = vmatprep.subr.mxu0 0.0
    %2435 = vmatpush1.msra.mxu0 0.0
    %2436 = vmatprep.subr.mxu0 0.0
    %2437 = vmatpush1.msra.mxu0 0.0
    %2438 = vmatprep.subr.mxu0 0.0
    %2439 = vmatpush1.msra.mxu0 0.0
    %2440 = vmatprep.subr.mxu0 0.0
    %2441 = vmatpush1.msra.mxu0 0.0
    %2442 = vmatprep.subr.mxu0 0.0
    %2443 = vmatpush1.msra.mxu0 0.0
    %2444 = vmatprep.subr.mxu0 0.0
    %2445 = vmatpush1.msra.mxu0 0.0
    %2446 = vmatprep.subr.mxu0 0.0
    %2447 = vmatpush1.msra.mxu0 0.0
    %2448 = vmatprep.subr.mxu0 0.0
    %2449 = vmatpush1.msra.mxu0 0.0
    %2450 = vmatprep.mubr.f32.mxu0 0.0
    %2451 = vmatmul.mubr.f32.gmra.mrb[0].mxu0 %v2384
    %v2452 = vpop.f32.mrb[0].mxu0
    %v2453 = vadd.f32 0.0, %v2452
    %v2454 = vpop.f32.mrb[0].mxu0
    %2455 = vdwg.mxu0
    %2456 = vrot.lane.b32.xlu0 %v2119, 112
    %v2457 = vpop.permute.xlu0 %2456
    %2458 = vrot.lane.b32.xlu0 %v2119, 80
    %v2459 = vpop.permute.xlu0 %2458
    %v2460 = vsel %vm300, %v2457, 0
    %v2462 = vsel %vm300, %v2459, 0
    %2464 = vmatprep.subr.mxu0 0.0
    %2465 = vmatpush1.xpose.msra.mxu0 %v2462
    %2466 = vmatprep.subr.mxu0 0.0
    %2467 = vmatpush1.xpose.msra.mxu0 0.0
    %2468 = vmatprep.subr.mxu0 0.0
    %2469 = vmatpush1.xpose.msra.mxu0 0.0
    %2470 = vmatprep.subr.mxu0 0.0
    %2471 = vmatpush1.xpose.msra.mxu0 0.0
    %2472 = vmatprep.subr.mxu0 0.0
    %2473 = vmatpush1.xpose.msra.mxu0 0.0
    %2474 = vmatprep.subr.mxu0 0.0
    %2475 = vmatpush1.xpose.msra.mxu0 0.0
    %2476 = vmatprep.subr.mxu0 0.0
    %2477 = vmatpush1.xpose.msra.mxu0 0.0
    %2478 = vmatprep.subr.mxu0 0.0
    %2479 = vmatpush1.xpose.msra.mxu0 0.0
    %2480 = vmatprep.subr.mxu0 0.0
    %2481 = vmatpush1.xpose.msra.mxu0 0.0
    %2482 = vmatprep.subr.mxu0 0.0
    %2483 = vmatpush1.xpose.msra.mxu0 0.0
    %2484 = vmatprep.subr.mxu0 0.0
    %2485 = vmatpush1.xpose.msra.mxu0 0.0
    %2486 = vmatprep.subr.mxu0 0.0
    %2487 = vmatpush1.xpose.msra.mxu0 0.0
    %2488 = vmatprep.subr.mxu0 0.0
    %2489 = vmatpush1.xpose.msra.mxu0 0.0
    %2490 = vmatprep.subr.mxu0 0.0
    %2491 = vmatpush1.xpose.msra.mxu0 0.0
    %2492 = vmatprep.subr.mxu0 0.0
    %2493 = vmatpush1.xpose.msra.mxu0 0.0
    %2494 = vmatprep.subr.mxu0 0.0
    %2495 = vmatpush1.xpose.msra.mxu0 0.0
    %2496 = vmatprep.subr.mxu0 0.0
    %2497 = vmatpush1.xpose.msra.mxu0 0.0
    %2498 = vmatprep.subr.mxu0 0.0
    %2499 = vmatpush1.xpose.msra.mxu0 0.0
    %2500 = vmatprep.subr.mxu0 0.0
    %2501 = vmatpush1.xpose.msra.mxu0 0.0
    %2502 = vmatprep.subr.mxu0 0.0
    %2503 = vmatpush1.xpose.msra.mxu0 0.0
    %2504 = vmatprep.subr.mxu0 0.0
    %2505 = vmatpush1.xpose.msra.mxu0 0.0
    %2506 = vmatprep.subr.mxu0 0.0
    %2507 = vmatpush1.xpose.msra.mxu0 0.0
    %2508 = vmatprep.subr.mxu0 0.0
    %2509 = vmatpush1.xpose.msra.mxu0 0.0
    %2510 = vmatprep.subr.mxu0 0.0
    %2511 = vmatpush1.xpose.msra.mxu0 0.0
    %2512 = vmatprep.subr.mxu0 0.0
    %2513 = vmatpush1.xpose.msra.mxu0 0.0
    %2514 = vmatprep.subr.mxu0 0.0
    %2515 = vmatpush1.xpose.msra.mxu0 0.0
    %2516 = vmatprep.subr.mxu0 0.0
    %2517 = vmatpush1.xpose.msra.mxu0 0.0
    %2518 = vmatprep.subr.mxu0 0.0
    %2519 = vmatpush1.xpose.msra.mxu0 0.0
    %2520 = vmatprep.subr.mxu0 0.0
    %2521 = vmatpush1.xpose.msra.mxu0 0.0
    %2522 = vmatprep.subr.mxu0 0.0
    %2523 = vmatpush1.xpose.msra.mxu0 0.0
    %2524 = vmatprep.subr.mxu0 0.0
    %2525 = vmatpush1.xpose.msra.mxu0 0.0
    %2526 = vmatprep.subr.mxu0 0.0
    %2527 = vmatpush1.xpose.msra.mxu0 0.0
    %2528 = vmatprep.mubr.f32.mxu0 0.0
    %2529 = vmatmul.mubr.f32.gmra.mrb[0].mxu0 %v2460
    %v2530 = vpop.f32.mrb[0].mxu0
    %v2531 = vadd.f32 %v296, %v2530
    %v2532 = vpop.f32.mrb[0].mxu0
    %2533 = vdwg.mxu0
    %v2534 = vsel %vm300, %v2531, -inf
    %2535 = vmax.xlane.f32.xlu0 %v2534
    %v2536 = vpop.xlane.xlu0 %2535
    %v2537 = vsub.f32 %v2531, %v2536
    %v2538 = vmul.f32 %v2537, 1.442695
    %v2539 = vpow.pop %v2538
    %v2540 = vsel %vm300, %v2539, 0.0
    %2541 = vadd.xlane.f32.xlu0 %v2540
    %v2542 = vpop.xlane.xlu0 %2541
    %v2543 = vrcp.pop %v2542
    %v2544 = vmul.f32 %v2539, %v2543
    %2545 = vrot.lane.b32.xlu0 %v2119, 48
    %v2546 = vpop.permute.xlu0 %2545
    %v2549 = vsel %vm300, %v2544, 0
    %2551 = vmatprep.subr.mxu0 0.0
    %2552 = vmatpush1.msra.mxu0 %v2546
    %2553 = vmatprep.subr.mxu0 0.0
    %2554 = vmatpush1.msra.mxu0 0.0
    %2555 = vmatprep.subr.mxu0 0.0
    %2556 = vmatpush1.msra.mxu0 0.0
    %2557 = vmatprep.subr.mxu0 0.0
    %2558 = vmatpush1.msra.mxu0 0.0
    %2559 = vmatprep.subr.mxu0 0.0
    %2560 = vmatpush1.msra.mxu0 0.0
    %2561 = vmatprep.subr.mxu0 0.0
    %2562 = vmatpush1.msra.mxu0 0.0
    %2563 = vmatprep.subr.mxu0 0.0
    %2564 = vmatpush1.msra.mxu0 0.0
    %2565 = vmatprep.subr.mxu0 0.0
    %2566 = vmatpush1.msra.mxu0 0.0
    %2567 = vmatprep.subr.mxu0 0.0
    %2568 = vmatpush1.msra.mxu0 0.0
    %2569 = vmatprep.subr.mxu0 0.0
    %2570 = vmatpush1.msra.mxu0 0.0
    %2571 = vmatprep.subr.mxu0 0.0
    %2572 = vmatpush1.msra.mxu0 0.0
    %2573 = vmatprep.subr.mxu0 0.0
    %2574 = vmatpush1.msra.mxu0 0.0
    %2575 = vmatprep.subr.mxu0 0.0
    %2576 = vmatpush1.msra.mxu0 0.0
    %2577 = vmatprep.subr.mxu0 0.0
    %2578 = vmatpush1.msra.mxu0 0.0
    %2579 = vmatprep.subr.mxu0 0.0
    %2580 = vmatpush1.msra.mxu0 0.0
    %2581 = vmatprep.subr.mxu0 0.0
    %2582 = vmatpush1.msra.mxu0 0.0
    %2583 = vmatprep.subr.mxu0 0.0
    %2584 = vmatpush1.msra.mxu0 0.0
    %2585 = vmatprep.subr.mxu0 0.0
    %2586 = vmatpush1.msra.mxu0 0.0
    %2587 = vmatprep.subr.mxu0 0.0
    %2588 = vmatpush1.msra.mxu0 0.0
    %2589 = vmatprep.subr.mxu0 0.0
    %2590 = vmatpush1.msra.mxu0 0.0
    %2591 = vmatprep.subr.mxu0 0.0
    %2592 = vmatpush1.msra.mxu0 0.0
    %2593 = vmatprep.subr.mxu0 0.0
    %2594 = vmatpush1.msra.mxu0 0.0
    %2595 = vmatprep.subr.mxu0 0.0
    %2596 = vmatpush1.msra.mxu0 0.0
    %2597 = vmatprep.subr.mxu0 0.0
    %2598 = vmatpush1.msra.mxu0 0.0
    %2599 = vmatprep.subr.mxu0 0.0
    %2600 = vmatpush1.msra.mxu0 0.0
    %2601 = vmatprep.subr.mxu0 0.0
    %2602 = vmatpush1.msra.mxu0 0.0
    %2603 = vmatprep.subr.mxu0 0.0
    %2604 = vmatpush1.msra.mxu0 0.0
    %2605 = vmatprep.subr.mxu0 0.0
    %2606 = vmatpush1.msra.mxu0 0.0
    %2607 = vmatprep.subr.mxu0 0.0
    %2608 = vmatpush1.msra.mxu0 0.0
    %2609 = vmatprep.subr.mxu0 0.0
    %2610 = vmatpush1.msra.mxu0 0.0
    %2611 = vmatprep.subr.mxu0 0.0
    %2612 = vmatpush1.msra.mxu0 0.0
    %2613 = vmatprep.subr.mxu0 0.0
    %2614 = vmatpush1.msra.mxu0 0.0
    %2615 = vmatprep.mubr.f32.mxu0 0.0
    %2616 = vmatmul.mubr.f32.gmra.mrb[0].mxu0 %v2549
    %v2617 = vpop.f32.mrb[0].mxu0
    %v2618 = vadd.f32 0.0, %v2617
    %v2619 = vpop.f32.mrb[0].mxu0
    %2620 = vdwg.mxu0
    %2621 = vrot.lane.b32.xlu0 %v2119, 104
    %v2622 = vpop.permute.xlu0 %2621
    %2623 = vrot.lane.b32.xlu0 %v2119, 72
    %v2624 = vpop.permute.xlu0 %2623
    %v2625 = vsel %vm300, %v2622, 0
    %v2627 = vsel %vm300, %v2624, 0
    %2629 = vmatprep.subr.mxu0 0.0
    %2630 = vmatpush1.xpose.msra.mxu0 %v2627
    %2631 = vmatprep.subr.mxu0 0.0
    %2632 = vmatpush1.xpose.msra.mxu0 0.0
    %2633 = vmatprep.subr.mxu0 0.0
    %2634 = vmatpush1.xpose.msra.mxu0 0.0
    %2635 = vmatprep.subr.mxu0 0.0
    %2636 = vmatpush1.xpose.msra.mxu0 0.0
    %2637 = vmatprep.subr.mxu0 0.0
    %2638 = vmatpush1.xpose.msra.mxu0 0.0
    %2639 = vmatprep.subr.mxu0 0.0
    %2640 = vmatpush1.xpose.msra.mxu0 0.0
    %2641 = vmatprep.subr.mxu0 0.0
    %2642 = vmatpush1.xpose.msra.mxu0 0.0
    %2643 = vmatprep.subr.mxu0 0.0
    %2644 = vmatpush1.xpose.msra.mxu0 0.0
    %2645 = vmatprep.subr.mxu0 0.0
    %2646 = vmatpush1.xpose.msra.mxu0 0.0
    %2647 = vmatprep.subr.mxu0 0.0
    %2648 = vmatpush1.xpose.msra.mxu0 0.0
    %2649 = vmatprep.subr.mxu0 0.0
    %2650 = vmatpush1.xpose.msra.mxu0 0.0
    %2651 = vmatprep.subr.mxu0 0.0
    %2652 = vmatpush1.xpose.msra.mxu0 0.0
    %2653 = vmatprep.subr.mxu0 0.0
    %2654 = vmatpush1.xpose.msra.mxu0 0.0
    %2655 = vmatprep.subr.mxu0 0.0
    %2656 = vmatpush1.xpose.msra.mxu0 0.0
    %2657 = vmatprep.subr.mxu0 0.0
    %2658 = vmatpush1.xpose.msra.mxu0 0.0
    %2659 = vmatprep.subr.mxu0 0.0
    %2660 = vmatpush1.xpose.msra.mxu0 0.0
    %2661 = vmatprep.subr.mxu0 0.0
    %2662 = vmatpush1.xpose.msra.mxu0 0.0
    %2663 = vmatprep.subr.mxu0 0.0
    %2664 = vmatpush1.xpose.msra.mxu0 0.0
    %2665 = vmatprep.subr.mxu0 0.0
    %2666 = vmatpush1.xpose.msra.mxu0 0.0
    %2667 = vmatprep.subr.mxu0 0.0
    %2668 = vmatpush1.xpose.msra.mxu0 0.0
    %2669 = vmatprep.subr.mxu0 0.0
    %2670 = vmatpush1.xpose.msra.mxu0 0.0
    %2671 = vmatprep.subr.mxu0 0.0
    %2672 = vmatpush1.xpose.msra.mxu0 0.0
    %2673 = vmatprep.subr.mxu0 0.0
    %2674 = vmatpush1.xpose.msra.mxu0 0.0
    %2675 = vmatprep.subr.mxu0 0.0
    %2676 = vmatpush1.xpose.msra.mxu0 0.0
    %2677 = vmatprep.subr.mxu0 0.0
    %2678 = vmatpush1.xpose.msra.mxu0 0.0
    %2679 = vmatprep.subr.mxu0 0.0
    %2680 = vmatpush1.xpose.msra.mxu0 0.0
    %2681 = vmatprep.subr.mxu0 0.0
    %2682 = vmatpush1.xpose.msra.mxu0 0.0
    %2683 = vmatprep.subr.mxu0 0.0
    %2684 = vmatpush1.xpose.msra.mxu0 0.0
    %2685 = vmatprep.subr.mxu0 0.0
    %2686 = vmatpush1.xpose.msra.mxu0 0.0
    %2687 = vmatprep.subr.mxu0 0.0
    %2688 = vmatpush1.xpose.msra.mxu0 0.0
    %2689 = vmatprep.subr.mxu0 0.0
    %2690 = vmatpush1.xpose.msra.mxu0 0.0
    %2691 = vmatprep.subr.mxu0 0.0
    %2692 = vmatpush1.xpose.msra.mxu0 0.0
    %2693 = vmatprep.mubr.f32.mxu0 0.0
    %2694 = vmatmul.mubr.f32.gmra.mrb[0].mxu0 %v2625
    %v2695 = vpop.f32.mrb[0].mxu0
    %v2696 = vadd.f32 %v296, %v2695
    %v2697 = vpop.f32.mrb[0].mxu0
    %2698 = vdwg.mxu0
    %v2699 = vsel %vm300, %v2696, -inf
    %2700 = vmax.xlane.f32.xlu0 %v2699
    %v2701 = vpop.xlane.xlu0 %2700
    %v2702 = vsub.f32 %v2696, %v2701
    %v2703 = vmul.f32 %v2702, 1.442695
    %v2704 = vpow.pop %v2703
    %v2705 = vsel %vm300, %v2704, 0.0
    %2706 = vadd.xlane.f32.xlu0 %v2705
    %v2707 = vpop.xlane.xlu0 %2706
    %v2708 = vrcp.pop %v2707
    %v2709 = vmul.f32 %v2704, %v2708
    %2710 = vrot.lane.b32.xlu0 %v2119, 40
    %v2711 = vpop.permute.xlu0 %2710
    %v2714 = vsel %vm300, %v2709, 0
    %2716 = vmatprep.subr.mxu0 0.0
    %2717 = vmatpush1.msra.mxu0 %v2711
    %2718 = vmatprep.subr.mxu0 0.0
    %2719 = vmatpush1.msra.mxu0 0.0
    %2720 = vmatprep.subr.mxu0 0.0
    %2721 = vmatpush1.msra.mxu0 0.0
    %2722 = vmatprep.subr.mxu0 0.0
    %2723 = vmatpush1.msra.mxu0 0.0
    %2724 = vmatprep.subr.mxu0 0.0
    %2725 = vmatpush1.msra.mxu0 0.0
    %2726 = vmatprep.subr.mxu0 0.0
    %2727 = vmatpush1.msra.mxu0 0.0
    %2728 = vmatprep.subr.mxu0 0.0
    %2729 = vmatpush1.msra.mxu0 0.0
    %2730 = vmatprep.subr.mxu0 0.0
    %2731 = vmatpush1.msra.mxu0 0.0
    %2732 = vmatprep.subr.mxu0 0.0
    %2733 = vmatpush1.msra.mxu0 0.0
    %2734 = vmatprep.subr.mxu0 0.0
    %2735 = vmatpush1.msra.mxu0 0.0
    %2736 = vmatprep.subr.mxu0 0.0
    %2737 = vmatpush1.msra.mxu0 0.0
    %2738 = vmatprep.subr.mxu0 0.0
    %2739 = vmatpush1.msra.mxu0 0.0
    %2740 = vmatprep.subr.mxu0 0.0
    %2741 = vmatpush1.msra.mxu0 0.0
    %2742 = vmatprep.subr.mxu0 0.0
    %2743 = vmatpush1.msra.mxu0 0.0
    %2744 = vmatprep.subr.mxu0 0.0
    %2745 = vmatpush1.msra.mxu0 0.0
    %2746 = vmatprep.subr.mxu0 0.0
    %2747 = vmatpush1.msra.mxu0 0.0
    %2748 = vmatprep.subr.mxu0 0.0
    %2749 = vmatpush1.msra.mxu0 0.0
    %2750 = vmatprep.subr.mxu0 0.0
    %2751 = vmatpush1.msra.mxu0 0.0
    %2752 = vmatprep.subr.mxu0 0.0
    %2753 = vmatpush1.msra.mxu0 0.0
    %2754 = vmatprep.subr.mxu0 0.0
    %2755 = vmatpush1.msra.mxu0 0.0
    %2756 = vmatprep.subr.mxu0 0.0
    %2757 = vmatpush1.msra.mxu0 0.0
    %2758 = vmatprep.subr.mxu0 0.0
    %2759 = vmatpush1.msra.mxu0 0.0
    %2760 = vmatprep.subr.mxu0 0.0
    %2761 = vmatpush1.msra.mxu0 0.0
    %2762 = vmatprep.subr.mxu0 0.0
    %2763 = vmatpush1.msra.mxu0 0.0
    %2764 = vmatprep.subr.mxu0 0.0
    %2765 = vmatpush1.msra.mxu0 0.0
    %2766 = vmatprep.subr.mxu0 0.0
    %2767 = vmatpush1.msra.mxu0 0.0
    %2768 = vmatprep.subr.mxu0 0.0
    %2769 = vmatpush1.msra.mxu0 0.0
    %2770 = vmatprep.subr.mxu0 0.0
    %2771 = vmatpush1.msra.mxu0 0.0
    %2772 = vmatprep.subr.mxu0 0.0
    %2773 = vmatpush1.msra.mxu0 0.0
    %2774 = vmatprep.subr.mxu0 0.0
    %2775 = vmatpush1.msra.mxu0 0.0
    %2776 = vmatprep.subr.mxu0 0.0
    %2777 = vmatpush1.msra.mxu0 0.0
    %2778 = vmatprep.subr.mxu0 0.0
    %2779 = vmatpush1.msra.mxu0 0.0
    %2780 = vmatprep.mubr.f32.mxu0 0.0
    %2781 = vmatmul.mubr.f32.gmra.mrb[0].mxu0 %v2714
    %v2782 = vpop.f32.mrb[0].mxu0
    %v2783 = vadd.f32 0.0, %v2782
    %v2784 = vpop.f32.mrb[0].mxu0
    %2785 = vdwg.mxu0
    %2787 = vrot.lane.b32.xlu0 %v2453, 8
    %v2788 = vpop.permute.xlu0 %2787
    %2791 = vrot.lane.b32.xlu0 %v2618, 16
    %v2792 = vpop.permute.xlu0 %2791
    %2795 = vrot.lane.b32.xlu0 %v2783, 24
    %v2796 = vpop.permute.xlu0 %2795
    %v2798 = vsel %vm300, %v2288, %v2788
    %v2799 = vsel %vm970, %v2798, %v2792
    %v2800 = vsel %vm972, %v2799, %v2796
    %2802 = vrot.lane.b32.xlu0 %v2124, 96
    %v2803 = vpop.permute.xlu0 %2802
    %v2804 = vsel %vm300, %v2124, 0
    %v2806 = vsel %vm300, %v2803, 0
    %2808 = vmatprep.subr.mxu0 0.0
    %2809 = vmatpush1.xpose.msra.mxu0 %v2806
    %2810 = vmatprep.subr.mxu0 0.0
    %2811 = vmatpush1.xpose.msra.mxu0 0.0
    %2812 = vmatprep.subr.mxu0 0.0
    %2813 = vmatpush1.xpose.msra.mxu0 0.0
    %2814 = vmatprep.subr.mxu0 0.0
    %2815 = vmatpush1.xpose.msra.mxu0 0.0
    %2816 = vmatprep.subr.mxu0 0.0
    %2817 = vmatpush1.xpose.msra.mxu0 0.0
    %2818 = vmatprep.subr.mxu0 0.0
    %2819 = vmatpush1.xpose.msra.mxu0 0.0
    %2820 = vmatprep.subr.mxu0 0.0
    %2821 = vmatpush1.xpose.msra.mxu0 0.0
    %2822 = vmatprep.subr.mxu0 0.0
    %2823 = vmatpush1.xpose.msra.mxu0 0.0
    %2824 = vmatprep.subr.mxu0 0.0
    %2825 = vmatpush1.xpose.msra.mxu0 0.0
    %2826 = vmatprep.subr.mxu0 0.0
    %2827 = vmatpush1.xpose.msra.mxu0 0.0
    %2828 = vmatprep.subr.mxu0 0.0
    %2829 = vmatpush1.xpose.msra.mxu0 0.0
    %2830 = vmatprep.subr.mxu0 0.0
    %2831 = vmatpush1.xpose.msra.mxu0 0.0
    %2832 = vmatprep.subr.mxu0 0.0
    %2833 = vmatpush1.xpose.msra.mxu0 0.0
    %2834 = vmatprep.subr.mxu0 0.0
    %2835 = vmatpush1.xpose.msra.mxu0 0.0
    %2836 = vmatprep.subr.mxu0 0.0
    %2837 = vmatpush1.xpose.msra.mxu0 0.0
    %2838 = vmatprep.subr.mxu0 0.0
    %2839 = vmatpush1.xpose.msra.mxu0 0.0
    %2840 = vmatprep.subr.mxu0 0.0
    %2841 = vmatpush1.xpose.msra.mxu0 0.0
    %2842 = vmatprep.subr.mxu0 0.0
    %2843 = vmatpush1.xpose.msra.mxu0 0.0
    %2844 = vmatprep.subr.mxu0 0.0
    %2845 = vmatpush1.xpose.msra.mxu0 0.0
    %2846 = vmatprep.subr.mxu0 0.0
    %2847 = vmatpush1.xpose.msra.mxu0 0.0
    %2848 = vmatprep.subr.mxu0 0.0
    %2849 = vmatpush1.xpose.msra.mxu0 0.0
    %2850 = vmatprep.subr.mxu0 0.0
    %2851 = vmatpush1.xpose.msra.mxu0 0.0
    %2852 = vmatprep.subr.mxu0 0.0
    %2853 = vmatpush1.xpose.msra.mxu0 0.0
    %2854 = vmatprep.subr.mxu0 0.0
    %2855 = vmatpush1.xpose.msra.mxu0 0.0
    %2856 = vmatprep.subr.mxu0 0.0
    %2857 = vmatpush1.xpose.msra.mxu0 0.0
    %2858 = vmatprep.subr.mxu0 0.0
    %2859 = vmatpush1.xpose.msra.mxu0 0.0
    %2860 = vmatprep.subr.mxu0 0.0
    %2861 = vmatpush1.xpose.msra.mxu0 0.0
    %2862 = vmatprep.subr.mxu0 0.0
    %2863 = vmatpush1.xpose.msra.mxu0 0.0
    %2864 = vmatprep.subr.mxu0 0.0
    %2865 = vmatpush1.xpose.msra.mxu0 0.0
    %2866 = vmatprep.subr.mxu0 0.0
    %2867 = vmatpush1.xpose.msra.mxu0 0.0
    %2868 = vmatprep.subr.mxu0 0.0
    %2869 = vmatpush1.xpose.msra.mxu0 0.0
    %2870 = vmatprep.subr.mxu0 0.0
    %2871 = vmatpush1.xpose.msra.mxu0 0.0
    %2872 = vmatprep.mubr.f32.mxu0 0.0
    %2873 = vmatmul.mubr.f32.gmra.mrb[0].mxu0 %v2804
    %v2874 = vpop.f32.mrb[0].mxu0
    %v2875 = vadd.f32 %v977, %v2874
    %v2876 = vpop.f32.mrb[0].mxu0
    %2877 = vdwg.mxu0
    %v2878 = vsel %vm300, %v2875, -inf
    %2879 = vmax.xlane.f32.xlu0 %v2878
    %v2880 = vpop.xlane.xlu0 %2879
    %v2881 = vsub.f32 %v2875, %v2880
    %v2882 = vmul.f32 %v2881, 1.442695
    %v2883 = vpow.pop %v2882
    %v2884 = vsel %vm300, %v2883, 0.0
    %2885 = vadd.xlane.f32.xlu0 %v2884
    %v2886 = vpop.xlane.xlu0 %2885
    %v2887 = vrcp.pop %v2886
    %v2888 = vmul.f32 %v2883, %v2887
    %2889 = vrot.lane.b32.xlu0 %v2124, 64
    %v2890 = vpop.permute.xlu0 %2889
    %v2893 = vsel %vm300, %v2888, 0
    %2895 = vmatprep.subr.mxu0 0.0
    %2896 = vmatpush1.msra.mxu0 %v2890
    %2897 = vmatprep.subr.mxu0 0.0
    %2898 = vmatpush1.msra.mxu0 0.0
    %2899 = vmatprep.subr.mxu0 0.0
    %2900 = vmatpush1.msra.mxu0 0.0
    %2901 = vmatprep.subr.mxu0 0.0
    %2902 = vmatpush1.msra.mxu0 0.0
    %2903 = vmatprep.subr.mxu0 0.0
    %2904 = vmatpush1.msra.mxu0 0.0
    %2905 = vmatprep.subr.mxu0 0.0
    %2906 = vmatpush1.msra.mxu0 0.0
    %2907 = vmatprep.subr.mxu0 0.0
    %2908 = vmatpush1.msra.mxu0 0.0
    %2909 = vmatprep.subr.mxu0 0.0
    %2910 = vmatpush1.msra.mxu0 0.0
    %2911 = vmatprep.subr.mxu0 0.0
    %2912 = vmatpush1.msra.mxu0 0.0
    %2913 = vmatprep.subr.mxu0 0.0
    %2914 = vmatpush1.msra.mxu0 0.0
    %2915 = vmatprep.subr.mxu0 0.0
    %2916 = vmatpush1.msra.mxu0 0.0
    %2917 = vmatprep.subr.mxu0 0.0
    %2918 = vmatpush1.msra.mxu0 0.0
    %2919 = vmatprep.subr.mxu0 0.0
    %2920 = vmatpush1.msra.mxu0 0.0
    %2921 = vmatprep.subr.mxu0 0.0
    %2922 = vmatpush1.msra.mxu0 0.0
    %2923 = vmatprep.subr.mxu0 0.0
    %2924 = vmatpush1.msra.mxu0 0.0
    %2925 = vmatprep.subr.mxu0 0.0
    %2926 = vmatpush1.msra.mxu0 0.0
    %2927 = vmatprep.subr.mxu0 0.0
    %2928 = vmatpush1.msra.mxu0 0.0
    %2929 = vmatprep.subr.mxu0 0.0
    %2930 = vmatpush1.msra.mxu0 0.0
    %2931 = vmatprep.subr.mxu0 0.0
    %2932 = vmatpush1.msra.mxu0 0.0
    %2933 = vmatprep.subr.mxu0 0.0
    %2934 = vmatpush1.msra.mxu0 0.0
    %2935 = vmatprep.subr.mxu0 0.0
    %2936 = vmatpush1.msra.mxu0 0.0
    %2937 = vmatprep.subr.mxu0 0.0
    %2938 = vmatpush1.msra.mxu0 0.0
    %2939 = vmatprep.subr.mxu0 0.0
    %2940 = vmatpush1.msra.mxu0 0.0
    %2941 = vmatprep.subr.mxu0 0.0
    %2942 = vmatpush1.msra.mxu0 0.0
    %2943 = vmatprep.subr.mxu0 0.0
    %2944 = vmatpush1.msra.mxu0 0.0
    %2945 = vmatprep.subr.mxu0 0.0
    %2946 = vmatpush1.msra.mxu0 0.0
    %2947 = vmatprep.subr.mxu0 0.0
    %2948 = vmatpush1.msra.mxu0 0.0
    %2949 = vmatprep.subr.mxu0 0.0
    %2950 = vmatpush1.msra.mxu0 0.0
    %2951 = vmatprep.subr.mxu0 0.0
    %2952 = vmatpush1.msra.mxu0 0.0
    %2953 = vmatprep.subr.mxu0 0.0
    %2954 = vmatpush1.msra.mxu0 0.0
    %2955 = vmatprep.subr.mxu0 0.0
    %2956 = vmatpush1.msra.mxu0 0.0
    %2957 = vmatprep.subr.mxu0 0.0
    %2958 = vmatpush1.msra.mxu0 0.0
    %2959 = vmatprep.mubr.f32.mxu0 0.0
    %2960 = vmatmul.mubr.f32.gmra.mrb[0].mxu0 %v2893
    %v2961 = vpop.f32.mrb[0].mxu0
    %v2962 = vadd.f32 0.0, %v2961
    %v2963 = vpop.f32.mrb[0].mxu0
    %2964 = vdwg.mxu0
    %2965 = vrot.lane.b32.xlu0 %v2124, 120
    %v2966 = vpop.permute.xlu0 %2965
    %2967 = vrot.lane.b32.xlu0 %v2124, 88
    %v2968 = vpop.permute.xlu0 %2967
    %v2969 = vsel %vm300, %v2966, 0
    %v2971 = vsel %vm300, %v2968, 0
    %2973 = vmatprep.subr.mxu0 0.0
    %2974 = vmatpush1.xpose.msra.mxu0 %v2971
    %2975 = vmatprep.subr.mxu0 0.0
    %2976 = vmatpush1.xpose.msra.mxu0 0.0
    %2977 = vmatprep.subr.mxu0 0.0
    %2978 = vmatpush1.xpose.msra.mxu0 0.0
    %2979 = vmatprep.subr.mxu0 0.0
    %2980 = vmatpush1.xpose.msra.mxu0 0.0
    %2981 = vmatprep.subr.mxu0 0.0
    %2982 = vmatpush1.xpose.msra.mxu0 0.0
    %2983 = vmatprep.subr.mxu0 0.0
    %2984 = vmatpush1.xpose.msra.mxu0 0.0
    %2985 = vmatprep.subr.mxu0 0.0
    %2986 = vmatpush1.xpose.msra.mxu0 0.0
    %2987 = vmatprep.subr.mxu0 0.0
    %2988 = vmatpush1.xpose.msra.mxu0 0.0
    %2989 = vmatprep.subr.mxu0 0.0
    %2990 = vmatpush1.xpose.msra.mxu0 0.0
    %2991 = vmatprep.subr.mxu0 0.0
    %2992 = vmatpush1.xpose.msra.mxu0 0.0
    %2993 = vmatprep.subr.mxu0 0.0
    %2994 = vmatpush1.xpose.msra.mxu0 0.0
    %2995 = vmatprep.subr.mxu0 0.0
    %2996 = vmatpush1.xpose.msra.mxu0 0.0
    %2997 = vmatprep.subr.mxu0 0.0
    %2998 = vmatpush1.xpose.msra.mxu0 0.0
    %2999 = vmatprep.subr.mxu0 0.0
    %3000 = vmatpush1.xpose.msra.mxu0 0.0
    %3001 = vmatprep.subr.mxu0 0.0
    %3002 = vmatpush1.xpose.msra.mxu0 0.0
    %3003 = vmatprep.subr.mxu0 0.0
    %3004 = vmatpush1.xpose.msra.mxu0 0.0
    %3005 = vmatprep.subr.mxu0 0.0
    %3006 = vmatpush1.xpose.msra.mxu0 0.0
    %3007 = vmatprep.subr.mxu0 0.0
    %3008 = vmatpush1.xpose.msra.mxu0 0.0
    %3009 = vmatprep.subr.mxu0 0.0
    %3010 = vmatpush1.xpose.msra.mxu0 0.0
    %3011 = vmatprep.subr.mxu0 0.0
    %3012 = vmatpush1.xpose.msra.mxu0 0.0
    %3013 = vmatprep.subr.mxu0 0.0
    %3014 = vmatpush1.xpose.msra.mxu0 0.0
    %3015 = vmatprep.subr.mxu0 0.0
    %3016 = vmatpush1.xpose.msra.mxu0 0.0
    %3017 = vmatprep.subr.mxu0 0.0
    %3018 = vmatpush1.xpose.msra.mxu0 0.0
    %3019 = vmatprep.subr.mxu0 0.0
    %3020 = vmatpush1.xpose.msra.mxu0 0.0
    %3021 = vmatprep.subr.mxu0 0.0
    %3022 = vmatpush1.xpose.msra.mxu0 0.0
    %3023 = vmatprep.subr.mxu0 0.0
    %3024 = vmatpush1.xpose.msra.mxu0 0.0
    %3025 = vmatprep.subr.mxu0 0.0
    %3026 = vmatpush1.xpose.msra.mxu0 0.0
    %3027 = vmatprep.subr.mxu0 0.0
    %3028 = vmatpush1.xpose.msra.mxu0 0.0
    %3029 = vmatprep.subr.mxu0 0.0
    %3030 = vmatpush1.xpose.msra.mxu0 0.0
    %3031 = vmatprep.subr.mxu0 0.0
    %3032 = vmatpush1.xpose.msra.mxu0 0.0
    %3033 = vmatprep.subr.mxu0 0.0
    %3034 = vmatpush1.xpose.msra.mxu0 0.0
    %3035 = vmatprep.subr.mxu0 0.0
    %3036 = vmatpush1.xpose.msra.mxu0 0.0
    %3037 = vmatprep.mubr.f32.mxu0 0.0
    %3038 = vmatmul.mubr.f32.gmra.mrb[0].mxu0 %v2969
    %v3039 = vpop.f32.mrb[0].mxu0
    %v3040 = vadd.f32 %v977, %v3039
    %v3041 = vpop.f32.mrb[0].mxu0
    %3042 = vdwg.mxu0
    %v3043 = vsel %vm300, %v3040, -inf
    %3044 = vmax.xlane.f32.xlu0 %v3043
    %v3045 = vpop.xlane.xlu0 %3044
    %v3046 = vsub.f32 %v3040, %v3045
    %v3047 = vmul.f32 %v3046, 1.442695
    %v3048 = vpow.pop %v3047
    %v3049 = vsel %vm300, %v3048, 0.0
    %3050 = vadd.xlane.f32.xlu0 %v3049
    %v3051 = vpop.xlane.xlu0 %3050
    %v3052 = vrcp.pop %v3051
    %v3053 = vmul.f32 %v3048, %v3052
    %3054 = vrot.lane.b32.xlu0 %v2124, 56
    %v3055 = vpop.permute.xlu0 %3054
    %v3058 = vsel %vm300, %v3053, 0
    %3060 = vmatprep.subr.mxu0 0.0
    %3061 = vmatpush1.msra.mxu0 %v3055
    %3062 = vmatprep.subr.mxu0 0.0
    %3063 = vmatpush1.msra.mxu0 0.0
    %3064 = vmatprep.subr.mxu0 0.0
    %3065 = vmatpush1.msra.mxu0 0.0
    %3066 = vmatprep.subr.mxu0 0.0
    %3067 = vmatpush1.msra.mxu0 0.0
    %3068 = vmatprep.subr.mxu0 0.0
    %3069 = vmatpush1.msra.mxu0 0.0
    %3070 = vmatprep.subr.mxu0 0.0
    %3071 = vmatpush1.msra.mxu0 0.0
    %3072 = vmatprep.subr.mxu0 0.0
    %3073 = vmatpush1.msra.mxu0 0.0
    %3074 = vmatprep.subr.mxu0 0.0
    %3075 = vmatpush1.msra.mxu0 0.0
    %3076 = vmatprep.subr.mxu0 0.0
    %3077 = vmatpush1.msra.mxu0 0.0
    %3078 = vmatprep.subr.mxu0 0.0
    %3079 = vmatpush1.msra.mxu0 0.0
    %3080 = vmatprep.subr.mxu0 0.0
    %3081 = vmatpush1.msra.mxu0 0.0
    %3082 = vmatprep.subr.mxu0 0.0
    %3083 = vmatpush1.msra.mxu0 0.0
    %3084 = vmatprep.subr.mxu0 0.0
    %3085 = vmatpush1.msra.mxu0 0.0
    %3086 = vmatprep.subr.mxu0 0.0
    %3087 = vmatpush1.msra.mxu0 0.0
    %3088 = vmatprep.subr.mxu0 0.0
    %3089 = vmatpush1.msra.mxu0 0.0
    %3090 = vmatprep.subr.mxu0 0.0
    %3091 = vmatpush1.msra.mxu0 0.0
    %3092 = vmatprep.subr.mxu0 0.0
    %3093 = vmatpush1.msra.mxu0 0.0
    %3094 = vmatprep.subr.mxu0 0.0
    %3095 = vmatpush1.msra.mxu0 0.0
    %3096 = vmatprep.subr.mxu0 0.0
    %3097 = vmatpush1.msra.mxu0 0.0
    %3098 = vmatprep.subr.mxu0 0.0
    %3099 = vmatpush1.msra.mxu0 0.0
    %3100 = vmatprep.subr.mxu0 0.0
    %3101 = vmatpush1.msra.mxu0 0.0
    %3102 = vmatprep.subr.mxu0 0.0
    %3103 = vmatpush1.msra.mxu0 0.0
    %3104 = vmatprep.subr.mxu0 0.0
    %3105 = vmatpush1.msra.mxu0 0.0
    %3106 = vmatprep.subr.mxu0 0.0
    %3107 = vmatpush1.msra.mxu0 0.0
    %3108 = vmatprep.subr.mxu0 0.0
    %3109 = vmatpush1.msra.mxu0 0.0
    %3110 = vmatprep.subr.mxu0 0.0
    %3111 = vmatpush1.msra.mxu0 0.0
    %3112 = vmatprep.subr.mxu0 0.0
    %3113 = vmatpush1.msra.mxu0 0.0
    %3114 = vmatprep.subr.mxu0 0.0
    %3115 = vmatpush1.msra.mxu0 0.0
    %3116 = vmatprep.subr.mxu0 0.0
    %3117 = vmatpush1.msra.mxu0 0.0
    %3118 = vmatprep.subr.mxu0 0.0
    %3119 = vmatpush1.msra.mxu0 0.0
    %3120 = vmatprep.subr.mxu0 0.0
    %3121 = vmatpush1.msra.mxu0 0.0
    %3122 = vmatprep.subr.mxu0 0.0
    %3123 = vmatpush1.msra.mxu0 0.0
    %3124 = vmatprep.mubr.f32.mxu0 0.0
    %3125 = vmatmul.mubr.f32.gmra.mrb[0].mxu0 %v3058
    %v3126 = vpop.f32.mrb[0].mxu0
    %v3127 = vadd.f32 0.0, %v3126
    %v3128 = vpop.f32.mrb[0].mxu0
    %3129 = vdwg.mxu0
    %3130 = vrot.lane.b32.xlu0 %v2124, 112
    %v3131 = vpop.permute.xlu0 %3130
    %3132 = vrot.lane.b32.xlu0 %v2124, 80
    %v3133 = vpop.permute.xlu0 %3132
    %v3134 = vsel %vm300, %v3131, 0
    %v3136 = vsel %vm300, %v3133, 0
    %3138 = vmatprep.subr.mxu0 0.0
    %3139 = vmatpush1.xpose.msra.mxu0 %v3136
    %3140 = vmatprep.subr.mxu0 0.0
    %3141 = vmatpush1.xpose.msra.mxu0 0.0
    %3142 = vmatprep.subr.mxu0 0.0
    %3143 = vmatpush1.xpose.msra.mxu0 0.0
    %3144 = vmatprep.subr.mxu0 0.0
    %3145 = vmatpush1.xpose.msra.mxu0 0.0
    %3146 = vmatprep.subr.mxu0 0.0
    %3147 = vmatpush1.xpose.msra.mxu0 0.0
    %3148 = vmatprep.subr.mxu0 0.0
    %3149 = vmatpush1.xpose.msra.mxu0 0.0
    %3150 = vmatprep.subr.mxu0 0.0
    %3151 = vmatpush1.xpose.msra.mxu0 0.0
    %3152 = vmatprep.subr.mxu0 0.0
    %3153 = vmatpush1.xpose.msra.mxu0 0.0
    %3154 = vmatprep.subr.mxu0 0.0
    %3155 = vmatpush1.xpose.msra.mxu0 0.0
    %3156 = vmatprep.subr.mxu0 0.0
    %3157 = vmatpush1.xpose.msra.mxu0 0.0
    %3158 = vmatprep.subr.mxu0 0.0
    %3159 = vmatpush1.xpose.msra.mxu0 0.0
    %3160 = vmatprep.subr.mxu0 0.0
    %3161 = vmatpush1.xpose.msra.mxu0 0.0
    %3162 = vmatprep.subr.mxu0 0.0
    %3163 = vmatpush1.xpose.msra.mxu0 0.0
    %3164 = vmatprep.subr.mxu0 0.0
    %3165 = vmatpush1.xpose.msra.mxu0 0.0
    %3166 = vmatprep.subr.mxu0 0.0
    %3167 = vmatpush1.xpose.msra.mxu0 0.0
    %3168 = vmatprep.subr.mxu0 0.0
    %3169 = vmatpush1.xpose.msra.mxu0 0.0
    %3170 = vmatprep.subr.mxu0 0.0
    %3171 = vmatpush1.xpose.msra.mxu0 0.0
    %3172 = vmatprep.subr.mxu0 0.0
    %3173 = vmatpush1.xpose.msra.mxu0 0.0
    %3174 = vmatprep.subr.mxu0 0.0
    %3175 = vmatpush1.xpose.msra.mxu0 0.0
    %3176 = vmatprep.subr.mxu0 0.0
    %3177 = vmatpush1.xpose.msra.mxu0 0.0
    %3178 = vmatprep.subr.mxu0 0.0
    %3179 = vmatpush1.xpose.msra.mxu0 0.0
    %3180 = vmatprep.subr.mxu0 0.0
    %3181 = vmatpush1.xpose.msra.mxu0 0.0
    %3182 = vmatprep.subr.mxu0 0.0
    %3183 = vmatpush1.xpose.msra.mxu0 0.0
    %3184 = vmatprep.subr.mxu0 0.0
    %3185 = vmatpush1.xpose.msra.mxu0 0.0
    %3186 = vmatprep.subr.mxu0 0.0
    %3187 = vmatpush1.xpose.msra.mxu0 0.0
    %3188 = vmatprep.subr.mxu0 0.0
    %3189 = vmatpush1.xpose.msra.mxu0 0.0
    %3190 = vmatprep.subr.mxu0 0.0
    %3191 = vmatpush1.xpose.msra.mxu0 0.0
    %3192 = vmatprep.subr.mxu0 0.0
    %3193 = vmatpush1.xpose.msra.mxu0 0.0
    %3194 = vmatprep.subr.mxu0 0.0
    %3195 = vmatpush1.xpose.msra.mxu0 0.0
    %3196 = vmatprep.subr.mxu0 0.0
    %3197 = vmatpush1.xpose.msra.mxu0 0.0
    %3198 = vmatprep.subr.mxu0 0.0
    %3199 = vmatpush1.xpose.msra.mxu0 0.0
    %3200 = vmatprep.subr.mxu0 0.0
    %3201 = vmatpush1.xpose.msra.mxu0 0.0
    %3202 = vmatprep.mubr.f32.mxu0 0.0
    %3203 = vmatmul.mubr.f32.gmra.mrb[0].mxu0 %v3134
    %v3204 = vpop.f32.mrb[0].mxu0
    %v3205 = vadd.f32 %v977, %v3204
    %v3206 = vpop.f32.mrb[0].mxu0
    %3207 = vdwg.mxu0
    %v3208 = vsel %vm300, %v3205, -inf
    %3209 = vmax.xlane.f32.xlu0 %v3208
    %v3210 = vpop.xlane.xlu0 %3209
    %v3211 = vsub.f32 %v3205, %v3210
    %v3212 = vmul.f32 %v3211, 1.442695
    %v3213 = vpow.pop %v3212
    %v3214 = vsel %vm300, %v3213, 0.0
    %3215 = vadd.xlane.f32.xlu0 %v3214
    %v3216 = vpop.xlane.xlu0 %3215
    %v3217 = vrcp.pop %v3216
    %v3218 = vmul.f32 %v3213, %v3217
    %3219 = vrot.lane.b32.xlu0 %v2124, 48
    %v3220 = vpop.permute.xlu0 %3219
    %v3223 = vsel %vm300, %v3218, 0
    %3225 = vmatprep.subr.mxu0 0.0
    %3226 = vmatpush1.msra.mxu0 %v3220
    %3227 = vmatprep.subr.mxu0 0.0
    %3228 = vmatpush1.msra.mxu0 0.0
    %3229 = vmatprep.subr.mxu0 0.0
    %3230 = vmatpush1.msra.mxu0 0.0
    %3231 = vmatprep.subr.mxu0 0.0
    %3232 = vmatpush1.msra.mxu0 0.0
    %3233 = vmatprep.subr.mxu0 0.0
    %3234 = vmatpush1.msra.mxu0 0.0
    %3235 = vmatprep.subr.mxu0 0.0
    %3236 = vmatpush1.msra.mxu0 0.0
    %3237 = vmatprep.subr.mxu0 0.0
    %3238 = vmatpush1.msra.mxu0 0.0
    %3239 = vmatprep.subr.mxu0 0.0
    %3240 = vmatpush1.msra.mxu0 0.0
    %3241 = vmatprep.subr.mxu0 0.0
    %3242 = vmatpush1.msra.mxu0 0.0
    %3243 = vmatprep.subr.mxu0 0.0
    %3244 = vmatpush1.msra.mxu0 0.0
    %3245 = vmatprep.subr.mxu0 0.0
    %3246 = vmatpush1.msra.mxu0 0.0
    %3247 = vmatprep.subr.mxu0 0.0
    %3248 = vmatpush1.msra.mxu0 0.0
    %3249 = vmatprep.subr.mxu0 0.0
    %3250 = vmatpush1.msra.mxu0 0.0
    %3251 = vmatprep.subr.mxu0 0.0
    %3252 = vmatpush1.msra.mxu0 0.0
    %3253 = vmatprep.subr.mxu0 0.0
    %3254 = vmatpush1.msra.mxu0 0.0
    %3255 = vmatprep.subr.mxu0 0.0
    %3256 = vmatpush1.msra.mxu0 0.0
    %3257 = vmatprep.subr.mxu0 0.0
    %3258 = vmatpush1.msra.mxu0 0.0
    %3259 = vmatprep.subr.mxu0 0.0
    %3260 = vmatpush1.msra.mxu0 0.0
    %3261 = vmatprep.subr.mxu0 0.0
    %3262 = vmatpush1.msra.mxu0 0.0
    %3263 = vmatprep.subr.mxu0 0.0
    %3264 = vmatpush1.msra.mxu0 0.0
    %3265 = vmatprep.subr.mxu0 0.0
    %3266 = vmatpush1.msra.mxu0 0.0
    %3267 = vmatprep.subr.mxu0 0.0
    %3268 = vmatpush1.msra.mxu0 0.0
    %3269 = vmatprep.subr.mxu0 0.0
    %3270 = vmatpush1.msra.mxu0 0.0
    %3271 = vmatprep.subr.mxu0 0.0
    %3272 = vmatpush1.msra.mxu0 0.0
    %3273 = vmatprep.subr.mxu0 0.0
    %3274 = vmatpush1.msra.mxu0 0.0
    %3275 = vmatprep.subr.mxu0 0.0
    %3276 = vmatpush1.msra.mxu0 0.0
    %3277 = vmatprep.subr.mxu0 0.0
    %3278 = vmatpush1.msra.mxu0 0.0
    %3279 = vmatprep.subr.mxu0 0.0
    %3280 = vmatpush1.msra.mxu0 0.0
    %3281 = vmatprep.subr.mxu0 0.0
    %3282 = vmatpush1.msra.mxu0 0.0
    %3283 = vmatprep.subr.mxu0 0.0
    %3284 = vmatpush1.msra.mxu0 0.0
    %3285 = vmatprep.subr.mxu0 0.0
    %3286 = vmatpush1.msra.mxu0 0.0
    %3287 = vmatprep.subr.mxu0 0.0
    %3288 = vmatpush1.msra.mxu0 0.0
    %3289 = vmatprep.mubr.f32.mxu0 0.0
    %3290 = vmatmul.mubr.f32.gmra.mrb[0].mxu0 %v3223
    %v3291 = vpop.f32.mrb[0].mxu0
    %v3292 = vadd.f32 0.0, %v3291
    %v3293 = vpop.f32.mrb[0].mxu0
    %3294 = vdwg.mxu0
    %3295 = vrot.lane.b32.xlu0 %v2124, 104
    %v3296 = vpop.permute.xlu0 %3295
    %3297 = vrot.lane.b32.xlu0 %v2124, 72
    %v3298 = vpop.permute.xlu0 %3297
    %v3299 = vsel %vm300, %v3296, 0
    %v3301 = vsel %vm300, %v3298, 0
    %3303 = vmatprep.subr.mxu0 0.0
    %3304 = vmatpush1.xpose.msra.mxu0 %v3301
    %3305 = vmatprep.subr.mxu0 0.0
    %3306 = vmatpush1.xpose.msra.mxu0 0.0
    %3307 = vmatprep.subr.mxu0 0.0
    %3308 = vmatpush1.xpose.msra.mxu0 0.0
    %3309 = vmatprep.subr.mxu0 0.0
    %3310 = vmatpush1.xpose.msra.mxu0 0.0
    %3311 = vmatprep.subr.mxu0 0.0
    %3312 = vmatpush1.xpose.msra.mxu0 0.0
    %3313 = vmatprep.subr.mxu0 0.0
    %3314 = vmatpush1.xpose.msra.mxu0 0.0
    %3315 = vmatprep.subr.mxu0 0.0
    %3316 = vmatpush1.xpose.msra.mxu0 0.0
    %3317 = vmatprep.subr.mxu0 0.0
    %3318 = vmatpush1.xpose.msra.mxu0 0.0
    %3319 = vmatprep.subr.mxu0 0.0
    %3320 = vmatpush1.xpose.msra.mxu0 0.0
    %3321 = vmatprep.subr.mxu0 0.0
    %3322 = vmatpush1.xpose.msra.mxu0 0.0
    %3323 = vmatprep.subr.mxu0 0.0
    %3324 = vmatpush1.xpose.msra.mxu0 0.0
    %3325 = vmatprep.subr.mxu0 0.0
    %3326 = vmatpush1.xpose.msra.mxu0 0.0
    %3327 = vmatprep.subr.mxu0 0.0
    %3328 = vmatpush1.xpose.msra.mxu0 0.0
    %3329 = vmatprep.subr.mxu0 0.0
    %3330 = vmatpush1.xpose.msra.mxu0 0.0
    %3331 = vmatprep.subr.mxu0 0.0
    %3332 = vmatpush1.xpose.msra.mxu0 0.0
    %3333 = vmatprep.subr.mxu0 0.0
    %3334 = vmatpush1.xpose.msra.mxu0 0.0
    %3335 = vmatprep.subr.mxu0 0.0
    %3336 = vmatpush1.xpose.msra.mxu0 0.0
    %3337 = vmatprep.subr.mxu0 0.0
    %3338 = vmatpush1.xpose.msra.mxu0 0.0
    %3339 = vmatprep.subr.mxu0 0.0
    %3340 = vmatpush1.xpose.msra.mxu0 0.0
    %3341 = vmatprep.subr.mxu0 0.0
    %3342 = vmatpush1.xpose.msra.mxu0 0.0
    %3343 = vmatprep.subr.mxu0 0.0
    %3344 = vmatpush1.xpose.msra.mxu0 0.0
    %3345 = vmatprep.subr.mxu0 0.0
    %3346 = vmatpush1.xpose.msra.mxu0 0.0
    %3347 = vmatprep.subr.mxu0 0.0
    %3348 = vmatpush1.xpose.msra.mxu0 0.0
    %3349 = vmatprep.subr.mxu0 0.0
    %3350 = vmatpush1.xpose.msra.mxu0 0.0
    %3351 = vmatprep.subr.mxu0 0.0
    %3352 = vmatpush1.xpose.msra.mxu0 0.0
    %3353 = vmatprep.subr.mxu0 0.0
    %3354 = vmatpush1.xpose.msra.mxu0 0.0
    %3355 = vmatprep.subr.mxu0 0.0
    %3356 = vmatpush1.xpose.msra.mxu0 0.0
    %3357 = vmatprep.subr.mxu0 0.0
    %3358 = vmatpush1.xpose.msra.mxu0 0.0
    %3359 = vmatprep.subr.mxu0 0.0
    %3360 = vmatpush1.xpose.msra.mxu0 0.0
    %3361 = vmatprep.subr.mxu0 0.0
    %3362 = vmatpush1.xpose.msra.mxu0 0.0
    %3363 = vmatprep.subr.mxu0 0.0
    %3364 = vmatpush1.xpose.msra.mxu0 0.0
    %3365 = vmatprep.subr.mxu0 0.0
    %3366 = vmatpush1.xpose.msra.mxu0 0.0
    %3367 = vmatprep.mubr.f32.mxu0 0.0
    %3368 = vmatmul.mubr.f32.gmra.mrb[0].mxu0 %v3299
    %v3369 = vpop.f32.mrb[0].mxu0
    %v3370 = vadd.f32 %v977, %v3369
    %v3371 = vpop.f32.mrb[0].mxu0
    %3372 = vdwg.mxu0
    %v3373 = vsel %vm300, %v3370, -inf
    %3374 = vmax.xlane.f32.xlu0 %v3373
    %v3375 = vpop.xlane.xlu0 %3374
    %v3376 = vsub.f32 %v3370, %v3375
    %v3377 = vmul.f32 %v3376, 1.442695
    %v3378 = vpow.pop %v3377
    %v3379 = vsel %vm300, %v3378, 0.0
    %3380 = vadd.xlane.f32.xlu0 %v3379
    %v3381 = vpop.xlane.xlu0 %3380
    %v3382 = vrcp.pop %v3381
    %v3383 = vmul.f32 %v3378, %v3382
    %3384 = vrot.lane.b32.xlu0 %v2124, 40
    %v3385 = vpop.permute.xlu0 %3384
    %v3388 = vsel %vm300, %v3383, 0
    %3390 = vmatprep.subr.mxu0 0.0
    %3391 = vmatpush1.msra.mxu0 %v3385
    %3392 = vmatprep.subr.mxu0 0.0
    %3393 = vmatpush1.msra.mxu0 0.0
    %3394 = vmatprep.subr.mxu0 0.0
    %3395 = vmatpush1.msra.mxu0 0.0
    %3396 = vmatprep.subr.mxu0 0.0
    %3397 = vmatpush1.msra.mxu0 0.0
    %3398 = vmatprep.subr.mxu0 0.0
    %3399 = vmatpush1.msra.mxu0 0.0
    %3400 = vmatprep.subr.mxu0 0.0
    %3401 = vmatpush1.msra.mxu0 0.0
    %3402 = vmatprep.subr.mxu0 0.0
    %3403 = vmatpush1.msra.mxu0 0.0
    %3404 = vmatprep.subr.mxu0 0.0
    %3405 = vmatpush1.msra.mxu0 0.0
    %3406 = vmatprep.subr.mxu0 0.0
    %3407 = vmatpush1.msra.mxu0 0.0
    %3408 = vmatprep.subr.mxu0 0.0
    %3409 = vmatpush1.msra.mxu0 0.0
    %3410 = vmatprep.subr.mxu0 0.0
    %3411 = vmatpush1.msra.mxu0 0.0
    %3412 = vmatprep.subr.mxu0 0.0
    %3413 = vmatpush1.msra.mxu0 0.0
    %3414 = vmatprep.subr.mxu0 0.0
    %3415 = vmatpush1.msra.mxu0 0.0
    %3416 = vmatprep.subr.mxu0 0.0
    %3417 = vmatpush1.msra.mxu0 0.0
    %3418 = vmatprep.subr.mxu0 0.0
    %3419 = vmatpush1.msra.mxu0 0.0
    %3420 = vmatprep.subr.mxu0 0.0
    %3421 = vmatpush1.msra.mxu0 0.0
    %3422 = vmatprep.subr.mxu0 0.0
    %3423 = vmatpush1.msra.mxu0 0.0
    %3424 = vmatprep.subr.mxu0 0.0
    %3425 = vmatpush1.msra.mxu0 0.0
    %3426 = vmatprep.subr.mxu0 0.0
    %3427 = vmatpush1.msra.mxu0 0.0
    %3428 = vmatprep.subr.mxu0 0.0
    %3429 = vmatpush1.msra.mxu0 0.0
    %3430 = vmatprep.subr.mxu0 0.0
    %3431 = vmatpush1.msra.mxu0 0.0
    %3432 = vmatprep.subr.mxu0 0.0
    %3433 = vmatpush1.msra.mxu0 0.0
    %3434 = vmatprep.subr.mxu0 0.0
    %3435 = vmatpush1.msra.mxu0 0.0
    %3436 = vmatprep.subr.mxu0 0.0
    %3437 = vmatpush1.msra.mxu0 0.0
    %3438 = vmatprep.subr.mxu0 0.0
    %3439 = vmatpush1.msra.mxu0 0.0
    %3440 = vmatprep.subr.mxu0 0.0
    %3441 = vmatpush1.msra.mxu0 0.0
    %3442 = vmatprep.subr.mxu0 0.0
    %3443 = vmatpush1.msra.mxu0 0.0
    %3444 = vmatprep.subr.mxu0 0.0
    %3445 = vmatpush1.msra.mxu0 0.0
    %3446 = vmatprep.subr.mxu0 0.0
    %3447 = vmatpush1.msra.mxu0 0.0
    %3448 = vmatprep.subr.mxu0 0.0
    %3449 = vmatpush1.msra.mxu0 0.0
    %3450 = vmatprep.subr.mxu0 0.0
    %3451 = vmatpush1.msra.mxu0 0.0
    %3452 = vmatprep.subr.mxu0 0.0
    %3453 = vmatpush1.msra.mxu0 0.0
    %3454 = vmatprep.mubr.f32.mxu0 0.0
    %3455 = vmatmul.mubr.f32.gmra.mrb[0].mxu0 %v3388
    %v3456 = vpop.f32.mrb[0].mxu0
    %v3457 = vadd.f32 0.0, %v3456
    %v3458 = vpop.f32.mrb[0].mxu0
    %3459 = vdwg.mxu0
    %3461 = vrot.lane.b32.xlu0 %v3127, 8
    %v3462 = vpop.permute.xlu0 %3461
    %3465 = vrot.lane.b32.xlu0 %v3292, 16
    %v3466 = vpop.permute.xlu0 %3465
    %3469 = vrot.lane.b32.xlu0 %v3457, 24
    %v3470 = vpop.permute.xlu0 %3469
    %v3472 = vsel %vm300, %v2962, %v3462
    %v3473 = vsel %vm970, %v3472, %v3466
    %v3474 = vsel %vm972, %v3473, %v3470
    %v3475 = vld [vmem:[#allocation6 + $0xc0] sm:$0xff]
    %v3476 = vld [vmem:[#allocation6 + $0xc8] sm:$0xff]
    %v3477 = vld [vmem:[#allocation6 + $0xd0] sm:$0xff]
    %v3478 = vld [vmem:[#allocation6 + $0xd8] sm:$0xff]
    %v3479 = vld [vmem:[%s4 + $0xb] sm:$0x1]
    %v3480 = vlaneseq
    %v3481 = vshrl.u32 %v3480, 7
    %v3482 = vsub.s32 0, %v3481
    %v3483 = vrot.slane %v3479, %v3482
    %v3485 = vsel %vm156, %v2800, 0
    %v3488 = vsel %vm156, %v3474, 0
    %3490 = vmatprep.subr.mxu0 0.0
    %3491 = vmatpush1.msra.mxu0 %v3475
    %3492 = vmatprep.subr.mxu0 0.0
    %3493 = vmatpush1.msra.mxu0 %v3476
    %3494 = vmatprep.subr.mxu0 0.0
    %3495 = vmatpush1.msra.mxu0 %v3477
    %3496 = vmatprep.subr.mxu0 0.0
    %3497 = vmatpush1.msra.mxu0 %v3478
    %3498 = vmatprep.subr.mxu0 0.0
    %3499 = vmatpush1.msra.mxu0 0.0
    %3500 = vmatprep.subr.mxu0 0.0
    %3501 = vmatpush1.msra.mxu0 0.0
    %3502 = vmatprep.subr.mxu0 0.0
    %3503 = vmatpush1.msra.mxu0 0.0
    %3504 = vmatprep.subr.mxu0 0.0
    %3505 = vmatpush1.msra.mxu0 0.0
    %3506 = vmatprep.subr.mxu0 0.0
    %3507 = vmatpush1.msra.mxu0 0.0
    %3508 = vmatprep.subr.mxu0 0.0
    %3509 = vmatpush1.msra.mxu0 0.0
    %3510 = vmatprep.subr.mxu0 0.0
    %3511 = vmatpush1.msra.mxu0 0.0
    %3512 = vmatprep.subr.mxu0 0.0
    %3513 = vmatpush1.msra.mxu0 0.0
    %3514 = vmatprep.subr.mxu0 0.0
    %3515 = vmatpush1.msra.mxu0 0.0
    %3516 = vmatprep.subr.mxu0 0.0
    %3517 = vmatpush1.msra.mxu0 0.0
    %3518 = vmatprep.subr.mxu0 0.0
    %3519 = vmatpush1.msra.mxu0 0.0
    %3520 = vmatprep.subr.mxu0 0.0
    %3521 = vmatpush1.msra.mxu0 0.0
    %3522 = vmatprep.subr.mxu0 0.0
    %3523 = vmatpush1.msra.mxu0 0.0
    %3524 = vmatprep.subr.mxu0 0.0
    %3525 = vmatpush1.msra.mxu0 0.0
    %3526 = vmatprep.subr.mxu0 0.0
    %3527 = vmatpush1.msra.mxu0 0.0
    %3528 = vmatprep.subr.mxu0 0.0
    %3529 = vmatpush1.msra.mxu0 0.0
    %3530 = vmatprep.subr.mxu0 0.0
    %3531 = vmatpush1.msra.mxu0 0.0
    %3532 = vmatprep.subr.mxu0 0.0
    %3533 = vmatpush1.msra.mxu0 0.0
    %3534 = vmatprep.subr.mxu0 0.0
    %3535 = vmatpush1.msra.mxu0 0.0
    %3536 = vmatprep.subr.mxu0 0.0
    %3537 = vmatpush1.msra.mxu0 0.0
    %3538 = vmatprep.subr.mxu0 0.0
    %3539 = vmatpush1.msra.mxu0 0.0
    %3540 = vmatprep.subr.mxu0 0.0
    %3541 = vmatpush1.msra.mxu0 0.0
    %3542 = vmatprep.subr.mxu0 0.0
    %3543 = vmatpush1.msra.mxu0 0.0
    %3544 = vmatprep.subr.mxu0 0.0
    %3545 = vmatpush1.msra.mxu0 0.0
    %3546 = vmatprep.subr.mxu0 0.0
    %3547 = vmatpush1.msra.mxu0 0.0
    %3548 = vmatprep.subr.mxu0 0.0
    %3549 = vmatpush1.msra.mxu0 0.0
    %3550 = vmatprep.subr.mxu0 0.0
    %3551 = vmatpush1.msra.mxu0 0.0
    %3552 = vmatprep.subr.mxu0 0.0
    %3553 = vmatpush1.msra.mxu0 0.0
    %3554 = vmatprep.mubr.f32.mxu0 0.0
    %3555 = vmatmul.mubr.f32.gmra.mrb[0].mxu0 %v3485
    %v3556 = vpop.f32.mrb[0].mxu0
    %v3557 = vadd.f32 %v3483, %v3556
    %v3558 = vpop.f32.mrb[0].mxu0
    %3559 = vmatprep.mubr.f32.mxu0 0.0
    %3560 = vmatmul.mubr.f32.gmra.mrb[0].mxu0 %v3488
    %v3561 = vpop.f32.mrb[0].mxu0
    %v3562 = vadd.f32 %v3483, %v3561
    %v3563 = vpop.f32.mrb[0].mxu0
    %3564 = vdwg.mxu0
    %v3565 = vadd.f32 %v2035, %v3557
    %v3566 = vadd.f32 %v2036, %v3562
    %v3567 = vld [vmem:[%s4 + $0xc] sm:$0x1]
    %v3568 = vld [vmem:[%s4 + $0xd] sm:$0x1]
    %v3569 = vsel %vm156, %v3565, 0.0
    %3570 = vadd.xlane.f32.xlu0 %v3569
    %v3571 = vpop.xlane.xlu0 %3570
    %v3572 = vsel %vm156, %v3566, 0.0
    %3573 = vadd.xlane.f32.xlu0 %v3572
    %v3574 = vpop.xlane.xlu0 %3573
    %v3575 = vmul.f32 %v3571, %v163
    %v3576 = vmul.f32 %v3574, %v163
    %v3577 = vmul.f32 %v3565, %v3565
    %v3578 = vmul.f32 %v3566, %v3566
    %v3579 = vsel %vm156, %v3577, 0.0
    %3580 = vadd.xlane.f32.xlu0 %v3579
    %v3581 = vpop.xlane.xlu0 %3580
    %v3582 = vsel %vm156, %v3578, 0.0
    %3583 = vadd.xlane.f32.xlu0 %v3582
    %v3584 = vpop.xlane.xlu0 %3583
    %v3585 = vmul.f32 %v3581, %v163
    %v3586 = vmul.f32 %v3584, %v163
    %v3587 = vsub.f32 %v3565, %v3575
    %v3588 = vsub.f32 %v3566, %v3576
    %v3589 = vmul.f32 %v3575, %v3575
    %v3590 = vmul.f32 %v3576, %v3576
    %v3591 = vsub.f32 %v3585, %v3589
    %v3592 = vsub.f32 %v3586, %v3590
    %v3593 = vadd.f32 %v3591, 1e-12
    %v3594 = vadd.f32 %v3592, 1e-12
    %v3595 = vrsqrt.pop %v3593
    %v3596 = vrsqrt.pop %v3594
    %v3597 = vmul.f32 %v3587, %v3595
    %v3598 = vmul.f32 %v3588, %v3596
    %v3599 = vlaneseq
    %v3600 = vshrl.u32 %v3599, 7
    %v3601 = vsub.s32 0, %v3600
    %v3602 = vrot.slane %v3567, %v3601
    %v3603 = vmul.f32 %v3597, %v3602
    %v3604 = vmul.f32 %v3598, %v3602
    %v3605 = vlaneseq
    %v3606 = vshrl.u32 %v3605, 7
    %v3607 = vsub.s32 0, %v3606
    %v3608 = vrot.slane %v3568, %v3607
    %v3609 = vadd.f32 %v3603, %v3608
    %v3610 = vadd.f32 %v3604, %v3608
    %v3611 = vld [vmem:[#allocation6 + $0xe0] sm:$0xff]
    %v3612 = vld [vmem:[#allocation6 + $0xe8] sm:$0xff]
    %v3613 = vld [vmem:[#allocation6 + $0xf0] sm:$0xff]
    %v3614 = vld [vmem:[#allocation6 + $0xf8] sm:$0xff]
    %v3615 = vld [vmem:[%s4 + $0xe] sm:$0x1]
    %v3616 = vlaneseq
    %v3617 = vshrl.u32 %v3616, 7
    %v3618 = vsub.s32 0, %v3617
    %v3619 = vrot.slane %v3615, %v3618
    %v3621 = vsel %vm156, %v3609, 0
    %v3624 = vsel %vm156, %v3610, 0
    %3626 = vmatprep.subr.mxu0 0.0
    %3627 = vmatpush1.msra.mxu0 %v3611
    %3628 = vmatprep.subr.mxu0 0.0
    %3629 = vmatpush1.msra.mxu0 %v3612
    %3630 = vmatprep.subr.mxu0 0.0
    %3631 = vmatpush1.msra.mxu0 %v3613
    %3632 = vmatprep.subr.mxu0 0.0
    %3633 = vmatpush1.msra.mxu0 %v3614
    %3634 = vmatprep.subr.mxu0 0.0
    %3635 = vmatpush1.msra.mxu0 0.0
    %3636 = vmatprep.subr.mxu0 0.0
    %3637 = vmatpush1.msra.mxu0 0.0
    %3638 = vmatprep.subr.mxu0 0.0
    %3639 = vmatpush1.msra.mxu0 0.0
    %3640 = vmatprep.subr.mxu0 0.0
    %3641 = vmatpush1.msra.mxu0 0.0
    %3642 = vmatprep.subr.mxu0 0.0
    %3643 = vmatpush1.msra.mxu0 0.0
    %3644 = vmatprep.subr.mxu0 0.0
    %3645 = vmatpush1.msra.mxu0 0.0
    %3646 = vmatprep.subr.mxu0 0.0
    %3647 = vmatpush1.msra.mxu0 0.0
    %3648 = vmatprep.subr.mxu0 0.0
    %3649 = vmatpush1.msra.mxu0 0.0
    %3650 = vmatprep.subr.mxu0 0.0
    %3651 = vmatpush1.msra.mxu0 0.0
    %3652 = vmatprep.subr.mxu0 0.0
    %3653 = vmatpush1.msra.mxu0 0.0
    %3654 = vmatprep.subr.mxu0 0.0
    %3655 = vmatpush1.msra.mxu0 0.0
    %3656 = vmatprep.subr.mxu0 0.0
    %3657 = vmatpush1.msra.mxu0 0.0
    %3658 = vmatprep.subr.mxu0 0.0
    %3659 = vmatpush1.msra.mxu0 0.0
    %3660 = vmatprep.subr.mxu0 0.0
    %3661 = vmatpush1.msra.mxu0 0.0
    %3662 = vmatprep.subr.mxu0 0.0
    %3663 = vmatpush1.msra.mxu0 0.0
    %3664 = vmatprep.subr.mxu0 0.0
    %3665 = vmatpush1.msra.mxu0 0.0
    %3666 = vmatprep.subr.mxu0 0.0
    %3667 = vmatpush1.msra.mxu0 0.0
    %3668 = vmatprep.subr.mxu0 0.0
    %3669 = vmatpush1.msra.mxu0 0.0
    %3670 = vmatprep.subr.mxu0 0.0
    %3671 = vmatpush1.msra.mxu0 0.0
    %3672 = vmatprep.subr.mxu0 0.0
    %3673 = vmatpush1.msra.mxu0 0.0
    %3674 = vmatprep.subr.mxu0 0.0
    %3675 = vmatpush1.msra.mxu0 0.0
    %3676 = vmatprep.subr.mxu0 0.0
    %3677 = vmatpush1.msra.mxu0 0.0
    %3678 = vmatprep.subr.mxu0 0.0
    %3679 = vmatpush1.msra.mxu0 0.0
    %3680 = vmatprep.subr.mxu0 0.0
    %3681 = vmatpush1.msra.mxu0 0.0
    %3682 = vmatprep.subr.mxu0 0.0
    %3683 = vmatpush1.msra.mxu0 0.0
    %3684 = vmatprep.subr.mxu0 0.0
    %3685 = vmatpush1.msra.mxu0 0.0
    %3686 = vmatprep.subr.mxu0 0.0
    %3687 = vmatpush1.msra.mxu0 0.0
    %3688 = vmatprep.subr.mxu0 0.0
    %3689 = vmatpush1.msra.mxu0 0.0
    %3690 = vmatprep.mubr.f32.mxu0 0.0
    %3691 = vmatmul.mubr.f32.gmra.mrb[0].mxu0 %v3621
    %v3692 = vpop.f32.mrb[0].mxu0
    %v3693 = vadd.f32 %v3619, %v3692
    %v3694 = vpop.f32.mrb[0].mxu0
    %3695 = vmatprep.mubr.f32.mxu0 0.0
    %3696 = vmatmul.mubr.f32.gmra.mrb[0].mxu0 %v3624
    %v3697 = vpop.f32.mrb[0].mxu0
    %v3698 = vadd.f32 %v3619, %v3697
    %v3699 = vpop.f32.mrb[0].mxu0
    %3700 = vdwg.mxu0
    %v3701 = vmul.f32 %v3693, %v3693
    %v3702 = vmul.f32 %v3698, %v3698
    %v3703 = vmul.f32 %v3693, %v3701
    %v3704 = vmul.f32 %v3698, %v3702
    %v3705 = vmul.f32 %v3703, 0.044715
    %v3706 = vmul.f32 %v3704, 0.044715
    %v3707 = vadd.f32 %v3693, %v3705
    %v3708 = vadd.f32 %v3698, %v3706
    %v3709 = vmul.f32 %v3707, 0.7978846
    %v3710 = vmul.f32 %v3708, 0.7978846
    %v3711 = vtanh.pop %v3709
    %v3712 = vtanh.pop %v3710
    %v3713 = vadd.f32 %v3711, 1.0
    %v3714 = vadd.f32 %v3712, 1.0
    %v3715 = vmul.f32 %v3713, 0.5
    %v3716 = vmul.f32 %v3714, 0.5
    %v3717 = vmul.f32 %v3693, %v3715
    %v3718 = vmul.f32 %v3698, %v3716
    %v3719 = vld [vmem:[#allocation6 + $0x100] sm:$0xff]
    %v3720 = vld [vmem:[#allocation6 + $0x108] sm:$0xff]
    %v3721 = vld [vmem:[#allocation6 + $0x110] sm:$0xff]
    %v3722 = vld [vmem:[#allocation6 + $0x118] sm:$0xff]
    %v3723 = vld [vmem:[#allocation6 + $0x120] sm:$0xff]
    %v3724 = vld [vmem:[#allocation6 + $0x128] sm:$0xff]
    %v3725 = vld [vmem:[#allocation6 + $0x130] sm:$0xff]
    %v3726 = vld [vmem:[#allocation6 + $0x138] sm:$0xff]
    %v3727 = vld [vmem:[%s4 + $0xf] sm:$0x1]
    %v3728 = vlaneseq
    %v3729 = vshrl.u32 %v3728, 7
    %v3730 = vsub.s32 0, %v3729
    %v3731 = vrot.slane %v3727, %v3730
    %v3733 = vsel %vm1909, %v3717, 0
    %v3736 = vsel %vm1909, %v3718, 0
    %3738 = vmatprep.subr.mxu0 0.0
    %3739 = vmatpush1.msra.mxu0 %v3719
    %3740 = vmatprep.subr.mxu0 0.0
    %3741 = vmatpush1.msra.mxu0 %v3720
    %3742 = vmatprep.subr.mxu0 0.0
    %3743 = vmatpush1.msra.mxu0 %v3721
    %3744 = vmatprep.subr.mxu0 0.0
    %3745 = vmatpush1.msra.mxu0 %v3722
    %3746 = vmatprep.subr.mxu0 0.0
    %3747 = vmatpush1.msra.mxu0 %v3723
    %3748 = vmatprep.subr.mxu0 0.0
    %3749 = vmatpush1.msra.mxu0 %v3724
    %3750 = vmatprep.subr.mxu0 0.0
    %3751 = vmatpush1.msra.mxu0 %v3725
    %3752 = vmatprep.subr.mxu0 0.0
    %3753 = vmatpush1.msra.mxu0 %v3726
    %3754 = vmatprep.subr.mxu0 0.0
    %3755 = vmatpush1.msra.mxu0 0.0
    %3756 = vmatprep.subr.mxu0 0.0
    %3757 = vmatpush1.msra.mxu0 0.0
    %3758 = vmatprep.subr.mxu0 0.0
    %3759 = vmatpush1.msra.mxu0 0.0
    %3760 = vmatprep.subr.mxu0 0.0
    %3761 = vmatpush1.msra.mxu0 0.0
    %3762 = vmatprep.subr.mxu0 0.0
    %3763 = vmatpush1.msra.mxu0 0.0
    %3764 = vmatprep.subr.mxu0 0.0
    %3765 = vmatpush1.msra.mxu0 0.0
    %3766 = vmatprep.subr.mxu0 0.0
    %3767 = vmatpush1.msra.mxu0 0.0
    %3768 = vmatprep.subr.mxu0 0.0
    %3769 = vmatpush1.msra.mxu0 0.0
    %3770 = vmatprep.subr.mxu0 0.0
    %3771 = vmatpush1.msra.mxu0 0.0
    %3772 = vmatprep.subr.mxu0 0.0
    %3773 = vmatpush1.msra.mxu0 0.0
    %3774 = vmatprep.subr.mxu0 0.0
    %3775 = vmatpush1.msra.mxu0 0.0
    %3776 = vmatprep.subr.mxu0 0.0
    %3777 = vmatpush1.msra.mxu0 0.0
    %3778 = vmatprep.subr.mxu0 0.0
    %3779 = vmatpush1.msra.mxu0 0.0
    %3780 = vmatprep.subr.mxu0 0.0
    %3781 = vmatpush1.msra.mxu0 0.0
    %3782 = vmatprep.subr.mxu0 0.0
    %3783 = vmatpush1.msra.mxu0 0.0
    %3784 = vmatprep.subr.mxu0 0.0
    %3785 = vmatpush1.msra.mxu0 0.0
    %3786 = vmatprep.subr.mxu0 0.0
    %3787 = vmatpush1.msra.mxu0 0.0
    %3788 = vmatprep.subr.mxu0 0.0
    %3789 = vmatpush1.msra.mxu0 0.0
    %3790 = vmatprep.subr.mxu0 0.0
    %3791 = vmatpush1.msra.mxu0 0.0
    %3792 = vmatprep.subr.mxu0 0.0
    %3793 = vmatpush1.msra.mxu0 0.0
    %3794 = vmatprep.subr.mxu0 0.0
    %3795 = vmatpush1.msra.mxu0 0.0
    %3796 = vmatprep.subr.mxu0 0.0
    %3797 = vmatpush1.msra.mxu0 0.0
    %3798 = vmatprep.subr.mxu0 0.0
    %3799 = vmatpush1.msra.mxu0 0.0
    %3800 = vmatprep.subr.mxu0 0.0
    %3801 = vmatpush1.msra.mxu0 0.0
    %3802 = vmatprep.mubr.f32.mxu0 0.0
    %3803 = vmatmul.mubr.f32.gmra.mrb[0].mxu0 %v3733
    %v3804 = vpop.f32.mrb[0].mxu0
    %v3805 = vadd.f32 %v3731, %v3804
    %v3806 = vpop.f32.mrb[0].mxu0
    %3807 = vmatprep.mubr.f32.mxu0 0.0
    %3808 = vmatmul.mubr.f32.gmra.mrb[0].mxu0 %v3736
    %v3809 = vpop.f32.mrb[0].mxu0
    %v3810 = vadd.f32 %v3731, %v3809
    %v3811 = vpop.f32.mrb[0].mxu0
    %3812 = vdwg.mxu0
    %v3813 = vadd.f32 %v3609, %v3805
    %v3814 = vadd.f32 %v3610, %v3810
    %v3815 = vld [vmem:[%s4 + $0x10] sm:$0x1]
    %v3816 = vld [vmem:[%s4 + $0x11] sm:$0x1]
    %v3817 = vsel %vm156, %v3813, 0.0
    %3818 = vadd.xlane.f32.xlu0 %v3817
    %v3819 = vpop.xlane.xlu0 %3818
    %v3820 = vsel %vm156, %v3814, 0.0
    %3821 = vadd.xlane.f32.xlu0 %v3820
    %v3822 = vpop.xlane.xlu0 %3821
    %v3823 = vmul.f32 %v3819, %v163
    %v3824 = vmul.f32 %v3822, %v163
    %v3825 = vmul.f32 %v3813, %v3813
    %v3826 = vmul.f32 %v3814, %v3814
    %v3827 = vsel %vm156, %v3825, 0.0
    %3828 = vadd.xlane.f32.xlu0 %v3827
    %v3829 = vpop.xlane.xlu0 %3828
    %v3830 = vsel %vm156, %v3826, 0.0
    %3831 = vadd.xlane.f32.xlu0 %v3830
    %v3832 = vpop.xlane.xlu0 %3831
    %v3833 = vmul.f32 %v3829, %v163
    %v3834 = vmul.f32 %v3832, %v163
    %v3835 = vsub.f32 %v3813, %v3823
    %v3836 = vsub.f32 %v3814, %v3824
    %v3837 = vmul.f32 %v3823, %v3823
    %v3838 = vmul.f32 %v3824, %v3824
    %v3839 = vsub.f32 %v3833, %v3837
    %v3840 = vsub.f32 %v3834, %v3838
    %v3841 = vadd.f32 %v3839, 1e-12
    %v3842 = vadd.f32 %v3840, 1e-12
    %v3843 = vrsqrt.pop %v3841
    %v3844 = vrsqrt.pop %v3842
    %v3845 = vmul.f32 %v3835, %v3843
    %v3846 = vmul.f32 %v3836, %v3844
    %v3847 = vlaneseq
    %v3848 = vshrl.u32 %v3847, 7
    %v3849 = vsub.s32 0, %v3848
    %v3850 = vrot.slane %v3815, %v3849
    %v3851 = vmul.f32 %v3845, %v3850
    %v3852 = vmul.f32 %v3846, %v3850
    %v3853 = vlaneseq
    %v3854 = vshrl.u32 %v3853, 7
    %v3855 = vsub.s32 0, %v3854
    %v3856 = vrot.slane %v3816, %v3855
    %v3857 = vadd.f32 %v3851, %v3856
    %v3858 = vadd.f32 %v3852, %v3856
    %v3859 = vld [vmem:[#allocation6 + $0x140] sm:$0xff]
    %v3860 = vld [vmem:[#allocation6 + $0x148] sm:$0xff]
    %v3861 = vld [vmem:[#allocation6 + $0x150] sm:$0xff]
    %v3862 = vld [vmem:[#allocation6 + $0x158] sm:$0xff]
    %v3863 = vld [vmem:[%s4 + $0x12] sm:$0x1]
    %v3864 = vlaneseq
    %v3865 = vshrl.u32 %v3864, 7
    %v3866 = vsub.s32 0, %v3865
    %v3867 = vrot.slane %v3863, %v3866
    %v3869 = vsel %vm156, %v3857, 0
    %v3872 = vsel %vm156, %v3858, 0
    %3874 = vmatprep.subr.mxu0 0.0
    %3875 = vmatpush1.msra.mxu0 %v3859
    %3876 = vmatprep.subr.mxu0 0.0
    %3877 = vmatpush1.msra.mxu0 %v3860
    %3878 = vmatprep.subr.mxu0 0.0
    %3879 = vmatpush1.msra.mxu0 %v3861
    %3880 = vmatprep.subr.mxu0 0.0
    %3881 = vmatpush1.msra.mxu0 %v3862
    %3882 = vmatprep.subr.mxu0 0.0
    %3883 = vmatpush1.msra.mxu0 0.0
    %3884 = vmatprep.subr.mxu0 0.0
    %3885 = vmatpush1.msra.mxu0 0.0
    %3886 = vmatprep.subr.mxu0 0.0
    %3887 = vmatpush1.msra.mxu0 0.0
    %3888 = vmatprep.subr.mxu0 0.0
    %3889 = vmatpush1.msra.mxu0 0.0
    %3890 = vmatprep.subr.mxu0 0.0
    %3891 = vmatpush1.msra.mxu0 0.0
    %3892 = vmatprep.subr.mxu0 0.0
    %3893 = vmatpush1.msra.mxu0 0.0
    %3894 = vmatprep.subr.mxu0 0.0
    %3895 = vmatpush1.msra.mxu0 0.0
    %3896 = vmatprep.subr.mxu0 0.0
    %3897 = vmatpush1.msra.mxu0 0.0
    %3898 = vmatprep.subr.mxu0 0.0
    %3899 = vmatpush1.msra.mxu0 0.0
    %3900 = vmatprep.subr.mxu0 0.0
    %3901 = vmatpush1.msra.mxu0 0.0
    %3902 = vmatprep.subr.mxu0 0.0
    %3903 = vmatpush1.msra.mxu0 0.0
    %3904 = vmatprep.subr.mxu0 0.0
    %3905 = vmatpush1.msra.mxu0 0.0
    %3906 = vmatprep.subr.mxu0 0.0
    %3907 = vmatpush1.msra.mxu0 0.0
    %3908 = vmatprep.subr.mxu0 0.0
    %3909 = vmatpush1.msra.mxu0 0.0
    %3910 = vmatprep.subr.mxu0 0.0
    %3911 = vmatpush1.msra.mxu0 0.0
    %3912 = vmatprep.subr.mxu0 0.0
    %3913 = vmatpush1.msra.mxu0 0.0
    %3914 = vmatprep.subr.mxu0 0.0
    %3915 = vmatpush1.msra.mxu0 0.0
    %3916 = vmatprep.subr.mxu0 0.0
    %3917 = vmatpush1.msra.mxu0 0.0
    %3918 = vmatprep.subr.mxu0 0.0
    %3919 = vmatpush1.msra.mxu0 0.0
    %3920 = vmatprep.subr.mxu0 0.0
    %3921 = vmatpush1.msra.mxu0 0.0
    %3922 = vmatprep.subr.mxu0 0.0
    %3923 = vmatpush1.msra.mxu0 0.0
    %3924 = vmatprep.subr.mxu0 0.0
    %3925 = vmatpush1.msra.mxu0 0.0
    %3926 = vmatprep.subr.mxu0 0.0
    %3927 = vmatpush1.msra.mxu0 0.0
    %3928 = vmatprep.subr.mxu0 0.0
    %3929 = vmatpush1.msra.mxu0 0.0
    %3930 = vmatprep.subr.mxu0 0.0
    %3931 = vmatpush1.msra.mxu0 0.0
    %3932 = vmatprep.subr.mxu0 0.0
    %3933 = vmatpush1.msra.mxu0 0.0
    %3934 = vmatprep.subr.mxu0 0.0
    %3935 = vmatpush1.msra.mxu0 0.0
    %3936 = vmatprep.subr.mxu0 0.0
    %3937 = vmatpush1.msra.mxu0 0.0
    %3938 = vmatprep.mubr.f32.mxu0 0.0
    %3939 = vmatmul.mubr.f32.gmra.mrb[0].mxu0 %v3869
    %v3940 = vpop.f32.mrb[0].mxu0
    %v3941 = vadd.f32 %v3867, %v3940
    %v3942 = vpop.f32.mrb[0].mxu0
    %3943 = vmatprep.mubr.f32.mxu0 0.0
    %3944 = vmatmul.mubr.f32.gmra.mrb[0].mxu0 %v3872
    %v3945 = vpop.f32.mrb[0].mxu0
    %v3946 = vadd.f32 %v3867, %v3945
    %v3947 = vpop.f32.mrb[0].mxu0
    %3948 = vdwg.mxu0
    %3949 = vst [vmem:[%s5] sm:$0xff] %v3941
    %3950 = vst [vmem:[%s5 + $0x8] sm:$0xff] %v3946
    // Predicated region
    $region30: #{ner_forward.1} parent=1 // pred_check
      _
    $region31: #{ner_forward.1} parent=1 // pred_check_branch
      %3952 = sbr.rel (0) target = $region33
    $region32: #{ner_forward.1} parent=1 // pred_region
      _
    $region33: #{ner_forward.1} parent=1 // pred_fallthru
      _
    // Predicated region
    $region34: #{ner_forward.1} parent=1 // pred_check
      _
    $region35: #{ner_forward.1} parent=1 // pred_check_branch
      %3954 = sbr.rel (0) target = $region37
    $region36: #{ner_forward.1} parent=1 // pred_region
      _
    $region37: #{ner_forward.1} parent=1 // pred_fallthru
      _
    %3955 = vsyncpa [#allocation4], 1
    %3956 = vsyncpa [#allocation5], 1

</llo_original>
